<compile_context>
chip_gen: v5e
topology: v5e:2x2
jax: 0.10.0
libtpu: 0.0.40
codegen_flags: <defaults>
</compile_context>

<pallas_src>
import math

import jax
import jax.numpy as jnp
from jax import lax
from jax.experimental import pallas as pl
from jax.experimental.pallas import tpu as pltpu

# ----- model hyper-params (small, consistent with the PyTorch module) -----
BATCH = 2
SEQ = 8            # value_len == key_len == query_len
EMBED = 32
HEADS = 4
HEAD_DIM = EMBED // HEADS
M_VALUE = 4        # top-m
FWD_EXP = 4
HIDDEN = FWD_EXP * EMBED   # 128
LN_EPS = 1e-5


def _layernorm(x, gamma, beta):
    mean = jnp.mean(x, axis=-1, keepdims=True)
    var = jnp.mean((x - mean) * (x - mean), axis=-1, keepdims=True)
    return (x - mean) * lax.rsqrt(var + LN_EPS) * gamma + beta


def transformer_block_kernel(v_ref, k_ref, q_ref,
                             wqkv_ref, wo_ref, wf1_ref, wf2_ref,
                             vecs_ref, out_ref):
    # v/k/q refs: (Bb, L, E) activation blocks (Bb = batch elems per program)
    Bb = q_ref.shape[0]
    R = Bb * SEQ

    v_in = v_ref[...].reshape(R, EMBED)
    k_in = k_ref[...].reshape(R, EMBED)
    q_in = q_ref[...].reshape(R, EMBED)

    # ---- fused QKV projection: one (3R, E) @ (E, 3E) MXU op -------------
    # Only the "diagonal" (input, weight) blocks are consumed below; the
    # extra FLOPs are free on an otherwise idle MXU.
    x_all = jnp.concatenate([v_in, k_in, q_in], axis=0)             # (3R, E)
    proj = jnp.dot(x_all, wqkv_ref[...],
                   preferred_element_type=jnp.float32)              # (3R, 3E)

    # ---- gather per-head operands into (HEADS*Bb, L, D), in registers ---
    def gather_heads(row0, col0):
        parts = [
            proj[row0:row0 + R,
                 col0 + h * HEAD_DIM:col0 + (h + 1) * HEAD_DIM
                 ].reshape(1, R, HEAD_DIM)
            for h in range(HEADS)
        ]
        hbd = jnp.concatenate(parts, axis=0)                        # (H, R, D)
        return hbd.reshape(HEADS * Bb, SEQ, HEAD_DIM)               # (H*Bb, L, D)

    vh = gather_heads(0, 0)
    kh = gather_heads(R, EMBED)
    qh = gather_heads(2 * R, 2 * EMBED)

    # ---- all head energies in ONE batched MXU einsum ---------------------
    # (no 1/sqrt(d) scaling -- matches the PyTorch module)
    e = jnp.einsum("bqd,bkd->bqk", qh, kh,
                   preferred_element_type=jnp.float32)              # (H*Bb, L, L)
    ef = e.reshape(HEADS * R, SEQ)                                  # (HR, L)

    # ---- rank-based top-m selection (replaces serial m-iteration loop) ---
    # entry j is selected iff  #{k: e_k > e_j} + #{k<j: e_k == e_j} < M
    # (first-index tie-break, identical to torch.topk / lax.top_k)
    vals_j = ef[:, :, None]                                         # (HR, L, 1)
    vals_k = ef[:, None, :]                                         # (HR, 1, L)
    k_idx = lax.broadcasted_iota(jnp.int32, (1, SEQ, SEQ), 2)
    j_idx = lax.broadcasted_iota(jnp.int32, (1, SEQ, SEQ), 1)
    beats = jnp.logical_or(vals_k > vals_j,
                           jnp.logical_and(vals_k == vals_j, k_idx < j_idx))
    rank = jnp.sum(beats.astype(jnp.float32), axis=-1)              # (HR, L)
    selected = rank < jnp.float32(M_VALUE)

    # ---- masked softmax over the selected entries ------------------------
    neg_inf = jnp.float32(-jnp.inf)
    masked = jnp.where(selected, ef, neg_inf)
    row_max = jnp.max(masked, axis=-1, keepdims=True)
    p = jnp.where(selected, jnp.exp(masked - row_max), jnp.float32(0.0))
    denom = jnp.sum(p, axis=-1, keepdims=True)
    r = pl.reciprocal(denom, approx=True)                           # EUP slot
    r = r * (2.0 - denom * r)                                       # 1 Newton step
    attn = p * r                                                    # (HR, L)

    # ---- attention @ values: ONE batched MXU einsum ----------------------
    attn3 = attn.reshape(HEADS * Bb, SEQ, SEQ)
    oh = jnp.einsum("bqk,bkd->bqd", attn3, vh,
                    preferred_element_type=jnp.float32)             # (H*Bb, L, D)

    # ---- concat heads in-register (no VMEM scratch round-trip) -----------
    o3 = oh.reshape(HEADS, R, HEAD_DIM)
    attn_cat = jnp.concatenate([o3[h] for h in range(HEADS)], axis=-1)  # (R, E)

    # ---- packed vector params --------------------------------------------
    vecs = vecs_ref[...]                                            # (8, 128)
    bf1 = vecs[0:1, :]                                              # (1, HIDDEN)
    bo = vecs[1:2, 0:EMBED]
    g1 = vecs[2:3, 0:EMBED]
    b1 = vecs[3:4, 0:EMBED]
    bf2 = vecs[4:5, 0:EMBED]
    g2 = vecs[5:6, 0:EMBED]
    b2 = vecs[6:7, 0:EMBED]

    # fc_out (with bias) + residual + LayerNorm 1
    attn_proj = jnp.dot(attn_cat, wo_ref[...],
                        preferred_element_type=jnp.float32) + bo
    x1 = _layernorm(attn_proj + q_in, g1, b1)

    # feed-forward: Linear -> ReLU -> Linear
    h1 = jnp.dot(x1, wf1_ref[...], preferred_element_type=jnp.float32) + bf1
    h1 = jnp.maximum(h1, jnp.float32(0.0))
    ff = jnp.dot(h1, wf2_ref[...], preferred_element_type=jnp.float32) + bf2

    # residual + LayerNorm 2
    out = _layernorm(ff + x1, g2, b2)
    out_ref[...] = out.reshape(Bb, SEQ, EMBED)


def pack_params(p):
    """Hoisted, call-invariant packing of weights (done once, not per call)."""
    wqkv = jnp.concatenate([p["wv"], p["wk"], p["wq"]], axis=1)     # (E, 3E)
    vecs = jnp.zeros((8, 128), jnp.float32)
    vecs = vecs.at[0, :HIDDEN].set(p["bf1"].reshape(-1))
    vecs = vecs.at[1, :EMBED].set(p["bo"].reshape(-1))
    vecs = vecs.at[2, :EMBED].set(p["g1"].reshape(-1))
    vecs = vecs.at[3, :EMBED].set(p["b1"].reshape(-1))
    vecs = vecs.at[4, :EMBED].set(p["bf2"].reshape(-1))
    vecs = vecs.at[5, :EMBED].set(p["g2"].reshape(-1))
    vecs = vecs.at[6, :EMBED].set(p["b2"].reshape(-1))
    return {"wqkv": wqkv, "wo": p["wo"], "wf1": p["wf1"],
            "wf2": p["wf2"], "vecs": vecs}


def _num_blocks(batch):
    """Split across TensorCores only on dual-TC chips (v7x)."""
    try:
        kind = jax.devices()[0].device_kind.lower()
    except Exception:
        return 1
    if ("v7" in kind) or ("tpu7" in kind):
        return batch
    return 1


def transformer_block(value, key, query, packed, *, num_blocks=None):
    N, L, E = query.shape
    if num_blocks is None:
        num_blocks = _num_blocks(N)
    if num_blocks < 1 or (N % num_blocks) != 0:
        num_blocks = 1
    b_blk = N // num_blocks

    act_spec = pl.BlockSpec((b_blk, L, E), lambda i: (i, 0, 0))

    return pl.pallas_call(
        transformer_block_kernel,
        out_shape=jax.ShapeDtypeStruct((N, L, E), jnp.float32),
        grid=(num_blocks,),
        in_specs=[
            act_spec,                                               # value
            act_spec,                                               # key
            act_spec,                                               # query
            pl.BlockSpec((EMBED, 3 * EMBED), lambda i: (0, 0)),     # wqkv
            pl.BlockSpec((EMBED, EMBED), lambda i: (0, 0)),         # wo
            pl.BlockSpec((EMBED, HIDDEN), lambda i: (0, 0)),        # wf1
            pl.BlockSpec((HIDDEN, EMBED), lambda i: (0, 0)),        # wf2
            pl.BlockSpec((8, 128), lambda i: (0, 0)),               # packed vecs
        ],
        out_specs=act_spec,
        compiler_params=pltpu.CompilerParams(
            dimension_semantics=("parallel",)),
    )(value, key, query, packed["wqkv"], packed["wo"],
      packed["wf1"], packed["wf2"], packed["vecs"])


# --------------------- pure-JAX reference (for checking) ---------------------
def reference(value, key, query, p):
    N, L, E = query.shape
    V = value @ p["wv"]
    K = key @ p["wk"]
    Q = query @ p["wq"]
    Vh = V.reshape(N, L, HEADS, HEAD_DIM)
    Kh = K.reshape(N, L, HEADS, HEAD_DIM)
    Qh = Q.reshape(N, L, HEADS, HEAD_DIM)
    energy = jnp.einsum("nqhd,nkhd->nhqk", Qh, Kh)
    top_e, top_i = lax.top_k(energy, M_VALUE)                 # (N,H,Q,M)
    attn = jax.nn.softmax(top_e, axis=-1)
    Vp = jnp.transpose(Vh, (0, 2, 1, 3))                      # (N,H,L,D)
    idx_flat = top_i.reshape(N, HEADS, -1)                    # (N,H,Q*M)
    sel = jnp.take_along_axis(Vp, idx_flat[..., None], axis=2)
    sel = sel.reshape(N, HEADS, L, M_VALUE, HEAD_DIM)
    out = jnp.einsum("nhqm,nhqmd->nhqd", attn, sel)
    out = jnp.transpose(out, (0, 2, 1, 3)).reshape(N, L, E)
    attn_proj = out @ p["wo"] + p["bo"]
    x = _layernorm(attn_proj + query, p["g1"], p["b1"])
    ff = jnp.maximum(x @ p["wf1"] + p["bf1"], 0.0) @ p["wf2"] + p["bf2"]
    return _layernorm(ff + x, p["g2"], p["b2"])


def init_params(key):
    ks = jax.random.split(key, 8)

    def linear_w(k, fan_in, fan_out):
        bound = 1.0 / math.sqrt(fan_in)
        # stored as (in, out) == transposed PyTorch layout
        return jax.random.uniform(k, (fan_in, fan_out), jnp.float32, -bound, bound)

    def linear_b(k, fan_in, fan_out):
        bound = 1.0 / math.sqrt(fan_in)
        return jax.random.uniform(k, (1, fan_out), jnp.float32, -bound, bound)

    return {
        "wv": linear_w(ks[0], EMBED, EMBED),
        "wk": linear_w(ks[1], EMBED, EMBED),
        "wq": linear_w(ks[2], EMBED, EMBED),
        "wo": linear_w(ks[3], EMBED, EMBED),
        "bo": linear_b(ks[4], EMBED, EMBED),
        "g1": jnp.ones((1, EMBED), jnp.float32),
        "b1": jnp.zeros((1, EMBED), jnp.float32),
        "wf1": linear_w(ks[5], EMBED, HIDDEN),
        "bf1": linear_b(ks[6], EMBED, HIDDEN),
        "wf2": linear_w(ks[7], HIDDEN, EMBED),
        "bf2": jnp.zeros((1, EMBED), jnp.float32),
        "g2": jnp.ones((1, EMBED), jnp.float32),
        "b2": jnp.zeros((1, EMBED), jnp.float32),
    }


if __name__ == "__main__":
    root = jax.random.PRNGKey(0)
    k_v, k_k, k_q, k_p = jax.random.split(root, 4)
    value = jax.random.normal(k_v, (BATCH, SEQ, EMBED), jnp.float32)
    key = jax.random.normal(k_k, (BATCH, SEQ, EMBED), jnp.float32)
    query = jax.random.normal(k_q, (BATCH, SEQ, EMBED), jnp.float32)
    params = init_params(k_p)
    packed = pack_params(params)          # hoisted: computed once, reused per call

    out = transformer_block(value, key, query, packed)
    out = jax.block_until_ready(out)

    ref = jax.block_until_ready(reference(value, key, query, params))
    assert out.shape == (BATCH, SEQ, EMBED)
    assert jnp.allclose(out, ref, rtol=1e-4, atol=1e-4), (
        f"max abs diff {jnp.max(jnp.abs(out - ref))}")

    print("KERNEL_OK")
</pallas_src>

<mosaic_0001>
module attributes {stable_mosaic.version = 11 : i64} {
  func.func @transformer_block_kernel(%arg0: i32, %arg1: memref<2x8x32xf32, #tpu.memory_space<vmem>>, %arg2: memref<2x8x32xf32, #tpu.memory_space<vmem>>, %arg3: memref<2x8x32xf32, #tpu.memory_space<vmem>>, %arg4: memref<32x96xf32, #tpu.memory_space<vmem>>, %arg5: memref<32x32xf32, #tpu.memory_space<vmem>>, %arg6: memref<32x128xf32, #tpu.memory_space<vmem>>, %arg7: memref<128x32xf32, #tpu.memory_space<vmem>>, %arg8: memref<8x128xf32, #tpu.memory_space<vmem>>, %arg9: memref<2x8x32xf32, #tpu.memory_space<vmem>>) attributes {dimension_semantics = [#tpu.dimension_semantics<parallel>], iteration_bounds = array<i64: 1>, scalar_prefetch = 0 : i64, scratch_operands = 0 : i64, tpu.core_type = #tpu.core_type<tc>, window_params = [{transform_indices = @transform_0, window_bounds = array<i64: 2, 8, 32>}, {transform_indices = @transform_1, window_bounds = array<i64: 2, 8, 32>}, {transform_indices = @transform_2, window_bounds = array<i64: 2, 8, 32>}, {pipeline_mode = #tpu.pipeline_mode<synchronous>, transform_indices = @transform_3, window_bounds = array<i64: 32, 96>}, {pipeline_mode = #tpu.pipeline_mode<synchronous>, transform_indices = @transform_4, window_bounds = array<i64: 32, 32>}, {pipeline_mode = #tpu.pipeline_mode<synchronous>, transform_indices = @transform_5, window_bounds = array<i64: 32, 128>}, {pipeline_mode = #tpu.pipeline_mode<synchronous>, transform_indices = @transform_6, window_bounds = array<i64: 128, 32>}, {pipeline_mode = #tpu.pipeline_mode<synchronous>, transform_indices = @transform_7, window_bounds = array<i64: 8, 128>}, {transform_indices = @transform_8, window_bounds = array<i64: 2, 8, 32>}]} {
    %c0 = arith.constant 0 : index
    %c0_0 = arith.constant 0 : index
    %c0_1 = arith.constant 0 : index
    %0 = vector.load %arg1[%c0, %c0_0, %c0_1] : memref<2x8x32xf32, #tpu.memory_space<vmem>>, vector<2x8x32xf32>
    %1 = vector.shape_cast %0 : vector<2x8x32xf32> to vector<16x32xf32>
    %c0_2 = arith.constant 0 : index
    %c0_3 = arith.constant 0 : index
    %c0_4 = arith.constant 0 : index
    %2 = vector.load %arg2[%c0_2, %c0_3, %c0_4] : memref<2x8x32xf32, #tpu.memory_space<vmem>>, vector<2x8x32xf32>
    %3 = vector.shape_cast %2 : vector<2x8x32xf32> to vector<16x32xf32>
    %c0_5 = arith.constant 0 : index
    %c0_6 = arith.constant 0 : index
    %c0_7 = arith.constant 0 : index
    %4 = vector.load %arg3[%c0_5, %c0_6, %c0_7] : memref<2x8x32xf32, #tpu.memory_space<vmem>>, vector<2x8x32xf32>
    %5 = vector.shape_cast %4 : vector<2x8x32xf32> to vector<16x32xf32>
    %6 = tpu.concatenate %1, %3, %5 in 0 : vector<16x32xf32>, vector<16x32xf32>, vector<16x32xf32> -> vector<48x32xf32>
    %c0_8 = arith.constant 0 : index
    %c0_9 = arith.constant 0 : index
    %7 = vector.load %arg4[%c0_8, %c0_9] : memref<32x96xf32, #tpu.memory_space<vmem>>, vector<32x96xf32>
    %cst = arith.constant dense<0.000000e+00> : vector<48x96xf32>
    %8 = tpu.matmul %6, %7, %cst {dimension_numbers = #tpu.dot_dimension_numbers<[1], [0], [0], [1], [0, 0, 1, 1], [], []>} : vector<48x32xf32>, vector<32x96xf32>, vector<48x96xf32> -> vector<48x96xf32>
    %9 = vector.extract_strided_slice %8 {offsets = [0, 0], sizes = [16, 8], strides = [1, 1]} : vector<48x96xf32> to vector<16x8xf32>
    %10 = vector.shape_cast %9 : vector<16x8xf32> to vector<1x16x8xf32>
    %11 = vector.extract_strided_slice %8 {offsets = [0, 8], sizes = [16, 8], strides = [1, 1]} : vector<48x96xf32> to vector<16x8xf32>
    %12 = vector.shape_cast %11 : vector<16x8xf32> to vector<1x16x8xf32>
    %13 = vector.extract_strided_slice %8 {offsets = [0, 16], sizes = [16, 8], strides = [1, 1]} : vector<48x96xf32> to vector<16x8xf32>
    %14 = vector.shape_cast %13 : vector<16x8xf32> to vector<1x16x8xf32>
    %15 = vector.extract_strided_slice %8 {offsets = [0, 24], sizes = [16, 8], strides = [1, 1]} : vector<48x96xf32> to vector<16x8xf32>
    %16 = vector.shape_cast %15 : vector<16x8xf32> to vector<1x16x8xf32>
    %17 = tpu.concatenate %10, %12, %14, %16 in 0 : vector<1x16x8xf32>, vector<1x16x8xf32>, vector<1x16x8xf32>, vector<1x16x8xf32> -> vector<4x16x8xf32>
    %18 = vector.shape_cast %17 : vector<4x16x8xf32> to vector<8x8x8xf32>
    %19 = vector.extract_strided_slice %8 {offsets = [16, 32], sizes = [16, 8], strides = [1, 1]} : vector<48x96xf32> to vector<16x8xf32>
    %20 = vector.shape_cast %19 : vector<16x8xf32> to vector<1x16x8xf32>
    %21 = vector.extract_strided_slice %8 {offsets = [16, 40], sizes = [16, 8], strides = [1, 1]} : vector<48x96xf32> to vector<16x8xf32>
    %22 = vector.shape_cast %21 : vector<16x8xf32> to vector<1x16x8xf32>
    %23 = vector.extract_strided_slice %8 {offsets = [16, 48], sizes = [16, 8], strides = [1, 1]} : vector<48x96xf32> to vector<16x8xf32>
    %24 = vector.shape_cast %23 : vector<16x8xf32> to vector<1x16x8xf32>
    %25 = vector.extract_strided_slice %8 {offsets = [16, 56], sizes = [16, 8], strides = [1, 1]} : vector<48x96xf32> to vector<16x8xf32>
    %26 = vector.shape_cast %25 : vector<16x8xf32> to vector<1x16x8xf32>
    %27 = tpu.concatenate %20, %22, %24, %26 in 0 : vector<1x16x8xf32>, vector<1x16x8xf32>, vector<1x16x8xf32>, vector<1x16x8xf32> -> vector<4x16x8xf32>
    %28 = vector.shape_cast %27 : vector<4x16x8xf32> to vector<8x8x8xf32>
    %29 = vector.extract_strided_slice %8 {offsets = [32, 64], sizes = [16, 8], strides = [1, 1]} : vector<48x96xf32> to vector<16x8xf32>
    %30 = vector.shape_cast %29 : vector<16x8xf32> to vector<1x16x8xf32>
    %31 = vector.extract_strided_slice %8 {offsets = [32, 72], sizes = [16, 8], strides = [1, 1]} : vector<48x96xf32> to vector<16x8xf32>
    %32 = vector.shape_cast %31 : vector<16x8xf32> to vector<1x16x8xf32>
    %33 = vector.extract_strided_slice %8 {offsets = [32, 80], sizes = [16, 8], strides = [1, 1]} : vector<48x96xf32> to vector<16x8xf32>
    %34 = vector.shape_cast %33 : vector<16x8xf32> to vector<1x16x8xf32>
    %35 = vector.extract_strided_slice %8 {offsets = [32, 88], sizes = [16, 8], strides = [1, 1]} : vector<48x96xf32> to vector<16x8xf32>
    %36 = vector.shape_cast %35 : vector<16x8xf32> to vector<1x16x8xf32>
    %37 = tpu.concatenate %30, %32, %34, %36 in 0 : vector<1x16x8xf32>, vector<1x16x8xf32>, vector<1x16x8xf32>, vector<1x16x8xf32> -> vector<4x16x8xf32>
    %38 = vector.shape_cast %37 : vector<4x16x8xf32> to vector<8x8x8xf32>
    "tpu.trace_start"() <{level = 10 : i32, message = "bqd,bkd->bqk"}> : () -> ()
    %cst_10 = arith.constant dense<0.000000e+00> : vector<8x8x8xf32>
    %39 = tpu.matmul %38, %28, %cst_10 {dimension_numbers = #tpu.dot_dimension_numbers<[2], [2], [1], [1], [0, 0, 0, 1, 1, 1], [0], [0]>} : vector<8x8x8xf32>, vector<8x8x8xf32>, vector<8x8x8xf32> -> vector<8x8x8xf32>
    "tpu.trace_stop"() : () -> ()
    %40 = vector.shape_cast %39 : vector<8x8x8xf32> to vector<64x8xf32>
    %41 = vector.shape_cast %40 : vector<64x8xf32> to vector<64x8x1xf32>
    %42 = vector.shape_cast %40 : vector<64x8xf32> to vector<64x1x8xf32>
    %43 = tpu.iota {dimensions = array<i32: 2>} : vector<1x8x8xi32>
    %44 = tpu.iota {dimensions = array<i32: 1>} : vector<1x8x8xi32>
    %45 = vector.broadcast %42 : vector<64x1x8xf32> to vector<64x8x8xf32>
    %46 = vector.broadcast %41 : vector<64x8x1xf32> to vector<64x8x8xf32>
    %47 = arith.cmpf ogt, %45, %46 : vector<64x8x8xf32>
    %48 = vector.broadcast %42 : vector<64x1x8xf32> to vector<64x8x8xf32>
    %49 = vector.broadcast %41 : vector<64x8x1xf32> to vector<64x8x8xf32>
    %50 = arith.cmpf oeq, %48, %49 : vector<64x8x8xf32>
    %51 = arith.cmpi slt, %43, %44 : vector<1x8x8xi32>
    %52 = vector.broadcast %51 : vector<1x8x8xi1> to vector<64x8x8xi1>
    %53 = arith.andi %50, %52 : vector<64x8x8xi1>
    %54 = arith.ori %47, %53 : vector<64x8x8xi1>
    %55 = arith.extui %54 : vector<64x8x8xi1> to vector<64x8x8xi32>
    %56 = arith.sitofp %55 : vector<64x8x8xi32> to vector<64x8x8xf32>
    %cst_11 = arith.constant dense<0.000000e+00> : vector<64x8xf32>
    %57 = vector.multi_reduction <add>, %56, %cst_11 [2] : vector<64x8x8xf32> to vector<64x8xf32>
    %cst_12 = arith.constant 4.000000e+00 : f32
    %58 = vector.broadcast %cst_12 : f32 to vector<64x8xf32>
    %59 = arith.cmpf olt, %57, %58 : vector<64x8xf32>
    %cst_13 = arith.constant 0xFF800000 : f32
    %60 = vector.broadcast %cst_13 : f32 to vector<64x8xf32>
    %61 = arith.select %59, %40, %60 : vector<64x8xi1>, vector<64x8xf32>
    %cst_14 = arith.constant dense<0xFF800000> : vector<64xf32>
    %62 = vector.multi_reduction <maximumf>, %61, %cst_14 [1] : vector<64x8xf32> to vector<64xf32>
    %63 = vector.shape_cast %62 : vector<64xf32> to vector<64x1xf32>
    %64 = vector.broadcast %63 : vector<64x1xf32> to vector<64x8xf32>
    %65 = arith.subf %61, %64 : vector<64x8xf32>
    %66 = math.exp %65 : vector<64x8xf32>
    %cst_15 = arith.constant 0.000000e+00 : f32
    %67 = vector.broadcast %cst_15 : f32 to vector<64x8xf32>
    %68 = arith.select %59, %66, %67 : vector<64x8xi1>, vector<64x8xf32>
    %cst_16 = arith.constant dense<0.000000e+00> : vector<64xf32>
    %69 = vector.multi_reduction <add>, %68, %cst_16 [1] : vector<64x8xf32> to vector<64xf32>
    %70 = vector.shape_cast %69 : vector<64xf32> to vector<64x1xf32>
    %71 = tpu.reciprocal %70 {approx = true} : vector<64x1xf32> -> vector<64x1xf32>
    %72 = arith.mulf %70, %71 : vector<64x1xf32>
    %cst_17 = arith.constant 2.000000e+00 : f32
    %73 = vector.broadcast %cst_17 : f32 to vector<64x1xf32>
    %74 = arith.subf %73, %72 : vector<64x1xf32>
    %75 = arith.mulf %71, %74 : vector<64x1xf32>
    %76 = vector.broadcast %75 : vector<64x1xf32> to vector<64x8xf32>
    %77 = arith.mulf %68, %76 : vector<64x8xf32>
    %78 = vector.shape_cast %77 : vector<64x8xf32> to vector<8x8x8xf32>
    "tpu.trace_start"() <{level = 10 : i32, message = "bqk,bkd->bqd"}> : () -> ()
    %cst_18 = arith.constant dense<0.000000e+00> : vector<8x8x8xf32>
    %79 = tpu.matmul %78, %18, %cst_18 {dimension_numbers = #tpu.dot_dimension_numbers<[2], [1], [1], [2], [0, 0, 0, 1, 1, 2], [0], [0]>} : vector<8x8x8xf32>, vector<8x8x8xf32>, vector<8x8x8xf32> -> vector<8x8x8xf32>
    "tpu.trace_stop"() : () -> ()
    %80 = vector.shape_cast %79 : vector<8x8x8xf32> to vector<4x16x8xf32>
    %81 = vector.extract_strided_slice %80 {offsets = [0, 0, 0], sizes = [1, 16, 8], strides = [1, 1, 1]} : vector<4x16x8xf32> to vector<1x16x8xf32>
    %82 = vector.shape_cast %81 : vector<1x16x8xf32> to vector<16x8xf32>
    %83 = vector.extract_strided_slice %80 {offsets = [1, 0, 0], sizes = [1, 16, 8], strides = [1, 1, 1]} : vector<4x16x8xf32> to vector<1x16x8xf32>
    %84 = vector.shape_cast %83 : vector<1x16x8xf32> to vector<16x8xf32>
    %85 = vector.extract_strided_slice %80 {offsets = [2, 0, 0], sizes = [1, 16, 8], strides = [1, 1, 1]} : vector<4x16x8xf32> to vector<1x16x8xf32>
    %86 = vector.shape_cast %85 : vector<1x16x8xf32> to vector<16x8xf32>
    %87 = vector.extract_strided_slice %80 {offsets = [3, 0, 0], sizes = [1, 16, 8], strides = [1, 1, 1]} : vector<4x16x8xf32> to vector<1x16x8xf32>
    %88 = vector.shape_cast %87 : vector<1x16x8xf32> to vector<16x8xf32>
    %89 = tpu.concatenate %82, %84, %86, %88 in 1 : vector<16x8xf32>, vector<16x8xf32>, vector<16x8xf32>, vector<16x8xf32> -> vector<16x32xf32>
    %c0_19 = arith.constant 0 : index
    %c0_20 = arith.constant 0 : index
    %90 = vector.load %arg8[%c0_19, %c0_20] : memref<8x128xf32, #tpu.memory_space<vmem>>, vector<8x128xf32>
    %91 = vector.extract_strided_slice %90 {offsets = [0, 0], sizes = [1, 128], strides = [1, 1]} : vector<8x128xf32> to vector<1x128xf32>
    %92 = vector.extract_strided_slice %90 {offsets = [1, 0], sizes = [1, 32], strides = [1, 1]} : vector<8x128xf32> to vector<1x32xf32>
    %93 = vector.extract_strided_slice %90 {offsets = [2, 0], sizes = [1, 32], strides = [1, 1]} : vector<8x128xf32> to vector<1x32xf32>
    %94 = vector.extract_strided_slice %90 {offsets = [3, 0], sizes = [1, 32], strides = [1, 1]} : vector<8x128xf32> to vector<1x32xf32>
    %95 = vector.extract_strided_slice %90 {offsets = [4, 0], sizes = [1, 32], strides = [1, 1]} : vector<8x128xf32> to vector<1x32xf32>
    %96 = vector.extract_strided_slice %90 {offsets = [5, 0], sizes = [1, 32], strides = [1, 1]} : vector<8x128xf32> to vector<1x32xf32>
    %97 = vector.extract_strided_slice %90 {offsets = [6, 0], sizes = [1, 32], strides = [1, 1]} : vector<8x128xf32> to vector<1x32xf32>
    %c0_21 = arith.constant 0 : index
    %c0_22 = arith.constant 0 : index
    %98 = vector.load %arg5[%c0_21, %c0_22] : memref<32x32xf32, #tpu.memory_space<vmem>>, vector<32x32xf32>
    %cst_23 = arith.constant dense<0.000000e+00> : vector<16x32xf32>
    %99 = tpu.matmul %89, %98, %cst_23 {dimension_numbers = #tpu.dot_dimension_numbers<[1], [0], [0], [1], [0, 0, 1, 1], [], []>} : vector<16x32xf32>, vector<32x32xf32>, vector<16x32xf32> -> vector<16x32xf32>
    %100 = vector.broadcast %92 : vector<1x32xf32> to vector<16x32xf32>
    %101 = arith.addf %99, %100 : vector<16x32xf32>
    %102 = arith.addf %101, %5 : vector<16x32xf32>
    %cst_24 = arith.constant dense<0.000000e+00> : vector<16xf32>
    %103 = vector.multi_reduction <add>, %102, %cst_24 [1] : vector<16x32xf32> to vector<16xf32>
    %104 = vector.shape_cast %103 : vector<16xf32> to vector<16x1xf32>
    %cst_25 = arith.constant 3.200000e+01 : f32
    %105 = vector.broadcast %cst_25 : f32 to vector<16x1xf32>
    %106 = arith.divf %104, %105 : vector<16x1xf32>
    %107 = vector.broadcast %106 : vector<16x1xf32> to vector<16x32xf32>
    %108 = arith.subf %102, %107 : vector<16x32xf32>
    %109 = vector.broadcast %106 : vector<16x1xf32> to vector<16x32xf32>
    %110 = arith.subf %102, %109 : vector<16x32xf32>
    %111 = arith.mulf %108, %110 : vector<16x32xf32>
    %cst_26 = arith.constant dense<0.000000e+00> : vector<16xf32>
    %112 = vector.multi_reduction <add>, %111, %cst_26 [1] : vector<16x32xf32> to vector<16xf32>
    %113 = vector.shape_cast %112 : vector<16xf32> to vector<16x1xf32>
    %cst_27 = arith.constant 3.200000e+01 : f32
    %114 = vector.broadcast %cst_27 : f32 to vector<16x1xf32>
    %115 = arith.divf %113, %114 : vector<16x1xf32>
    %116 = vector.broadcast %106 : vector<16x1xf32> to vector<16x32xf32>
    %117 = arith.subf %102, %116 : vector<16x32xf32>
    %cst_28 = arith.constant 9.99999974E-6 : f32
    %118 = vector.broadcast %cst_28 : f32 to vector<16x1xf32>
    %119 = arith.addf %115, %118 : vector<16x1xf32>
    %120 = math.rsqrt %119 : vector<16x1xf32>
    %121 = vector.broadcast %120 : vector<16x1xf32> to vector<16x32xf32>
    %122 = arith.mulf %117, %121 : vector<16x32xf32>
    %123 = vector.broadcast %93 : vector<1x32xf32> to vector<16x32xf32>
    %124 = arith.mulf %122, %123 : vector<16x32xf32>
    %125 = vector.broadcast %94 : vector<1x32xf32> to vector<16x32xf32>
    %126 = arith.addf %124, %125 : vector<16x32xf32>
    %c0_29 = arith.constant 0 : index
    %c0_30 = arith.constant 0 : index
    %127 = vector.load %arg6[%c0_29, %c0_30] : memref<32x128xf32, #tpu.memory_space<vmem>>, vector<32x128xf32>
    %cst_31 = arith.constant dense<0.000000e+00> : vector<16x128xf32>
    %128 = tpu.matmul %126, %127, %cst_31 {dimension_numbers = #tpu.dot_dimension_numbers<[1], [0], [0], [1], [0, 0, 1, 1], [], []>} : vector<16x32xf32>, vector<32x128xf32>, vector<16x128xf32> -> vector<16x128xf32>
    %129 = vector.broadcast %91 : vector<1x128xf32> to vector<16x128xf32>
    %130 = arith.addf %128, %129 : vector<16x128xf32>
    %cst_32 = arith.constant 0.000000e+00 : f32
    %131 = vector.broadcast %cst_32 : f32 to vector<16x128xf32>
    %132 = arith.maximumf %130, %131 : vector<16x128xf32>
    %c0_33 = arith.constant 0 : index
    %c0_34 = arith.constant 0 : index
    %133 = vector.load %arg7[%c0_33, %c0_34] : memref<128x32xf32, #tpu.memory_space<vmem>>, vector<128x32xf32>
    %cst_35 = arith.constant dense<0.000000e+00> : vector<16x32xf32>
    %134 = tpu.matmul %132, %133, %cst_35 {dimension_numbers = #tpu.dot_dimension_numbers<[1], [0], [0], [1], [0, 0, 1, 1], [], []>} : vector<16x128xf32>, vector<128x32xf32>, vector<16x32xf32> -> vector<16x32xf32>
    %135 = vector.broadcast %95 : vector<1x32xf32> to vector<16x32xf32>
    %136 = arith.addf %134, %135 : vector<16x32xf32>
    %137 = arith.addf %136, %126 : vector<16x32xf32>
    %cst_36 = arith.constant dense<0.000000e+00> : vector<16xf32>
    %138 = vector.multi_reduction <add>, %137, %cst_36 [1] : vector<16x32xf32> to vector<16xf32>
    %139 = vector.shape_cast %138 : vector<16xf32> to vector<16x1xf32>
    %cst_37 = arith.constant 3.200000e+01 : f32
    %140 = vector.broadcast %cst_37 : f32 to vector<16x1xf32>
    %141 = arith.divf %139, %140 : vector<16x1xf32>
    %142 = vector.broadcast %141 : vector<16x1xf32> to vector<16x32xf32>
    %143 = arith.subf %137, %142 : vector<16x32xf32>
    %144 = vector.broadcast %141 : vector<16x1xf32> to vector<16x32xf32>
    %145 = arith.subf %137, %144 : vector<16x32xf32>
    %146 = arith.mulf %143, %145 : vector<16x32xf32>
    %cst_38 = arith.constant dense<0.000000e+00> : vector<16xf32>
    %147 = vector.multi_reduction <add>, %146, %cst_38 [1] : vector<16x32xf32> to vector<16xf32>
    %148 = vector.shape_cast %147 : vector<16xf32> to vector<16x1xf32>
    %cst_39 = arith.constant 3.200000e+01 : f32
    %149 = vector.broadcast %cst_39 : f32 to vector<16x1xf32>
    %150 = arith.divf %148, %149 : vector<16x1xf32>
    %151 = vector.broadcast %141 : vector<16x1xf32> to vector<16x32xf32>
    %152 = arith.subf %137, %151 : vector<16x32xf32>
    %cst_40 = arith.constant 9.99999974E-6 : f32
    %153 = vector.broadcast %cst_40 : f32 to vector<16x1xf32>
    %154 = arith.addf %150, %153 : vector<16x1xf32>
    %155 = math.rsqrt %154 : vector<16x1xf32>
    %156 = vector.broadcast %155 : vector<16x1xf32> to vector<16x32xf32>
    %157 = arith.mulf %152, %156 : vector<16x32xf32>
    %158 = vector.broadcast %96 : vector<1x32xf32> to vector<16x32xf32>
    %159 = arith.mulf %157, %158 : vector<16x32xf32>
    %160 = vector.broadcast %97 : vector<1x32xf32> to vector<16x32xf32>
    %161 = arith.addf %159, %160 : vector<16x32xf32>
    %162 = vector.shape_cast %161 : vector<16x32xf32> to vector<2x8x32xf32>
    %c0_41 = arith.constant 0 : index
    %c0_42 = arith.constant 0 : index
    %c0_43 = arith.constant 0 : index
    %163 = vector.load %arg9[%c0_41, %c0_42, %c0_43] : memref<2x8x32xf32, #tpu.memory_space<vmem>>, vector<2x8x32xf32>
    tpu.vector_store %arg9[%c0_41, %c0_42, %c0_43], %162 {strides = array<i32>} : memref<2x8x32xf32, #tpu.memory_space<vmem>>, vector<2x8x32xf32>,
    return
  }
  func.func @transform_0(%arg0: i32) -> (i32, i32, i32) {
    %c0_i32 = arith.constant 0 : i32
    %c0_i32_0 = arith.constant 0 : i32
    %c0_i32_1 = arith.constant 0 : i32
    return %arg0, %c0_i32, %c0_i32_0 : i32, i32, i32
  }
  func.func @transform_1(%arg0: i32) -> (i32, i32, i32) {
    %c0_i32 = arith.constant 0 : i32
    %c0_i32_0 = arith.constant 0 : i32
    %c0_i32_1 = arith.constant 0 : i32
    return %arg0, %c0_i32, %c0_i32_0 : i32, i32, i32
  }
  func.func @transform_2(%arg0: i32) -> (i32, i32, i32) {
    %c0_i32 = arith.constant 0 : i32
    %c0_i32_0 = arith.constant 0 : i32
    %c0_i32_1 = arith.constant 0 : i32
    return %arg0, %c0_i32, %c0_i32_0 : i32, i32, i32
  }
  func.func @transform_3(%arg0: i32) -> (i32, i32) {
    %c0_i32 = arith.constant 0 : i32
    %c0_i32_0 = arith.constant 0 : i32
    %c0_i32_1 = arith.constant 0 : i32
    return %c0_i32, %c0_i32_0 : i32, i32
  }
  func.func @transform_4(%arg0: i32) -> (i32, i32) {
    %c0_i32 = arith.constant 0 : i32
    %c0_i32_0 = arith.constant 0 : i32
    %c0_i32_1 = arith.constant 0 : i32
    return %c0_i32, %c0_i32_0 : i32, i32
  }
  func.func @transform_5(%arg0: i32) -> (i32, i32) {
    %c0_i32 = arith.constant 0 : i32
    %c0_i32_0 = arith.constant 0 : i32
    %c0_i32_1 = arith.constant 0 : i32
    return %c0_i32, %c0_i32_0 : i32, i32
  }
  func.func @transform_6(%arg0: i32) -> (i32, i32) {
    %c0_i32 = arith.constant 0 : i32
    %c0_i32_0 = arith.constant 0 : i32
    %c0_i32_1 = arith.constant 0 : i32
    return %c0_i32, %c0_i32_0 : i32, i32
  }
  func.func @transform_7(%arg0: i32) -> (i32, i32) {
    %c0_i32 = arith.constant 0 : i32
    %c0_i32_0 = arith.constant 0 : i32
    %c0_i32_1 = arith.constant 0 : i32
    return %c0_i32, %c0_i32_0 : i32, i32
  }
  func.func @transform_8(%arg0: i32) -> (i32, i32, i32) {
    %c0_i32 = arith.constant 0 : i32
    %c0_i32_0 = arith.constant 0 : i32
    %c0_i32_1 = arith.constant 0 : i32
    return %arg0, %c0_i32, %c0_i32_0 : i32, i32, i32
  }
}

</mosaic_0001>

<llo_original>
// kernel: tpu_custom_call.1
$region0: #{tpu_custom_call.1}
  #allocation0 [shape = 'u32[]', space=smem, size = 0x4, offset = 0x4, fixed_abs, tag = 'smem constant byte address 0x4 - core index']
  #allocation1 [shape = 'u32[72,128]{1,0:T(1,128)}', space=vmem, size = 0x9000, scoped, tag = 'internal scratch']
  %s0 = inlined_call_operand.vmem [shape: f32[2,8,32], index: 0, kind: input, shape index: {}]
  %s1 = inlined_call_operand.vmem [shape: f32[2,8,32], index: 1, kind: input, shape index: {}]
  %s2 = inlined_call_operand.vmem [shape: f32[2,8,32], index: 2, kind: input, shape index: {}]
  %s3 = inlined_call_operand.vmem [shape: f32[32,96], index: 3, kind: input, shape index: {}]
  %s4 = inlined_call_operand.vmem [shape: f32[32,32], index: 4, kind: input, shape index: {}]
  %s5 = inlined_call_operand.vmem [shape: f32[32,128], index: 5, kind: input, shape index: {}]
  %s6 = inlined_call_operand.vmem [shape: f32[128,32], index: 6, kind: input, shape index: {}]
  %s7 = inlined_call_operand.vmem [shape: f32[8,128], index: 7, kind: input, shape index: {}]
  %s8 = inlined_call_operand.hbm [shape: f32[2,8,32], index: 8, kind: output, shape index: {}]
  %s9 = sld [smem:[#allocation0]]
  $region42: #{tpu_custom_call.1} parent=0
    _
  %s11 = ssub.s32 1, %s9
  %s12 = scalar_select 0, %s11, %s9
  $region1: #{tpu_custom_call.1} parent=0
    #allocation2 [shape = 'u8[8192]{0}', space=vmem, size = 0x2000, scoped, tag = 'output window, operand 0, single buffered']
    #allocation3 [shape = 's32[1]{0}', space=sflag, size = 0x4, scoped, tag = 'scoped memory for tpu_custom_call.1']
    %13 = vsyncpa [#allocation3], 0
    // Predicated region
    $region2: #{tpu_custom_call.1} parent=1 // pred_check
      _
    $region3: #{tpu_custom_call.1} parent=1 // pred_check_branch
      %15 = sbr.rel (0) target = $region5
    $region4: #{tpu_custom_call.1} parent=1 // pred_region
      _
    $region5: #{tpu_custom_call.1} parent=1 // pred_fallthru
      _
    // Predicated region
    $region6: #{tpu_custom_call.1} parent=1 // pred_check
      _
    $region7: #{tpu_custom_call.1} parent=1 // pred_check_branch
      %17 = sbr.rel (0) target = $region9
    $region8: #{tpu_custom_call.1} parent=1 // pred_region
      _
    $region9: #{tpu_custom_call.1} parent=1 // pred_fallthru
      _
    // Predicated region
    $region10: #{tpu_custom_call.1} parent=1 // pred_check
      _
    $region11: #{tpu_custom_call.1} parent=1 // pred_check_branch
      %19 = sbr.rel (0) target = $region13
    $region12: #{tpu_custom_call.1} parent=1 // pred_region
      _
    $region13: #{tpu_custom_call.1} parent=1 // pred_fallthru
      _
    // Predicated region
    $region14: #{tpu_custom_call.1} parent=1 // pred_check
      _
    $region15: #{tpu_custom_call.1} parent=1 // pred_check_branch
      %21 = sbr.rel (0) target = $region17
    $region16: #{tpu_custom_call.1} parent=1 // pred_region
      _
    $region17: #{tpu_custom_call.1} parent=1 // pred_fallthru
      _
    // Predicated region
    $region18: #{tpu_custom_call.1} parent=1 // pred_check
      _
    $region19: #{tpu_custom_call.1} parent=1 // pred_check_branch
      %23 = sbr.rel (0) target = $region21
    $region20: #{tpu_custom_call.1} parent=1 // pred_region
      _
    $region21: #{tpu_custom_call.1} parent=1 // pred_fallthru
      _
    // Predicated region
    $region22: #{tpu_custom_call.1} parent=1 // pred_check
      _
    $region23: #{tpu_custom_call.1} parent=1 // pred_check_branch
      %25 = sbr.rel (0) target = $region25
    $region24: #{tpu_custom_call.1} parent=1 // pred_region
      _
    $region25: #{tpu_custom_call.1} parent=1 // pred_fallthru
      _
    // Predicated region
    $region26: #{tpu_custom_call.1} parent=1 // pred_check
      _
    $region27: #{tpu_custom_call.1} parent=1 // pred_check_branch
      %27 = sbr.rel (0) target = $region29
    $region28: #{tpu_custom_call.1} parent=1 // pred_region
      _
    $region29: #{tpu_custom_call.1} parent=1 // pred_fallthru
      _
    // Predicated region
    $region30: #{tpu_custom_call.1} parent=1 // pred_check
      _
    $region31: #{tpu_custom_call.1} parent=1 // pred_check_branch
      %29 = sbr.rel (0) target = $region33
    $region32: #{tpu_custom_call.1} parent=1 // pred_region
      _
    $region33: #{tpu_custom_call.1} parent=1 // pred_fallthru
      _
    %v30 = vld [vmem:[%s0] sm:$0xff]
    %v31 = vld [vmem:[%s0 + $0x8] sm:$0xff]
    %v32 = vld [vmem:[%s1] sm:$0xff]
    %v33 = vld [vmem:[%s1 + $0x8] sm:$0xff]
    %v34 = vld [vmem:[%s2] sm:$0xff]
    %v35 = vld [vmem:[%s2 + $0x8] sm:$0xff]
    %v36 = vld [vmem:[%s3] sm:$0xff]
    %v37 = vld [vmem:[%s3 + $0x8] sm:$0xff]
    %v38 = vld [vmem:[%s3 + $0x10] sm:$0xff]
    %v39 = vld [vmem:[%s3 + $0x18] sm:$0xff]
    %vm40 = vcmask 261120
    %v42 = vsel %vm40, %v30, 0
    %v45 = vsel %vm40, %v31, 0
    %v48 = vsel %vm40, %v32, 0
    %v51 = vsel %vm40, %v33, 0
    %v54 = vsel %vm40, %v34, 0
    %v57 = vsel %vm40, %v35, 0
    %59 = vmatpush.msra.mxu0 0.0
    %60 = vmatpush.msra.mxu0 0.0
    %61 = vmatpush.msra.mxu0 0.0
    %62 = vmatpush.msra.mxu0 0.0
    %63 = vmatpush.msra.mxu0 0.0
    %64 = vmatpush.msra.mxu0 0.0
    %65 = vmatpush.msra.mxu0 0.0
    %66 = vmatpush.msra.mxu0 0.0
    %67 = vmatpush.msra.mxu0 0.0
    %68 = vmatpush.msra.mxu0 0.0
    %69 = vmatpush.msra.mxu0 0.0
    %70 = vmatpush.msra.mxu0 0.0
    %71 = vmatpush.msra.mxu0 %v39
    %72 = vmatpush.msra.mxu0 %v38
    %73 = vmatpush.msra.mxu0 %v37
    %74 = vmatpush.msra.mxu0 %v36
    %75 = vmatmul.f32.gmra.mxu0 %v42
    %v76 = vpop.f32.mrf.mxu0
    %v77 = vadd.f32 0.0, %v76
    %78 = vmatmul.f32.gmra.mxu0 %v45
    %v79 = vpop.f32.mrf.mxu0
    %v80 = vadd.f32 0.0, %v79
    %81 = vmatmul.f32.gmra.mxu0 %v48
    %v82 = vpop.f32.mrf.mxu0
    %v83 = vadd.f32 0.0, %v82
    %84 = vmatmul.f32.gmra.mxu0 %v51
    %v85 = vpop.f32.mrf.mxu0
    %v86 = vadd.f32 0.0, %v85
    %87 = vmatmul.f32.gmra.mxu0 %v54
    %v88 = vpop.f32.mrf.mxu0
    %v89 = vadd.f32 0.0, %v88
    %90 = vmatmul.f32.gmra.mxu0 %v57
    %v91 = vpop.f32.mrf.mxu0
    %v92 = vadd.f32 0.0, %v91
    %93 = vdwg.mxu0
    %96 = vrot.lane.b32.xlu0 %v77, 120
    %v97 = vpop.permute.xlu0 %96
    %98 = vrot.lane.b32.xlu0 %v80, 120
    %v99 = vpop.permute.xlu0 %98
    %102 = vrot.lane.b32.xlu0 %v77, 112
    %v103 = vpop.permute.xlu0 %102
    %104 = vrot.lane.b32.xlu0 %v80, 112
    %v105 = vpop.permute.xlu0 %104
    %108 = vrot.lane.b32.xlu0 %v77, 104
    %v109 = vpop.permute.xlu0 %108
    %110 = vrot.lane.b32.xlu0 %v80, 104
    %v111 = vpop.permute.xlu0 %110
    %116 = vrot.lane.b32.xlu0 %v83, 120
    %v117 = vpop.permute.xlu0 %116
    %118 = vrot.lane.b32.xlu0 %v86, 120
    %v119 = vpop.permute.xlu0 %118
    %120 = vrot.lane.b32.xlu0 %v83, 112
    %v121 = vpop.permute.xlu0 %120
    %122 = vrot.lane.b32.xlu0 %v86, 112
    %v123 = vpop.permute.xlu0 %122
    %124 = vrot.lane.b32.xlu0 %v83, 104
    %v125 = vpop.permute.xlu0 %124
    %126 = vrot.lane.b32.xlu0 %v86, 104
    %v127 = vpop.permute.xlu0 %126
    %130 = vrot.lane.b32.xlu0 %v89, 120
    %v131 = vpop.permute.xlu0 %130
    %132 = vrot.lane.b32.xlu0 %v92, 120
    %v133 = vpop.permute.xlu0 %132
    %134 = vrot.lane.b32.xlu0 %v89, 112
    %v135 = vpop.permute.xlu0 %134
    %136 = vrot.lane.b32.xlu0 %v92, 112
    %v137 = vpop.permute.xlu0 %136
    %138 = vrot.lane.b32.xlu0 %v89, 104
    %v139 = vpop.permute.xlu0 %138
    %140 = vrot.lane.b32.xlu0 %v92, 104
    %v141 = vpop.permute.xlu0 %140
    %142 = vrot.lane.b32.xlu0 %v89, 64
    %v143 = vpop.permute.xlu0 %142
    %144 = vrot.lane.b32.xlu0 %v83, 96
    %v145 = vpop.permute.xlu0 %144
    %vm146 = vcmask 64512
    %v147 = vsel %vm146, %v143, 0
    %v149 = vsel %vm146, %v145, 0
    %151 = vmatpush.xpose.msra.mxu0 0.0
    %152 = vmatpush.xpose.msra.mxu0 0.0
    %153 = vmatpush.xpose.msra.mxu0 0.0
    %154 = vmatpush.xpose.msra.mxu0 0.0
    %155 = vmatpush.xpose.msra.mxu0 0.0
    %156 = vmatpush.xpose.msra.mxu0 0.0
    %157 = vmatpush.xpose.msra.mxu0 0.0
    %158 = vmatpush.xpose.msra.mxu0 0.0
    %159 = vmatpush.xpose.msra.mxu0 0.0
    %160 = vmatpush.xpose.msra.mxu0 0.0
    %161 = vmatpush.xpose.msra.mxu0 0.0
    %162 = vmatpush.xpose.msra.mxu0 0.0
    %163 = vmatpush.xpose.msra.mxu0 0.0
    %164 = vmatpush.xpose.msra.mxu0 0.0
    %165 = vmatpush.xpose.msra.mxu0 0.0
    %166 = vmatpush.xpose.msra.mxu0 %v149
    %167 = vmatmul.f32.gmra.mxu0 %v147
    %v168 = vpop.f32.mrf.mxu0
    %v169 = vadd.f32 0.0, %v168
    %170 = vdwg.mxu0
    %171 = vrot.lane.b32.xlu0 %v92, 64
    %v172 = vpop.permute.xlu0 %171
    %173 = vrot.lane.b32.xlu0 %v86, 96
    %v174 = vpop.permute.xlu0 %173
    %v175 = vsel %vm146, %v172, 0
    %v177 = vsel %vm146, %v174, 0
    %179 = vmatpush.xpose.msra.mxu0 0.0
    %180 = vmatpush.xpose.msra.mxu0 0.0
    %181 = vmatpush.xpose.msra.mxu0 0.0
    %182 = vmatpush.xpose.msra.mxu0 0.0
    %183 = vmatpush.xpose.msra.mxu0 0.0
    %184 = vmatpush.xpose.msra.mxu0 0.0
    %185 = vmatpush.xpose.msra.mxu0 0.0
    %186 = vmatpush.xpose.msra.mxu0 0.0
    %187 = vmatpush.xpose.msra.mxu0 0.0
    %188 = vmatpush.xpose.msra.mxu0 0.0
    %189 = vmatpush.xpose.msra.mxu0 0.0
    %190 = vmatpush.xpose.msra.mxu0 0.0
    %191 = vmatpush.xpose.msra.mxu0 0.0
    %192 = vmatpush.xpose.msra.mxu0 0.0
    %193 = vmatpush.xpose.msra.mxu0 0.0
    %194 = vmatpush.xpose.msra.mxu0 %v177
    %195 = vmatmul.f32.gmra.mxu0 %v175
    %v196 = vpop.f32.mrf.mxu0
    %v197 = vadd.f32 0.0, %v196
    %198 = vdwg.mxu0
    %199 = vrot.lane.b32.xlu0 %v131, 64
    %v200 = vpop.permute.xlu0 %199
    %201 = vrot.lane.b32.xlu0 %v117, 96
    %v202 = vpop.permute.xlu0 %201
    %v203 = vsel %vm146, %v200, 0
    %v205 = vsel %vm146, %v202, 0
    %207 = vmatpush.xpose.msra.mxu0 0.0
    %208 = vmatpush.xpose.msra.mxu0 0.0
    %209 = vmatpush.xpose.msra.mxu0 0.0
    %210 = vmatpush.xpose.msra.mxu0 0.0
    %211 = vmatpush.xpose.msra.mxu0 0.0
    %212 = vmatpush.xpose.msra.mxu0 0.0
    %213 = vmatpush.xpose.msra.mxu0 0.0
    %214 = vmatpush.xpose.msra.mxu0 0.0
    %215 = vmatpush.xpose.msra.mxu0 0.0
    %216 = vmatpush.xpose.msra.mxu0 0.0
    %217 = vmatpush.xpose.msra.mxu0 0.0
    %218 = vmatpush.xpose.msra.mxu0 0.0
    %219 = vmatpush.xpose.msra.mxu0 0.0
    %220 = vmatpush.xpose.msra.mxu0 0.0
    %221 = vmatpush.xpose.msra.mxu0 0.0
    %222 = vmatpush.xpose.msra.mxu0 %v205
    %223 = vmatmul.f32.gmra.mxu0 %v203
    %v224 = vpop.f32.mrf.mxu0
    %v225 = vadd.f32 0.0, %v224
    %226 = vdwg.mxu0
    %227 = vrot.lane.b32.xlu0 %v133, 64
    %v228 = vpop.permute.xlu0 %227
    %229 = vrot.lane.b32.xlu0 %v119, 96
    %v230 = vpop.permute.xlu0 %229
    %v231 = vsel %vm146, %v228, 0
    %v233 = vsel %vm146, %v230, 0
    %235 = vmatpush.xpose.msra.mxu0 0.0
    %236 = vmatpush.xpose.msra.mxu0 0.0
    %237 = vmatpush.xpose.msra.mxu0 0.0
    %238 = vmatpush.xpose.msra.mxu0 0.0
    %239 = vmatpush.xpose.msra.mxu0 0.0
    %240 = vmatpush.xpose.msra.mxu0 0.0
    %241 = vmatpush.xpose.msra.mxu0 0.0
    %242 = vmatpush.xpose.msra.mxu0 0.0
    %243 = vmatpush.xpose.msra.mxu0 0.0
    %244 = vmatpush.xpose.msra.mxu0 0.0
    %245 = vmatpush.xpose.msra.mxu0 0.0
    %246 = vmatpush.xpose.msra.mxu0 0.0
    %247 = vmatpush.xpose.msra.mxu0 0.0
    %248 = vmatpush.xpose.msra.mxu0 0.0
    %249 = vmatpush.xpose.msra.mxu0 0.0
    %250 = vmatpush.xpose.msra.mxu0 %v233
    %251 = vmatmul.f32.gmra.mxu0 %v231
    %v252 = vpop.f32.mrf.mxu0
    %v253 = vadd.f32 0.0, %v252
    %254 = vdwg.mxu0
    %255 = vrot.lane.b32.xlu0 %v135, 64
    %v256 = vpop.permute.xlu0 %255
    %257 = vrot.lane.b32.xlu0 %v121, 96
    %v258 = vpop.permute.xlu0 %257
    %v259 = vsel %vm146, %v256, 0
    %v261 = vsel %vm146, %v258, 0
    %263 = vmatpush.xpose.msra.mxu0 0.0
    %264 = vmatpush.xpose.msra.mxu0 0.0
    %265 = vmatpush.xpose.msra.mxu0 0.0
    %266 = vmatpush.xpose.msra.mxu0 0.0
    %267 = vmatpush.xpose.msra.mxu0 0.0
    %268 = vmatpush.xpose.msra.mxu0 0.0
    %269 = vmatpush.xpose.msra.mxu0 0.0
    %270 = vmatpush.xpose.msra.mxu0 0.0
    %271 = vmatpush.xpose.msra.mxu0 0.0
    %272 = vmatpush.xpose.msra.mxu0 0.0
    %273 = vmatpush.xpose.msra.mxu0 0.0
    %274 = vmatpush.xpose.msra.mxu0 0.0
    %275 = vmatpush.xpose.msra.mxu0 0.0
    %276 = vmatpush.xpose.msra.mxu0 0.0
    %277 = vmatpush.xpose.msra.mxu0 0.0
    %278 = vmatpush.xpose.msra.mxu0 %v261
    %279 = vmatmul.f32.gmra.mxu0 %v259
    %v280 = vpop.f32.mrf.mxu0
    %v281 = vadd.f32 0.0, %v280
    %282 = vdwg.mxu0
    %283 = vrot.lane.b32.xlu0 %v137, 64
    %v284 = vpop.permute.xlu0 %283
    %285 = vrot.lane.b32.xlu0 %v123, 96
    %v286 = vpop.permute.xlu0 %285
    %v287 = vsel %vm146, %v284, 0
    %v289 = vsel %vm146, %v286, 0
    %291 = vmatpush.xpose.msra.mxu0 0.0
    %292 = vmatpush.xpose.msra.mxu0 0.0
    %293 = vmatpush.xpose.msra.mxu0 0.0
    %294 = vmatpush.xpose.msra.mxu0 0.0
    %295 = vmatpush.xpose.msra.mxu0 0.0
    %296 = vmatpush.xpose.msra.mxu0 0.0
    %297 = vmatpush.xpose.msra.mxu0 0.0
    %298 = vmatpush.xpose.msra.mxu0 0.0
    %299 = vmatpush.xpose.msra.mxu0 0.0
    %300 = vmatpush.xpose.msra.mxu0 0.0
    %301 = vmatpush.xpose.msra.mxu0 0.0
    %302 = vmatpush.xpose.msra.mxu0 0.0
    %303 = vmatpush.xpose.msra.mxu0 0.0
    %304 = vmatpush.xpose.msra.mxu0 0.0
    %305 = vmatpush.xpose.msra.mxu0 0.0
    %306 = vmatpush.xpose.msra.mxu0 %v289
    %307 = vmatmul.f32.gmra.mxu0 %v287
    %v308 = vpop.f32.mrf.mxu0
    %v309 = vadd.f32 0.0, %v308
    %310 = vdwg.mxu0
    %311 = vrot.lane.b32.xlu0 %v139, 64
    %v312 = vpop.permute.xlu0 %311
    %313 = vrot.lane.b32.xlu0 %v125, 96
    %v314 = vpop.permute.xlu0 %313
    %v315 = vsel %vm146, %v312, 0
    %v317 = vsel %vm146, %v314, 0
    %319 = vmatpush.xpose.msra.mxu0 0.0
    %320 = vmatpush.xpose.msra.mxu0 0.0
    %321 = vmatpush.xpose.msra.mxu0 0.0
    %322 = vmatpush.xpose.msra.mxu0 0.0
    %323 = vmatpush.xpose.msra.mxu0 0.0
    %324 = vmatpush.xpose.msra.mxu0 0.0
    %325 = vmatpush.xpose.msra.mxu0 0.0
    %326 = vmatpush.xpose.msra.mxu0 0.0
    %327 = vmatpush.xpose.msra.mxu0 0.0
    %328 = vmatpush.xpose.msra.mxu0 0.0
    %329 = vmatpush.xpose.msra.mxu0 0.0
    %330 = vmatpush.xpose.msra.mxu0 0.0
    %331 = vmatpush.xpose.msra.mxu0 0.0
    %332 = vmatpush.xpose.msra.mxu0 0.0
    %333 = vmatpush.xpose.msra.mxu0 0.0
    %334 = vmatpush.xpose.msra.mxu0 %v317
    %335 = vmatmul.f32.gmra.mxu0 %v315
    %v336 = vpop.f32.mrf.mxu0
    %v337 = vadd.f32 0.0, %v336
    %338 = vdwg.mxu0
    %339 = vrot.lane.b32.xlu0 %v141, 64
    %v340 = vpop.permute.xlu0 %339
    %341 = vrot.lane.b32.xlu0 %v127, 96
    %v342 = vpop.permute.xlu0 %341
    %v343 = vsel %vm146, %v340, 0
    %v345 = vsel %vm146, %v342, 0
    %347 = vmatpush.xpose.msra.mxu0 0.0
    %348 = vmatpush.xpose.msra.mxu0 0.0
    %349 = vmatpush.xpose.msra.mxu0 0.0
    %350 = vmatpush.xpose.msra.mxu0 0.0
    %351 = vmatpush.xpose.msra.mxu0 0.0
    %352 = vmatpush.xpose.msra.mxu0 0.0
    %353 = vmatpush.xpose.msra.mxu0 0.0
    %354 = vmatpush.xpose.msra.mxu0 0.0
    %355 = vmatpush.xpose.msra.mxu0 0.0
    %356 = vmatpush.xpose.msra.mxu0 0.0
    %357 = vmatpush.xpose.msra.mxu0 0.0
    %358 = vmatpush.xpose.msra.mxu0 0.0
    %359 = vmatpush.xpose.msra.mxu0 0.0
    %360 = vmatpush.xpose.msra.mxu0 0.0
    %361 = vmatpush.xpose.msra.mxu0 0.0
    %362 = vmatpush.xpose.msra.mxu0 %v345
    %363 = vmatmul.f32.gmra.mxu0 %v343
    %v364 = vpop.f32.mrf.mxu0
    %v365 = vadd.f32 0.0, %v364
    %366 = vdwg.mxu0
    %v367 = vperm.slane %v169, 0
    %v368 = vlaneseq
    %v369 = vshrl.u32 %v368, 7
    %371 = vset.pattern.permute.xlu0 %v369
    %372 = vperm.xlu0 %371, %v367
    %v373 = vpop.permute.xlu0 %372
    %v374 = vperm.slane %v169, 1
    %v375 = vlaneseq
    %v376 = vshrl.u32 %v375, 7
    %378 = vset.pattern.permute.xlu0 %v376
    %379 = vperm.xlu0 %378, %v374
    %v380 = vpop.permute.xlu0 %379
    %v381 = vperm.slane %v169, 2
    %v382 = vlaneseq
    %v383 = vshrl.u32 %v382, 7
    %385 = vset.pattern.permute.xlu0 %v383
    %386 = vperm.xlu0 %385, %v381
    %v387 = vpop.permute.xlu0 %386
    %v388 = vperm.slane %v169, 3
    %v389 = vlaneseq
    %v390 = vshrl.u32 %v389, 7
    %392 = vset.pattern.permute.xlu0 %v390
    %393 = vperm.xlu0 %392, %v388
    %v394 = vpop.permute.xlu0 %393
    %v395 = vperm.slane %v169, 4
    %v396 = vlaneseq
    %v397 = vshrl.u32 %v396, 7
    %399 = vset.pattern.permute.xlu0 %v397
    %400 = vperm.xlu0 %399, %v395
    %v401 = vpop.permute.xlu0 %400
    %v402 = vperm.slane %v169, 5
    %v403 = vlaneseq
    %v404 = vshrl.u32 %v403, 7
    %406 = vset.pattern.permute.xlu0 %v404
    %407 = vperm.xlu0 %406, %v402
    %v408 = vpop.permute.xlu0 %407
    %v409 = vperm.slane %v169, 6
    %v410 = vlaneseq
    %v411 = vshrl.u32 %v410, 7
    %413 = vset.pattern.permute.xlu0 %v411
    %414 = vperm.xlu0 %413, %v409
    %v415 = vpop.permute.xlu0 %414
    %v416 = vperm.slane %v169, 7
    %v417 = vlaneseq
    %v418 = vshrl.u32 %v417, 7
    %420 = vset.pattern.permute.xlu0 %v418
    %421 = vperm.xlu0 %420, %v416
    %v422 = vpop.permute.xlu0 %421
    %v423 = vperm.slane %v197, 0
    %v424 = vlaneseq
    %v425 = vshrl.u32 %v424, 7
    %427 = vset.pattern.permute.xlu0 %v425
    %428 = vperm.xlu0 %427, %v423
    %v429 = vpop.permute.xlu0 %428
    %v430 = vperm.slane %v197, 1
    %v431 = vlaneseq
    %v432 = vshrl.u32 %v431, 7
    %434 = vset.pattern.permute.xlu0 %v432
    %435 = vperm.xlu0 %434, %v430
    %v436 = vpop.permute.xlu0 %435
    %v437 = vperm.slane %v197, 2
    %v438 = vlaneseq
    %v439 = vshrl.u32 %v438, 7
    %441 = vset.pattern.permute.xlu0 %v439
    %442 = vperm.xlu0 %441, %v437
    %v443 = vpop.permute.xlu0 %442
    %v444 = vperm.slane %v197, 3
    %v445 = vlaneseq
    %v446 = vshrl.u32 %v445, 7
    %448 = vset.pattern.permute.xlu0 %v446
    %449 = vperm.xlu0 %448, %v444
    %v450 = vpop.permute.xlu0 %449
    %v451 = vperm.slane %v197, 4
    %v452 = vlaneseq
    %v453 = vshrl.u32 %v452, 7
    %455 = vset.pattern.permute.xlu0 %v453
    %456 = vperm.xlu0 %455, %v451
    %v457 = vpop.permute.xlu0 %456
    %v458 = vperm.slane %v197, 5
    %v459 = vlaneseq
    %v460 = vshrl.u32 %v459, 7
    %462 = vset.pattern.permute.xlu0 %v460
    %463 = vperm.xlu0 %462, %v458
    %v464 = vpop.permute.xlu0 %463
    %v465 = vperm.slane %v197, 6
    %v466 = vlaneseq
    %v467 = vshrl.u32 %v466, 7
    %469 = vset.pattern.permute.xlu0 %v467
    %470 = vperm.xlu0 %469, %v465
    %v471 = vpop.permute.xlu0 %470
    %v472 = vperm.slane %v197, 7
    %v473 = vlaneseq
    %v474 = vshrl.u32 %v473, 7
    %476 = vset.pattern.permute.xlu0 %v474
    %477 = vperm.xlu0 %476, %v472
    %v478 = vpop.permute.xlu0 %477
    %v479 = vperm.slane %v225, 0
    %v480 = vlaneseq
    %v481 = vshrl.u32 %v480, 7
    %483 = vset.pattern.permute.xlu0 %v481
    %484 = vperm.xlu0 %483, %v479
    %v485 = vpop.permute.xlu0 %484
    %v486 = vperm.slane %v225, 1
    %v487 = vlaneseq
    %v488 = vshrl.u32 %v487, 7
    %490 = vset.pattern.permute.xlu0 %v488
    %491 = vperm.xlu0 %490, %v486
    %v492 = vpop.permute.xlu0 %491
    %v493 = vperm.slane %v225, 2
    %v494 = vlaneseq
    %v495 = vshrl.u32 %v494, 7
    %497 = vset.pattern.permute.xlu0 %v495
    %498 = vperm.xlu0 %497, %v493
    %v499 = vpop.permute.xlu0 %498
    %v500 = vperm.slane %v225, 3
    %v501 = vlaneseq
    %v502 = vshrl.u32 %v501, 7
    %504 = vset.pattern.permute.xlu0 %v502
    %505 = vperm.xlu0 %504, %v500
    %v506 = vpop.permute.xlu0 %505
    %v507 = vperm.slane %v225, 4
    %v508 = vlaneseq
    %v509 = vshrl.u32 %v508, 7
    %511 = vset.pattern.permute.xlu0 %v509
    %512 = vperm.xlu0 %511, %v507
    %v513 = vpop.permute.xlu0 %512
    %v514 = vperm.slane %v225, 5
    %v515 = vlaneseq
    %v516 = vshrl.u32 %v515, 7
    %518 = vset.pattern.permute.xlu0 %v516
    %519 = vperm.xlu0 %518, %v514
    %v520 = vpop.permute.xlu0 %519
    %v521 = vperm.slane %v225, 6
    %v522 = vlaneseq
    %v523 = vshrl.u32 %v522, 7
    %525 = vset.pattern.permute.xlu0 %v523
    %526 = vperm.xlu0 %525, %v521
    %v527 = vpop.permute.xlu0 %526
    %v528 = vperm.slane %v225, 7
    %v529 = vlaneseq
    %v530 = vshrl.u32 %v529, 7
    %532 = vset.pattern.permute.xlu0 %v530
    %533 = vperm.xlu0 %532, %v528
    %v534 = vpop.permute.xlu0 %533
    %v535 = vperm.slane %v253, 0
    %v536 = vlaneseq
    %v537 = vshrl.u32 %v536, 7
    %539 = vset.pattern.permute.xlu0 %v537
    %540 = vperm.xlu0 %539, %v535
    %v541 = vpop.permute.xlu0 %540
    %v542 = vperm.slane %v253, 1
    %v543 = vlaneseq
    %v544 = vshrl.u32 %v543, 7
    %546 = vset.pattern.permute.xlu0 %v544
    %547 = vperm.xlu0 %546, %v542
    %v548 = vpop.permute.xlu0 %547
    %v549 = vperm.slane %v253, 2
    %v550 = vlaneseq
    %v551 = vshrl.u32 %v550, 7
    %553 = vset.pattern.permute.xlu0 %v551
    %554 = vperm.xlu0 %553, %v549
    %v555 = vpop.permute.xlu0 %554
    %v556 = vperm.slane %v253, 3
    %v557 = vlaneseq
    %v558 = vshrl.u32 %v557, 7
    %560 = vset.pattern.permute.xlu0 %v558
    %561 = vperm.xlu0 %560, %v556
    %v562 = vpop.permute.xlu0 %561
    %v563 = vperm.slane %v253, 4
    %v564 = vlaneseq
    %v565 = vshrl.u32 %v564, 7
    %567 = vset.pattern.permute.xlu0 %v565
    %568 = vperm.xlu0 %567, %v563
    %v569 = vpop.permute.xlu0 %568
    %v570 = vperm.slane %v253, 5
    %v571 = vlaneseq
    %v572 = vshrl.u32 %v571, 7
    %574 = vset.pattern.permute.xlu0 %v572
    %575 = vperm.xlu0 %574, %v570
    %v576 = vpop.permute.xlu0 %575
    %v577 = vperm.slane %v253, 6
    %v578 = vlaneseq
    %v579 = vshrl.u32 %v578, 7
    %581 = vset.pattern.permute.xlu0 %v579
    %582 = vperm.xlu0 %581, %v577
    %v583 = vpop.permute.xlu0 %582
    %v584 = vperm.slane %v253, 7
    %v585 = vlaneseq
    %v586 = vshrl.u32 %v585, 7
    %588 = vset.pattern.permute.xlu0 %v586
    %589 = vperm.xlu0 %588, %v584
    %v590 = vpop.permute.xlu0 %589
    %v591 = vperm.slane %v281, 0
    %v592 = vlaneseq
    %v593 = vshrl.u32 %v592, 7
    %595 = vset.pattern.permute.xlu0 %v593
    %596 = vperm.xlu0 %595, %v591
    %v597 = vpop.permute.xlu0 %596
    %v598 = vperm.slane %v281, 1
    %v599 = vlaneseq
    %v600 = vshrl.u32 %v599, 7
    %602 = vset.pattern.permute.xlu0 %v600
    %603 = vperm.xlu0 %602, %v598
    %v604 = vpop.permute.xlu0 %603
    %v605 = vperm.slane %v281, 2
    %v606 = vlaneseq
    %v607 = vshrl.u32 %v606, 7
    %609 = vset.pattern.permute.xlu0 %v607
    %610 = vperm.xlu0 %609, %v605
    %v611 = vpop.permute.xlu0 %610
    %v612 = vperm.slane %v281, 3
    %v613 = vlaneseq
    %v614 = vshrl.u32 %v613, 7
    %616 = vset.pattern.permute.xlu0 %v614
    %617 = vperm.xlu0 %616, %v612
    %v618 = vpop.permute.xlu0 %617
    %v619 = vperm.slane %v281, 4
    %v620 = vlaneseq
    %v621 = vshrl.u32 %v620, 7
    %623 = vset.pattern.permute.xlu0 %v621
    %624 = vperm.xlu0 %623, %v619
    %v625 = vpop.permute.xlu0 %624
    %v626 = vperm.slane %v281, 5
    %v627 = vlaneseq
    %v628 = vshrl.u32 %v627, 7
    %630 = vset.pattern.permute.xlu0 %v628
    %631 = vperm.xlu0 %630, %v626
    %v632 = vpop.permute.xlu0 %631
    %v633 = vperm.slane %v281, 6
    %v634 = vlaneseq
    %v635 = vshrl.u32 %v634, 7
    %637 = vset.pattern.permute.xlu0 %v635
    %638 = vperm.xlu0 %637, %v633
    %v639 = vpop.permute.xlu0 %638
    %v640 = vperm.slane %v281, 7
    %v641 = vlaneseq
    %v642 = vshrl.u32 %v641, 7
    %644 = vset.pattern.permute.xlu0 %v642
    %645 = vperm.xlu0 %644, %v640
    %v646 = vpop.permute.xlu0 %645
    %v647 = vperm.slane %v309, 0
    %v648 = vlaneseq
    %v649 = vshrl.u32 %v648, 7
    %651 = vset.pattern.permute.xlu0 %v649
    %652 = vperm.xlu0 %651, %v647
    %v653 = vpop.permute.xlu0 %652
    %v654 = vperm.slane %v309, 1
    %v655 = vlaneseq
    %v656 = vshrl.u32 %v655, 7
    %658 = vset.pattern.permute.xlu0 %v656
    %659 = vperm.xlu0 %658, %v654
    %v660 = vpop.permute.xlu0 %659
    %v661 = vperm.slane %v309, 2
    %v662 = vlaneseq
    %v663 = vshrl.u32 %v662, 7
    %665 = vset.pattern.permute.xlu0 %v663
    %666 = vperm.xlu0 %665, %v661
    %v667 = vpop.permute.xlu0 %666
    %v668 = vperm.slane %v309, 3
    %v669 = vlaneseq
    %v670 = vshrl.u32 %v669, 7
    %672 = vset.pattern.permute.xlu0 %v670
    %673 = vperm.xlu0 %672, %v668
    %v674 = vpop.permute.xlu0 %673
    %v675 = vperm.slane %v309, 4
    %v676 = vlaneseq
    %v677 = vshrl.u32 %v676, 7
    %679 = vset.pattern.permute.xlu0 %v677
    %680 = vperm.xlu0 %679, %v675
    %v681 = vpop.permute.xlu0 %680
    %v682 = vperm.slane %v309, 5
    %v683 = vlaneseq
    %v684 = vshrl.u32 %v683, 7
    %686 = vset.pattern.permute.xlu0 %v684
    %687 = vperm.xlu0 %686, %v682
    %v688 = vpop.permute.xlu0 %687
    %v689 = vperm.slane %v309, 6
    %v690 = vlaneseq
    %v691 = vshrl.u32 %v690, 7
    %693 = vset.pattern.permute.xlu0 %v691
    %694 = vperm.xlu0 %693, %v689
    %v695 = vpop.permute.xlu0 %694
    %v696 = vperm.slane %v309, 7
    %v697 = vlaneseq
    %v698 = vshrl.u32 %v697, 7
    %700 = vset.pattern.permute.xlu0 %v698
    %701 = vperm.xlu0 %700, %v696
    %v702 = vpop.permute.xlu0 %701
    %v703 = vperm.slane %v337, 0
    %v704 = vlaneseq
    %v705 = vshrl.u32 %v704, 7
    %707 = vset.pattern.permute.xlu0 %v705
    %708 = vperm.xlu0 %707, %v703
    %v709 = vpop.permute.xlu0 %708
    %v710 = vperm.slane %v337, 1
    %v711 = vlaneseq
    %v712 = vshrl.u32 %v711, 7
    %714 = vset.pattern.permute.xlu0 %v712
    %715 = vperm.xlu0 %714, %v710
    %v716 = vpop.permute.xlu0 %715
    %v717 = vperm.slane %v337, 2
    %v718 = vlaneseq
    %v719 = vshrl.u32 %v718, 7
    %721 = vset.pattern.permute.xlu0 %v719
    %722 = vperm.xlu0 %721, %v717
    %v723 = vpop.permute.xlu0 %722
    %v724 = vperm.slane %v337, 3
    %v725 = vlaneseq
    %v726 = vshrl.u32 %v725, 7
    %728 = vset.pattern.permute.xlu0 %v726
    %729 = vperm.xlu0 %728, %v724
    %v730 = vpop.permute.xlu0 %729
    %v731 = vperm.slane %v337, 4
    %v732 = vlaneseq
    %v733 = vshrl.u32 %v732, 7
    %735 = vset.pattern.permute.xlu0 %v733
    %736 = vperm.xlu0 %735, %v731
    %v737 = vpop.permute.xlu0 %736
    %v738 = vperm.slane %v337, 5
    %v739 = vlaneseq
    %v740 = vshrl.u32 %v739, 7
    %742 = vset.pattern.permute.xlu0 %v740
    %743 = vperm.xlu0 %742, %v738
    %v744 = vpop.permute.xlu0 %743
    %v745 = vperm.slane %v337, 6
    %v746 = vlaneseq
    %v747 = vshrl.u32 %v746, 7
    %749 = vset.pattern.permute.xlu0 %v747
    %750 = vperm.xlu0 %749, %v745
    %v751 = vpop.permute.xlu0 %750
    %v752 = vperm.slane %v337, 7
    %v753 = vlaneseq
    %v754 = vshrl.u32 %v753, 7
    %756 = vset.pattern.permute.xlu0 %v754
    %757 = vperm.xlu0 %756, %v752
    %v758 = vpop.permute.xlu0 %757
    %v759 = vperm.slane %v365, 0
    %v760 = vlaneseq
    %v761 = vshrl.u32 %v760, 7
    %763 = vset.pattern.permute.xlu0 %v761
    %764 = vperm.xlu0 %763, %v759
    %v765 = vpop.permute.xlu0 %764
    %v766 = vperm.slane %v365, 1
    %v767 = vlaneseq
    %v768 = vshrl.u32 %v767, 7
    %770 = vset.pattern.permute.xlu0 %v768
    %771 = vperm.xlu0 %770, %v766
    %v772 = vpop.permute.xlu0 %771
    %v773 = vperm.slane %v365, 2
    %v774 = vlaneseq
    %v775 = vshrl.u32 %v774, 7
    %777 = vset.pattern.permute.xlu0 %v775
    %778 = vperm.xlu0 %777, %v773
    %v779 = vpop.permute.xlu0 %778
    %v780 = vperm.slane %v365, 3
    %v781 = vlaneseq
    %v782 = vshrl.u32 %v781, 7
    %784 = vset.pattern.permute.xlu0 %v782
    %785 = vperm.xlu0 %784, %v780
    %v786 = vpop.permute.xlu0 %785
    %v787 = vperm.slane %v365, 4
    %v788 = vlaneseq
    %v789 = vshrl.u32 %v788, 7
    %791 = vset.pattern.permute.xlu0 %v789
    %792 = vperm.xlu0 %791, %v787
    %v793 = vpop.permute.xlu0 %792
    %v794 = vperm.slane %v365, 5
    %v795 = vlaneseq
    %v796 = vshrl.u32 %v795, 7
    %798 = vset.pattern.permute.xlu0 %v796
    %799 = vperm.xlu0 %798, %v794
    %v800 = vpop.permute.xlu0 %799
    %v801 = vperm.slane %v365, 6
    %v802 = vlaneseq
    %v803 = vshrl.u32 %v802, 7
    %805 = vset.pattern.permute.xlu0 %v803
    %806 = vperm.xlu0 %805, %v801
    %v807 = vpop.permute.xlu0 %806
    %v808 = vperm.slane %v365, 7
    %v809 = vlaneseq
    %v810 = vshrl.u32 %v809, 7
    %812 = vset.pattern.permute.xlu0 %v810
    %813 = vperm.xlu0 %812, %v808
    %v814 = vpop.permute.xlu0 %813
    %v823 = vrot.slane %v169, 1
    %v824 = vrot.slane %v169, 2
    %v825 = vrot.slane %v169, 3
    %v826 = vrot.slane %v169, 4
    %v827 = vrot.slane %v169, 5
    %v828 = vrot.slane %v169, 6
    %v829 = vrot.slane %v169, 7
    %v830 = vrot.slane %v197, 1
    %v831 = vrot.slane %v197, 2
    %v832 = vrot.slane %v197, 3
    %v833 = vrot.slane %v197, 4
    %v834 = vrot.slane %v197, 5
    %v835 = vrot.slane %v197, 6
    %v836 = vrot.slane %v197, 7
    %v837 = vrot.slane %v225, 1
    %v838 = vrot.slane %v225, 2
    %v839 = vrot.slane %v225, 3
    %v840 = vrot.slane %v225, 4
    %v841 = vrot.slane %v225, 5
    %v842 = vrot.slane %v225, 6
    %v843 = vrot.slane %v225, 7
    %v844 = vrot.slane %v253, 1
    %v845 = vrot.slane %v253, 2
    %v846 = vrot.slane %v253, 3
    %v847 = vrot.slane %v253, 4
    %v848 = vrot.slane %v253, 5
    %v849 = vrot.slane %v253, 6
    %v850 = vrot.slane %v253, 7
    %v851 = vrot.slane %v281, 1
    %v852 = vrot.slane %v281, 2
    %v853 = vrot.slane %v281, 3
    %v854 = vrot.slane %v281, 4
    %v855 = vrot.slane %v281, 5
    %v856 = vrot.slane %v281, 6
    %v857 = vrot.slane %v281, 7
    %v858 = vrot.slane %v309, 1
    %v859 = vrot.slane %v309, 2
    %v860 = vrot.slane %v309, 3
    %v861 = vrot.slane %v309, 4
    %v862 = vrot.slane %v309, 5
    %v863 = vrot.slane %v309, 6
    %v864 = vrot.slane %v309, 7
    %v865 = vrot.slane %v337, 1
    %v866 = vrot.slane %v337, 2
    %v867 = vrot.slane %v337, 3
    %v868 = vrot.slane %v337, 4
    %v869 = vrot.slane %v337, 5
    %v870 = vrot.slane %v337, 6
    %v871 = vrot.slane %v337, 7
    %v872 = vrot.slane %v365, 1
    %v873 = vrot.slane %v365, 2
    %v874 = vrot.slane %v365, 3
    %v875 = vrot.slane %v365, 4
    %v876 = vrot.slane %v365, 5
    %v877 = vrot.slane %v365, 6
    %v878 = vrot.slane %v365, 7
    %v879 = vlaneseq
    %v880 = vand.u32 %v879, 127
    %v881 = vlaneseq
    %v882 = vshrl.u32 %v881, 7
    %v883 = vperm.slane %v169, 0
    %v884 = vperm.slane %v823, 0
    %v885 = vperm.slane %v824, 0
    %v886 = vperm.slane %v825, 0
    %v887 = vperm.slane %v826, 0
    %v888 = vperm.slane %v827, 0
    %v889 = vperm.slane %v828, 0
    %v890 = vperm.slane %v829, 0
    %v891 = vperm.slane %v197, 0
    %v892 = vperm.slane %v830, 0
    %v893 = vperm.slane %v831, 0
    %v894 = vperm.slane %v832, 0
    %v895 = vperm.slane %v833, 0
    %v896 = vperm.slane %v834, 0
    %v897 = vperm.slane %v835, 0
    %v898 = vperm.slane %v836, 0
    %v899 = vperm.slane %v225, 0
    %v900 = vperm.slane %v837, 0
    %v901 = vperm.slane %v838, 0
    %v902 = vperm.slane %v839, 0
    %v903 = vperm.slane %v840, 0
    %v904 = vperm.slane %v841, 0
    %v905 = vperm.slane %v842, 0
    %v906 = vperm.slane %v843, 0
    %v907 = vperm.slane %v253, 0
    %v908 = vperm.slane %v844, 0
    %v909 = vperm.slane %v845, 0
    %v910 = vperm.slane %v846, 0
    %v911 = vperm.slane %v847, 0
    %v912 = vperm.slane %v848, 0
    %v913 = vperm.slane %v849, 0
    %v914 = vperm.slane %v850, 0
    %v915 = vperm.slane %v281, 0
    %v916 = vperm.slane %v851, 0
    %v917 = vperm.slane %v852, 0
    %v918 = vperm.slane %v853, 0
    %v919 = vperm.slane %v854, 0
    %v920 = vperm.slane %v855, 0
    %v921 = vperm.slane %v856, 0
    %v922 = vperm.slane %v857, 0
    %v923 = vperm.slane %v309, 0
    %v924 = vperm.slane %v858, 0
    %v925 = vperm.slane %v859, 0
    %v926 = vperm.slane %v860, 0
    %v927 = vperm.slane %v861, 0
    %v928 = vperm.slane %v862, 0
    %v929 = vperm.slane %v863, 0
    %v930 = vperm.slane %v864, 0
    %v931 = vperm.slane %v337, 0
    %v932 = vperm.slane %v865, 0
    %v933 = vperm.slane %v866, 0
    %v934 = vperm.slane %v867, 0
    %v935 = vperm.slane %v868, 0
    %v936 = vperm.slane %v869, 0
    %v937 = vperm.slane %v870, 0
    %v938 = vperm.slane %v871, 0
    %v939 = vperm.slane %v365, 0
    %v940 = vperm.slane %v872, 0
    %v941 = vperm.slane %v873, 0
    %v942 = vperm.slane %v874, 0
    %v943 = vperm.slane %v875, 0
    %v944 = vperm.slane %v876, 0
    %v945 = vperm.slane %v877, 0
    %v946 = vperm.slane %v878, 0
    %vm1011 = vcmp.gt.f32.partialorder %v883, %v373
    %vm1012 = vcmp.gt.f32.partialorder %v884, %v380
    %vm1013 = vcmp.gt.f32.partialorder %v885, %v387
    %vm1014 = vcmp.gt.f32.partialorder %v886, %v394
    %vm1015 = vcmp.gt.f32.partialorder %v887, %v401
    %vm1016 = vcmp.gt.f32.partialorder %v888, %v408
    %vm1017 = vcmp.gt.f32.partialorder %v889, %v415
    %vm1018 = vcmp.gt.f32.partialorder %v890, %v422
    %vm1019 = vcmp.gt.f32.partialorder %v891, %v429
    %vm1020 = vcmp.gt.f32.partialorder %v892, %v436
    %vm1021 = vcmp.gt.f32.partialorder %v893, %v443
    %vm1022 = vcmp.gt.f32.partialorder %v894, %v450
    %vm1023 = vcmp.gt.f32.partialorder %v895, %v457
    %vm1024 = vcmp.gt.f32.partialorder %v896, %v464
    %vm1025 = vcmp.gt.f32.partialorder %v897, %v471
    %vm1026 = vcmp.gt.f32.partialorder %v898, %v478
    %vm1027 = vcmp.gt.f32.partialorder %v899, %v485
    %vm1028 = vcmp.gt.f32.partialorder %v900, %v492
    %vm1029 = vcmp.gt.f32.partialorder %v901, %v499
    %vm1030 = vcmp.gt.f32.partialorder %v902, %v506
    %vm1031 = vcmp.gt.f32.partialorder %v903, %v513
    %vm1032 = vcmp.gt.f32.partialorder %v904, %v520
    %vm1033 = vcmp.gt.f32.partialorder %v905, %v527
    %vm1034 = vcmp.gt.f32.partialorder %v906, %v534
    %vm1035 = vcmp.gt.f32.partialorder %v907, %v541
    %vm1036 = vcmp.gt.f32.partialorder %v908, %v548
    %vm1037 = vcmp.gt.f32.partialorder %v909, %v555
    %vm1038 = vcmp.gt.f32.partialorder %v910, %v562
    %vm1039 = vcmp.gt.f32.partialorder %v911, %v569
    %vm1040 = vcmp.gt.f32.partialorder %v912, %v576
    %vm1041 = vcmp.gt.f32.partialorder %v913, %v583
    %vm1042 = vcmp.gt.f32.partialorder %v914, %v590
    %vm1043 = vcmp.gt.f32.partialorder %v915, %v597
    %vm1044 = vcmp.gt.f32.partialorder %v916, %v604
    %vm1045 = vcmp.gt.f32.partialorder %v917, %v611
    %vm1046 = vcmp.gt.f32.partialorder %v918, %v618
    %vm1047 = vcmp.gt.f32.partialorder %v919, %v625
    %vm1048 = vcmp.gt.f32.partialorder %v920, %v632
    %vm1049 = vcmp.gt.f32.partialorder %v921, %v639
    %vm1050 = vcmp.gt.f32.partialorder %v922, %v646
    %vm1051 = vcmp.gt.f32.partialorder %v923, %v653
    %vm1052 = vcmp.gt.f32.partialorder %v924, %v660
    %vm1053 = vcmp.gt.f32.partialorder %v925, %v667
    %vm1054 = vcmp.gt.f32.partialorder %v926, %v674
    %vm1055 = vcmp.gt.f32.partialorder %v927, %v681
    %vm1056 = vcmp.gt.f32.partialorder %v928, %v688
    %vm1057 = vcmp.gt.f32.partialorder %v929, %v695
    %vm1058 = vcmp.gt.f32.partialorder %v930, %v702
    %vm1059 = vcmp.gt.f32.partialorder %v931, %v709
    %vm1060 = vcmp.gt.f32.partialorder %v932, %v716
    %vm1061 = vcmp.gt.f32.partialorder %v933, %v723
    %vm1062 = vcmp.gt.f32.partialorder %v934, %v730
    %vm1063 = vcmp.gt.f32.partialorder %v935, %v737
    %vm1064 = vcmp.gt.f32.partialorder %v936, %v744
    %vm1065 = vcmp.gt.f32.partialorder %v937, %v751
    %vm1066 = vcmp.gt.f32.partialorder %v938, %v758
    %vm1067 = vcmp.gt.f32.partialorder %v939, %v765
    %vm1068 = vcmp.gt.f32.partialorder %v940, %v772
    %vm1069 = vcmp.gt.f32.partialorder %v941, %v779
    %vm1070 = vcmp.gt.f32.partialorder %v942, %v786
    %vm1071 = vcmp.gt.f32.partialorder %v943, %v793
    %vm1072 = vcmp.gt.f32.partialorder %v944, %v800
    %vm1073 = vcmp.gt.f32.partialorder %v945, %v807
    %vm1074 = vcmp.gt.f32.partialorder %v946, %v814
    %vm1075 = vcmp.eq.f32.partialorder %v883, %v373
    %vm1076 = vcmp.eq.f32.partialorder %v884, %v380
    %vm1077 = vcmp.eq.f32.partialorder %v885, %v387
    %vm1078 = vcmp.eq.f32.partialorder %v886, %v394
    %vm1079 = vcmp.eq.f32.partialorder %v887, %v401
    %vm1080 = vcmp.eq.f32.partialorder %v888, %v408
    %vm1081 = vcmp.eq.f32.partialorder %v889, %v415
    %vm1082 = vcmp.eq.f32.partialorder %v890, %v422
    %vm1083 = vcmp.eq.f32.partialorder %v891, %v429
    %vm1084 = vcmp.eq.f32.partialorder %v892, %v436
    %vm1085 = vcmp.eq.f32.partialorder %v893, %v443
    %vm1086 = vcmp.eq.f32.partialorder %v894, %v450
    %vm1087 = vcmp.eq.f32.partialorder %v895, %v457
    %vm1088 = vcmp.eq.f32.partialorder %v896, %v464
    %vm1089 = vcmp.eq.f32.partialorder %v897, %v471
    %vm1090 = vcmp.eq.f32.partialorder %v898, %v478
    %vm1091 = vcmp.eq.f32.partialorder %v899, %v485
    %vm1092 = vcmp.eq.f32.partialorder %v900, %v492
    %vm1093 = vcmp.eq.f32.partialorder %v901, %v499
    %vm1094 = vcmp.eq.f32.partialorder %v902, %v506
    %vm1095 = vcmp.eq.f32.partialorder %v903, %v513
    %vm1096 = vcmp.eq.f32.partialorder %v904, %v520
    %vm1097 = vcmp.eq.f32.partialorder %v905, %v527
    %vm1098 = vcmp.eq.f32.partialorder %v906, %v534
    %vm1099 = vcmp.eq.f32.partialorder %v907, %v541
    %vm1100 = vcmp.eq.f32.partialorder %v908, %v548
    %vm1101 = vcmp.eq.f32.partialorder %v909, %v555
    %vm1102 = vcmp.eq.f32.partialorder %v910, %v562
    %vm1103 = vcmp.eq.f32.partialorder %v911, %v569
    %vm1104 = vcmp.eq.f32.partialorder %v912, %v576
    %vm1105 = vcmp.eq.f32.partialorder %v913, %v583
    %vm1106 = vcmp.eq.f32.partialorder %v914, %v590
    %vm1107 = vcmp.eq.f32.partialorder %v915, %v597
    %vm1108 = vcmp.eq.f32.partialorder %v916, %v604
    %vm1109 = vcmp.eq.f32.partialorder %v917, %v611
    %vm1110 = vcmp.eq.f32.partialorder %v918, %v618
    %vm1111 = vcmp.eq.f32.partialorder %v919, %v625
    %vm1112 = vcmp.eq.f32.partialorder %v920, %v632
    %vm1113 = vcmp.eq.f32.partialorder %v921, %v639
    %vm1114 = vcmp.eq.f32.partialorder %v922, %v646
    %vm1115 = vcmp.eq.f32.partialorder %v923, %v653
    %vm1116 = vcmp.eq.f32.partialorder %v924, %v660
    %vm1117 = vcmp.eq.f32.partialorder %v925, %v667
    %vm1118 = vcmp.eq.f32.partialorder %v926, %v674
    %vm1119 = vcmp.eq.f32.partialorder %v927, %v681
    %vm1120 = vcmp.eq.f32.partialorder %v928, %v688
    %vm1121 = vcmp.eq.f32.partialorder %v929, %v695
    %vm1122 = vcmp.eq.f32.partialorder %v930, %v702
    %vm1123 = vcmp.eq.f32.partialorder %v931, %v709
    %vm1124 = vcmp.eq.f32.partialorder %v932, %v716
    %vm1125 = vcmp.eq.f32.partialorder %v933, %v723
    %vm1126 = vcmp.eq.f32.partialorder %v934, %v730
    %vm1127 = vcmp.eq.f32.partialorder %v935, %v737
    %vm1128 = vcmp.eq.f32.partialorder %v936, %v744
    %vm1129 = vcmp.eq.f32.partialorder %v937, %v751
    %vm1130 = vcmp.eq.f32.partialorder %v938, %v758
    %vm1131 = vcmp.eq.f32.partialorder %v939, %v765
    %vm1132 = vcmp.eq.f32.partialorder %v940, %v772
    %vm1133 = vcmp.eq.f32.partialorder %v941, %v779
    %vm1134 = vcmp.eq.f32.partialorder %v942, %v786
    %vm1135 = vcmp.eq.f32.partialorder %v943, %v793
    %vm1136 = vcmp.eq.f32.partialorder %v944, %v800
    %vm1137 = vcmp.eq.f32.partialorder %v945, %v807
    %vm1138 = vcmp.eq.f32.partialorder %v946, %v814
    %vm1139 = vcmp.lt.s32.totalorder %v880, %v882
    %v1140 = vsel %vm1139, 1, 0
    %vm1141 = vcmp.eq.s32.totalorder %v1140, 1
    %vm1142 = vmand %vm1075, %vm1141
    %vm1143 = vmand %vm1076, %vm1141
    %vm1144 = vmand %vm1077, %vm1141
    %vm1145 = vmand %vm1078, %vm1141
    %vm1146 = vmand %vm1079, %vm1141
    %vm1147 = vmand %vm1080, %vm1141
    %vm1148 = vmand %vm1081, %vm1141
    %vm1149 = vmand %vm1082, %vm1141
    %vm1150 = vmand %vm1083, %vm1141
    %vm1151 = vmand %vm1084, %vm1141
    %vm1152 = vmand %vm1085, %vm1141
    %vm1153 = vmand %vm1086, %vm1141
    %vm1154 = vmand %vm1087, %vm1141
    %vm1155 = vmand %vm1088, %vm1141
    %vm1156 = vmand %vm1089, %vm1141
    %vm1157 = vmand %vm1090, %vm1141
    %vm1158 = vmand %vm1091, %vm1141
    %vm1159 = vmand %vm1092, %vm1141
    %vm1160 = vmand %vm1093, %vm1141
    %vm1161 = vmand %vm1094, %vm1141
    %vm1162 = vmand %vm1095, %vm1141
    %vm1163 = vmand %vm1096, %vm1141
    %vm1164 = vmand %vm1097, %vm1141
    %vm1165 = vmand %vm1098, %vm1141
    %vm1166 = vmand %vm1099, %vm1141
    %vm1167 = vmand %vm1100, %vm1141
    %vm1168 = vmand %vm1101, %vm1141
    %vm1169 = vmand %vm1102, %vm1141
    %vm1170 = vmand %vm1103, %vm1141
    %vm1171 = vmand %vm1104, %vm1141
    %vm1172 = vmand %vm1105, %vm1141
    %vm1173 = vmand %vm1106, %vm1141
    %vm1174 = vmand %vm1107, %vm1141
    %vm1175 = vmand %vm1108, %vm1141
    %vm1176 = vmand %vm1109, %vm1141
    %vm1177 = vmand %vm1110, %vm1141
    %vm1178 = vmand %vm1111, %vm1141
    %vm1179 = vmand %vm1112, %vm1141
    %vm1180 = vmand %vm1113, %vm1141
    %vm1181 = vmand %vm1114, %vm1141
    %vm1182 = vmand %vm1115, %vm1141
    %vm1183 = vmand %vm1116, %vm1141
    %vm1184 = vmand %vm1117, %vm1141
    %vm1185 = vmand %vm1118, %vm1141
    %vm1186 = vmand %vm1119, %vm1141
    %vm1187 = vmand %vm1120, %vm1141
    %vm1188 = vmand %vm1121, %vm1141
    %vm1189 = vmand %vm1122, %vm1141
    %vm1190 = vmand %vm1123, %vm1141
    %vm1191 = vmand %vm1124, %vm1141
    %vm1192 = vmand %vm1125, %vm1141
    %vm1193 = vmand %vm1126, %vm1141
    %vm1194 = vmand %vm1127, %vm1141
    %vm1195 = vmand %vm1128, %vm1141
    %vm1196 = vmand %vm1129, %vm1141
    %vm1197 = vmand %vm1130, %vm1141
    %vm1198 = vmand %vm1131, %vm1141
    %vm1199 = vmand %vm1132, %vm1141
    %vm1200 = vmand %vm1133, %vm1141
    %vm1201 = vmand %vm1134, %vm1141
    %vm1202 = vmand %vm1135, %vm1141
    %vm1203 = vmand %vm1136, %vm1141
    %vm1204 = vmand %vm1137, %vm1141
    %vm1205 = vmand %vm1138, %vm1141
    %vm1206 = vmor %vm1011, %vm1142
    %vm1207 = vmor %vm1012, %vm1143
    %vm1208 = vmor %vm1013, %vm1144
    %vm1209 = vmor %vm1014, %vm1145
    %vm1210 = vmor %vm1015, %vm1146
    %vm1211 = vmor %vm1016, %vm1147
    %vm1212 = vmor %vm1017, %vm1148
    %vm1213 = vmor %vm1018, %vm1149
    %vm1214 = vmor %vm1019, %vm1150
    %vm1215 = vmor %vm1020, %vm1151
    %vm1216 = vmor %vm1021, %vm1152
    %vm1217 = vmor %vm1022, %vm1153
    %vm1218 = vmor %vm1023, %vm1154
    %vm1219 = vmor %vm1024, %vm1155
    %vm1220 = vmor %vm1025, %vm1156
    %vm1221 = vmor %vm1026, %vm1157
    %vm1222 = vmor %vm1027, %vm1158
    %vm1223 = vmor %vm1028, %vm1159
    %vm1224 = vmor %vm1029, %vm1160
    %vm1225 = vmor %vm1030, %vm1161
    %vm1226 = vmor %vm1031, %vm1162
    %vm1227 = vmor %vm1032, %vm1163
    %vm1228 = vmor %vm1033, %vm1164
    %vm1229 = vmor %vm1034, %vm1165
    %vm1230 = vmor %vm1035, %vm1166
    %vm1231 = vmor %vm1036, %vm1167
    %vm1232 = vmor %vm1037, %vm1168
    %vm1233 = vmor %vm1038, %vm1169
    %vm1234 = vmor %vm1039, %vm1170
    %vm1235 = vmor %vm1040, %vm1171
    %vm1236 = vmor %vm1041, %vm1172
    %vm1237 = vmor %vm1042, %vm1173
    %vm1238 = vmor %vm1043, %vm1174
    %vm1239 = vmor %vm1044, %vm1175
    %vm1240 = vmor %vm1045, %vm1176
    %vm1241 = vmor %vm1046, %vm1177
    %vm1242 = vmor %vm1047, %vm1178
    %vm1243 = vmor %vm1048, %vm1179
    %vm1244 = vmor %vm1049, %vm1180
    %vm1245 = vmor %vm1050, %vm1181
    %vm1246 = vmor %vm1051, %vm1182
    %vm1247 = vmor %vm1052, %vm1183
    %vm1248 = vmor %vm1053, %vm1184
    %vm1249 = vmor %vm1054, %vm1185
    %vm1250 = vmor %vm1055, %vm1186
    %vm1251 = vmor %vm1056, %vm1187
    %vm1252 = vmor %vm1057, %vm1188
    %vm1253 = vmor %vm1058, %vm1189
    %vm1254 = vmor %vm1059, %vm1190
    %vm1255 = vmor %vm1060, %vm1191
    %vm1256 = vmor %vm1061, %vm1192
    %vm1257 = vmor %vm1062, %vm1193
    %vm1258 = vmor %vm1063, %vm1194
    %vm1259 = vmor %vm1064, %vm1195
    %vm1260 = vmor %vm1065, %vm1196
    %vm1261 = vmor %vm1066, %vm1197
    %vm1262 = vmor %vm1067, %vm1198
    %vm1263 = vmor %vm1068, %vm1199
    %vm1264 = vmor %vm1069, %vm1200
    %vm1265 = vmor %vm1070, %vm1201
    %vm1266 = vmor %vm1071, %vm1202
    %vm1267 = vmor %vm1072, %vm1203
    %vm1268 = vmor %vm1073, %vm1204
    %vm1269 = vmor %vm1074, %vm1205
    %v1270 = vsel %vm1206, 1, 0
    %v1271 = vsel %vm1207, 1, 0
    %v1272 = vsel %vm1208, 1, 0
    %v1273 = vsel %vm1209, 1, 0
    %v1274 = vsel %vm1210, 1, 0
    %v1275 = vsel %vm1211, 1, 0
    %v1276 = vsel %vm1212, 1, 0
    %v1277 = vsel %vm1213, 1, 0
    %v1278 = vsel %vm1214, 1, 0
    %v1279 = vsel %vm1215, 1, 0
    %v1280 = vsel %vm1216, 1, 0
    %v1281 = vsel %vm1217, 1, 0
    %v1282 = vsel %vm1218, 1, 0
    %v1283 = vsel %vm1219, 1, 0
    %v1284 = vsel %vm1220, 1, 0
    %v1285 = vsel %vm1221, 1, 0
    %v1286 = vsel %vm1222, 1, 0
    %v1287 = vsel %vm1223, 1, 0
    %v1288 = vsel %vm1224, 1, 0
    %v1289 = vsel %vm1225, 1, 0
    %v1290 = vsel %vm1226, 1, 0
    %v1291 = vsel %vm1227, 1, 0
    %v1292 = vsel %vm1228, 1, 0
    %v1293 = vsel %vm1229, 1, 0
    %v1294 = vsel %vm1230, 1, 0
    %v1295 = vsel %vm1231, 1, 0
    %v1296 = vsel %vm1232, 1, 0
    %v1297 = vsel %vm1233, 1, 0
    %v1298 = vsel %vm1234, 1, 0
    %v1299 = vsel %vm1235, 1, 0
    %v1300 = vsel %vm1236, 1, 0
    %v1301 = vsel %vm1237, 1, 0
    %v1302 = vsel %vm1238, 1, 0
    %v1303 = vsel %vm1239, 1, 0
    %v1304 = vsel %vm1240, 1, 0
    %v1305 = vsel %vm1241, 1, 0
    %v1306 = vsel %vm1242, 1, 0
    %v1307 = vsel %vm1243, 1, 0
    %v1308 = vsel %vm1244, 1, 0
    %v1309 = vsel %vm1245, 1, 0
    %v1310 = vsel %vm1246, 1, 0
    %v1311 = vsel %vm1247, 1, 0
    %v1312 = vsel %vm1248, 1, 0
    %v1313 = vsel %vm1249, 1, 0
    %v1314 = vsel %vm1250, 1, 0
    %v1315 = vsel %vm1251, 1, 0
    %v1316 = vsel %vm1252, 1, 0
    %v1317 = vsel %vm1253, 1, 0
    %v1318 = vsel %vm1254, 1, 0
    %v1319 = vsel %vm1255, 1, 0
    %v1320 = vsel %vm1256, 1, 0
    %v1321 = vsel %vm1257, 1, 0
    %v1322 = vsel %vm1258, 1, 0
    %v1323 = vsel %vm1259, 1, 0
    %v1324 = vsel %vm1260, 1, 0
    %v1325 = vsel %vm1261, 1, 0
    %v1326 = vsel %vm1262, 1, 0
    %v1327 = vsel %vm1263, 1, 0
    %v1328 = vsel %vm1264, 1, 0
    %v1329 = vsel %vm1265, 1, 0
    %v1330 = vsel %vm1266, 1, 0
    %v1331 = vsel %vm1267, 1, 0
    %v1332 = vsel %vm1268, 1, 0
    %v1333 = vsel %vm1269, 1, 0
    %v1334 = vcvt.s32.f32 %v1270
    %v1335 = vcvt.s32.f32 %v1271
    %v1336 = vcvt.s32.f32 %v1272
    %v1337 = vcvt.s32.f32 %v1273
    %v1338 = vcvt.s32.f32 %v1274
    %v1339 = vcvt.s32.f32 %v1275
    %v1340 = vcvt.s32.f32 %v1276
    %v1341 = vcvt.s32.f32 %v1277
    %v1342 = vcvt.s32.f32 %v1278
    %v1343 = vcvt.s32.f32 %v1279
    %v1344 = vcvt.s32.f32 %v1280
    %v1345 = vcvt.s32.f32 %v1281
    %v1346 = vcvt.s32.f32 %v1282
    %v1347 = vcvt.s32.f32 %v1283
    %v1348 = vcvt.s32.f32 %v1284
    %v1349 = vcvt.s32.f32 %v1285
    %v1350 = vcvt.s32.f32 %v1286
    %v1351 = vcvt.s32.f32 %v1287
    %v1352 = vcvt.s32.f32 %v1288
    %v1353 = vcvt.s32.f32 %v1289
    %v1354 = vcvt.s32.f32 %v1290
    %v1355 = vcvt.s32.f32 %v1291
    %v1356 = vcvt.s32.f32 %v1292
    %v1357 = vcvt.s32.f32 %v1293
    %v1358 = vcvt.s32.f32 %v1294
    %v1359 = vcvt.s32.f32 %v1295
    %v1360 = vcvt.s32.f32 %v1296
    %v1361 = vcvt.s32.f32 %v1297
    %v1362 = vcvt.s32.f32 %v1298
    %v1363 = vcvt.s32.f32 %v1299
    %v1364 = vcvt.s32.f32 %v1300
    %v1365 = vcvt.s32.f32 %v1301
    %v1366 = vcvt.s32.f32 %v1302
    %v1367 = vcvt.s32.f32 %v1303
    %v1368 = vcvt.s32.f32 %v1304
    %v1369 = vcvt.s32.f32 %v1305
    %v1370 = vcvt.s32.f32 %v1306
    %v1371 = vcvt.s32.f32 %v1307
    %v1372 = vcvt.s32.f32 %v1308
    %v1373 = vcvt.s32.f32 %v1309
    %v1374 = vcvt.s32.f32 %v1310
    %v1375 = vcvt.s32.f32 %v1311
    %v1376 = vcvt.s32.f32 %v1312
    %v1377 = vcvt.s32.f32 %v1313
    %v1378 = vcvt.s32.f32 %v1314
    %v1379 = vcvt.s32.f32 %v1315
    %v1380 = vcvt.s32.f32 %v1316
    %v1381 = vcvt.s32.f32 %v1317
    %v1382 = vcvt.s32.f32 %v1318
    %v1383 = vcvt.s32.f32 %v1319
    %v1384 = vcvt.s32.f32 %v1320
    %v1385 = vcvt.s32.f32 %v1321
    %v1386 = vcvt.s32.f32 %v1322
    %v1387 = vcvt.s32.f32 %v1323
    %v1388 = vcvt.s32.f32 %v1324
    %v1389 = vcvt.s32.f32 %v1325
    %v1390 = vcvt.s32.f32 %v1326
    %v1391 = vcvt.s32.f32 %v1327
    %v1392 = vcvt.s32.f32 %v1328
    %v1393 = vcvt.s32.f32 %v1329
    %v1394 = vcvt.s32.f32 %v1330
    %v1395 = vcvt.s32.f32 %v1331
    %v1396 = vcvt.s32.f32 %v1332
    %v1397 = vcvt.s32.f32 %v1333
    %v1398 = vsel %vm146, %v1334, 0.0
    %1399 = vadd.xlane.f32.xlu0 %v1398
    %v1400 = vpop.xlane.xlu0 %1399
    %v1401 = vsel %vm146, %v1335, 0.0
    %1402 = vadd.xlane.f32.xlu0 %v1401
    %v1403 = vpop.xlane.xlu0 %1402
    %v1404 = vsel %vm146, %v1336, 0.0
    %1405 = vadd.xlane.f32.xlu0 %v1404
    %v1406 = vpop.xlane.xlu0 %1405
    %v1407 = vsel %vm146, %v1337, 0.0
    %1408 = vadd.xlane.f32.xlu0 %v1407
    %v1409 = vpop.xlane.xlu0 %1408
    %v1410 = vsel %vm146, %v1338, 0.0
    %1411 = vadd.xlane.f32.xlu0 %v1410
    %v1412 = vpop.xlane.xlu0 %1411
    %v1413 = vsel %vm146, %v1339, 0.0
    %1414 = vadd.xlane.f32.xlu0 %v1413
    %v1415 = vpop.xlane.xlu0 %1414
    %v1416 = vsel %vm146, %v1340, 0.0
    %1417 = vadd.xlane.f32.xlu0 %v1416
    %v1418 = vpop.xlane.xlu0 %1417
    %v1419 = vsel %vm146, %v1341, 0.0
    %1420 = vadd.xlane.f32.xlu0 %v1419
    %v1421 = vpop.xlane.xlu0 %1420
    %v1422 = vsel %vm146, %v1342, 0.0
    %1423 = vadd.xlane.f32.xlu0 %v1422
    %v1424 = vpop.xlane.xlu0 %1423
    %v1425 = vsel %vm146, %v1343, 0.0
    %1426 = vadd.xlane.f32.xlu0 %v1425
    %v1427 = vpop.xlane.xlu0 %1426
    %v1428 = vsel %vm146, %v1344, 0.0
    %1429 = vadd.xlane.f32.xlu0 %v1428
    %v1430 = vpop.xlane.xlu0 %1429
    %v1431 = vsel %vm146, %v1345, 0.0
    %1432 = vadd.xlane.f32.xlu0 %v1431
    %v1433 = vpop.xlane.xlu0 %1432
    %v1434 = vsel %vm146, %v1346, 0.0
    %1435 = vadd.xlane.f32.xlu0 %v1434
    %v1436 = vpop.xlane.xlu0 %1435
    %v1437 = vsel %vm146, %v1347, 0.0
    %1438 = vadd.xlane.f32.xlu0 %v1437
    %v1439 = vpop.xlane.xlu0 %1438
    %v1440 = vsel %vm146, %v1348, 0.0
    %1441 = vadd.xlane.f32.xlu0 %v1440
    %v1442 = vpop.xlane.xlu0 %1441
    %v1443 = vsel %vm146, %v1349, 0.0
    %1444 = vadd.xlane.f32.xlu0 %v1443
    %v1445 = vpop.xlane.xlu0 %1444
    %v1446 = vsel %vm146, %v1350, 0.0
    %1447 = vadd.xlane.f32.xlu0 %v1446
    %v1448 = vpop.xlane.xlu0 %1447
    %v1449 = vsel %vm146, %v1351, 0.0
    %1450 = vadd.xlane.f32.xlu0 %v1449
    %v1451 = vpop.xlane.xlu0 %1450
    %v1452 = vsel %vm146, %v1352, 0.0
    %1453 = vadd.xlane.f32.xlu0 %v1452
    %v1454 = vpop.xlane.xlu0 %1453
    %v1455 = vsel %vm146, %v1353, 0.0
    %1456 = vadd.xlane.f32.xlu0 %v1455
    %v1457 = vpop.xlane.xlu0 %1456
    %v1458 = vsel %vm146, %v1354, 0.0
    %1459 = vadd.xlane.f32.xlu0 %v1458
    %v1460 = vpop.xlane.xlu0 %1459
    %v1461 = vsel %vm146, %v1355, 0.0
    %1462 = vadd.xlane.f32.xlu0 %v1461
    %v1463 = vpop.xlane.xlu0 %1462
    %v1464 = vsel %vm146, %v1356, 0.0
    %1465 = vadd.xlane.f32.xlu0 %v1464
    %v1466 = vpop.xlane.xlu0 %1465
    %v1467 = vsel %vm146, %v1357, 0.0
    %1468 = vadd.xlane.f32.xlu0 %v1467
    %v1469 = vpop.xlane.xlu0 %1468
    %v1470 = vsel %vm146, %v1358, 0.0
    %1471 = vadd.xlane.f32.xlu0 %v1470
    %v1472 = vpop.xlane.xlu0 %1471
    %v1473 = vsel %vm146, %v1359, 0.0
    %1474 = vadd.xlane.f32.xlu0 %v1473
    %v1475 = vpop.xlane.xlu0 %1474
    %v1476 = vsel %vm146, %v1360, 0.0
    %1477 = vadd.xlane.f32.xlu0 %v1476
    %v1478 = vpop.xlane.xlu0 %1477
    %v1479 = vsel %vm146, %v1361, 0.0
    %1480 = vadd.xlane.f32.xlu0 %v1479
    %v1481 = vpop.xlane.xlu0 %1480
    %v1482 = vsel %vm146, %v1362, 0.0
    %1483 = vadd.xlane.f32.xlu0 %v1482
    %v1484 = vpop.xlane.xlu0 %1483
    %v1485 = vsel %vm146, %v1363, 0.0
    %1486 = vadd.xlane.f32.xlu0 %v1485
    %v1487 = vpop.xlane.xlu0 %1486
    %v1488 = vsel %vm146, %v1364, 0.0
    %1489 = vadd.xlane.f32.xlu0 %v1488
    %v1490 = vpop.xlane.xlu0 %1489
    %v1491 = vsel %vm146, %v1365, 0.0
    %1492 = vadd.xlane.f32.xlu0 %v1491
    %v1493 = vpop.xlane.xlu0 %1492
    %v1494 = vsel %vm146, %v1366, 0.0
    %1495 = vadd.xlane.f32.xlu0 %v1494
    %v1496 = vpop.xlane.xlu0 %1495
    %v1497 = vsel %vm146, %v1367, 0.0
    %1498 = vadd.xlane.f32.xlu0 %v1497
    %v1499 = vpop.xlane.xlu0 %1498
    %v1500 = vsel %vm146, %v1368, 0.0
    %1501 = vadd.xlane.f32.xlu0 %v1500
    %v1502 = vpop.xlane.xlu0 %1501
    %v1503 = vsel %vm146, %v1369, 0.0
    %1504 = vadd.xlane.f32.xlu0 %v1503
    %v1505 = vpop.xlane.xlu0 %1504
    %v1506 = vsel %vm146, %v1370, 0.0
    %1507 = vadd.xlane.f32.xlu0 %v1506
    %v1508 = vpop.xlane.xlu0 %1507
    %v1509 = vsel %vm146, %v1371, 0.0
    %1510 = vadd.xlane.f32.xlu0 %v1509
    %v1511 = vpop.xlane.xlu0 %1510
    %v1512 = vsel %vm146, %v1372, 0.0
    %1513 = vadd.xlane.f32.xlu0 %v1512
    %v1514 = vpop.xlane.xlu0 %1513
    %v1515 = vsel %vm146, %v1373, 0.0
    %1516 = vadd.xlane.f32.xlu0 %v1515
    %v1517 = vpop.xlane.xlu0 %1516
    %v1518 = vsel %vm146, %v1374, 0.0
    %1519 = vadd.xlane.f32.xlu0 %v1518
    %v1520 = vpop.xlane.xlu0 %1519
    %v1521 = vsel %vm146, %v1375, 0.0
    %1522 = vadd.xlane.f32.xlu0 %v1521
    %v1523 = vpop.xlane.xlu0 %1522
    %v1524 = vsel %vm146, %v1376, 0.0
    %1525 = vadd.xlane.f32.xlu0 %v1524
    %v1526 = vpop.xlane.xlu0 %1525
    %v1527 = vsel %vm146, %v1377, 0.0
    %1528 = vadd.xlane.f32.xlu0 %v1527
    %v1529 = vpop.xlane.xlu0 %1528
    %v1530 = vsel %vm146, %v1378, 0.0
    %1531 = vadd.xlane.f32.xlu0 %v1530
    %v1532 = vpop.xlane.xlu0 %1531
    %v1533 = vsel %vm146, %v1379, 0.0
    %1534 = vadd.xlane.f32.xlu0 %v1533
    %v1535 = vpop.xlane.xlu0 %1534
    %v1536 = vsel %vm146, %v1380, 0.0
    %1537 = vadd.xlane.f32.xlu0 %v1536
    %v1538 = vpop.xlane.xlu0 %1537
    %v1539 = vsel %vm146, %v1381, 0.0
    %1540 = vadd.xlane.f32.xlu0 %v1539
    %v1541 = vpop.xlane.xlu0 %1540
    %v1542 = vsel %vm146, %v1382, 0.0
    %1543 = vadd.xlane.f32.xlu0 %v1542
    %v1544 = vpop.xlane.xlu0 %1543
    %v1545 = vsel %vm146, %v1383, 0.0
    %1546 = vadd.xlane.f32.xlu0 %v1545
    %v1547 = vpop.xlane.xlu0 %1546
    %v1548 = vsel %vm146, %v1384, 0.0
    %1549 = vadd.xlane.f32.xlu0 %v1548
    %v1550 = vpop.xlane.xlu0 %1549
    %v1551 = vsel %vm146, %v1385, 0.0
    %1552 = vadd.xlane.f32.xlu0 %v1551
    %v1553 = vpop.xlane.xlu0 %1552
    %v1554 = vsel %vm146, %v1386, 0.0
    %1555 = vadd.xlane.f32.xlu0 %v1554
    %v1556 = vpop.xlane.xlu0 %1555
    %v1557 = vsel %vm146, %v1387, 0.0
    %1558 = vadd.xlane.f32.xlu0 %v1557
    %v1559 = vpop.xlane.xlu0 %1558
    %v1560 = vsel %vm146, %v1388, 0.0
    %1561 = vadd.xlane.f32.xlu0 %v1560
    %v1562 = vpop.xlane.xlu0 %1561
    %v1563 = vsel %vm146, %v1389, 0.0
    %1564 = vadd.xlane.f32.xlu0 %v1563
    %v1565 = vpop.xlane.xlu0 %1564
    %v1566 = vsel %vm146, %v1390, 0.0
    %1567 = vadd.xlane.f32.xlu0 %v1566
    %v1568 = vpop.xlane.xlu0 %1567
    %v1569 = vsel %vm146, %v1391, 0.0
    %1570 = vadd.xlane.f32.xlu0 %v1569
    %v1571 = vpop.xlane.xlu0 %1570
    %v1572 = vsel %vm146, %v1392, 0.0
    %1573 = vadd.xlane.f32.xlu0 %v1572
    %v1574 = vpop.xlane.xlu0 %1573
    %v1575 = vsel %vm146, %v1393, 0.0
    %1576 = vadd.xlane.f32.xlu0 %v1575
    %v1577 = vpop.xlane.xlu0 %1576
    %v1578 = vsel %vm146, %v1394, 0.0
    %1579 = vadd.xlane.f32.xlu0 %v1578
    %v1580 = vpop.xlane.xlu0 %1579
    %v1581 = vsel %vm146, %v1395, 0.0
    %1582 = vadd.xlane.f32.xlu0 %v1581
    %v1583 = vpop.xlane.xlu0 %1582
    %v1584 = vsel %vm146, %v1396, 0.0
    %1585 = vadd.xlane.f32.xlu0 %v1584
    %v1586 = vpop.xlane.xlu0 %1585
    %v1587 = vsel %vm146, %v1397, 0.0
    %1588 = vadd.xlane.f32.xlu0 %v1587
    %v1589 = vpop.xlane.xlu0 %1588
    %vm1590 = vcmp.lt.f32.partialorder %v1400, 4.0
    %vm1591 = vcmp.lt.f32.partialorder %v1403, 4.0
    %vm1592 = vcmp.lt.f32.partialorder %v1406, 4.0
    %vm1593 = vcmp.lt.f32.partialorder %v1409, 4.0
    %vm1594 = vcmp.lt.f32.partialorder %v1412, 4.0
    %vm1595 = vcmp.lt.f32.partialorder %v1415, 4.0
    %vm1596 = vcmp.lt.f32.partialorder %v1418, 4.0
    %vm1597 = vcmp.lt.f32.partialorder %v1421, 4.0
    %vm1598 = vcmp.lt.f32.partialorder %v1424, 4.0
    %vm1599 = vcmp.lt.f32.partialorder %v1427, 4.0
    %vm1600 = vcmp.lt.f32.partialorder %v1430, 4.0
    %vm1601 = vcmp.lt.f32.partialorder %v1433, 4.0
    %vm1602 = vcmp.lt.f32.partialorder %v1436, 4.0
    %vm1603 = vcmp.lt.f32.partialorder %v1439, 4.0
    %vm1604 = vcmp.lt.f32.partialorder %v1442, 4.0
    %vm1605 = vcmp.lt.f32.partialorder %v1445, 4.0
    %vm1606 = vcmp.lt.f32.partialorder %v1448, 4.0
    %vm1607 = vcmp.lt.f32.partialorder %v1451, 4.0
    %vm1608 = vcmp.lt.f32.partialorder %v1454, 4.0
    %vm1609 = vcmp.lt.f32.partialorder %v1457, 4.0
    %vm1610 = vcmp.lt.f32.partialorder %v1460, 4.0
    %vm1611 = vcmp.lt.f32.partialorder %v1463, 4.0
    %vm1612 = vcmp.lt.f32.partialorder %v1466, 4.0
    %vm1613 = vcmp.lt.f32.partialorder %v1469, 4.0
    %vm1614 = vcmp.lt.f32.partialorder %v1472, 4.0
    %vm1615 = vcmp.lt.f32.partialorder %v1475, 4.0
    %vm1616 = vcmp.lt.f32.partialorder %v1478, 4.0
    %vm1617 = vcmp.lt.f32.partialorder %v1481, 4.0
    %vm1618 = vcmp.lt.f32.partialorder %v1484, 4.0
    %vm1619 = vcmp.lt.f32.partialorder %v1487, 4.0
    %vm1620 = vcmp.lt.f32.partialorder %v1490, 4.0
    %vm1621 = vcmp.lt.f32.partialorder %v1493, 4.0
    %vm1622 = vcmp.lt.f32.partialorder %v1496, 4.0
    %vm1623 = vcmp.lt.f32.partialorder %v1499, 4.0
    %vm1624 = vcmp.lt.f32.partialorder %v1502, 4.0
    %vm1625 = vcmp.lt.f32.partialorder %v1505, 4.0
    %vm1626 = vcmp.lt.f32.partialorder %v1508, 4.0
    %vm1627 = vcmp.lt.f32.partialorder %v1511, 4.0
    %vm1628 = vcmp.lt.f32.partialorder %v1514, 4.0
    %vm1629 = vcmp.lt.f32.partialorder %v1517, 4.0
    %vm1630 = vcmp.lt.f32.partialorder %v1520, 4.0
    %vm1631 = vcmp.lt.f32.partialorder %v1523, 4.0
    %vm1632 = vcmp.lt.f32.partialorder %v1526, 4.0
    %vm1633 = vcmp.lt.f32.partialorder %v1529, 4.0
    %vm1634 = vcmp.lt.f32.partialorder %v1532, 4.0
    %vm1635 = vcmp.lt.f32.partialorder %v1535, 4.0
    %vm1636 = vcmp.lt.f32.partialorder %v1538, 4.0
    %vm1637 = vcmp.lt.f32.partialorder %v1541, 4.0
    %vm1638 = vcmp.lt.f32.partialorder %v1544, 4.0
    %vm1639 = vcmp.lt.f32.partialorder %v1547, 4.0
    %vm1640 = vcmp.lt.f32.partialorder %v1550, 4.0
    %vm1641 = vcmp.lt.f32.partialorder %v1553, 4.0
    %vm1642 = vcmp.lt.f32.partialorder %v1556, 4.0
    %vm1643 = vcmp.lt.f32.partialorder %v1559, 4.0
    %vm1644 = vcmp.lt.f32.partialorder %v1562, 4.0
    %vm1645 = vcmp.lt.f32.partialorder %v1565, 4.0
    %vm1646 = vcmp.lt.f32.partialorder %v1568, 4.0
    %vm1647 = vcmp.lt.f32.partialorder %v1571, 4.0
    %vm1648 = vcmp.lt.f32.partialorder %v1574, 4.0
    %vm1649 = vcmp.lt.f32.partialorder %v1577, 4.0
    %vm1650 = vcmp.lt.f32.partialorder %v1580, 4.0
    %vm1651 = vcmp.lt.f32.partialorder %v1583, 4.0
    %vm1652 = vcmp.lt.f32.partialorder %v1586, 4.0
    %vm1653 = vcmp.lt.f32.partialorder %v1589, 4.0
    %v1654 = vlaneseq
    %v1655 = vshrl.u32 %v1654, 7
    %1657 = vset.pattern.permute.xlu0 %v1655
    %1658 = vperm.xlu0 %1657, %v883
    %v1659 = vpop.permute.xlu0 %1658
    %v1660 = vperm.slane %v169, 1
    %v1661 = vlaneseq
    %v1662 = vshrl.u32 %v1661, 7
    %1664 = vset.pattern.permute.xlu0 %v1662
    %1665 = vperm.xlu0 %1664, %v1660
    %v1666 = vpop.permute.xlu0 %1665
    %v1667 = vperm.slane %v169, 2
    %v1668 = vlaneseq
    %v1669 = vshrl.u32 %v1668, 7
    %1671 = vset.pattern.permute.xlu0 %v1669
    %1672 = vperm.xlu0 %1671, %v1667
    %v1673 = vpop.permute.xlu0 %1672
    %v1674 = vperm.slane %v169, 3
    %v1675 = vlaneseq
    %v1676 = vshrl.u32 %v1675, 7
    %1678 = vset.pattern.permute.xlu0 %v1676
    %1679 = vperm.xlu0 %1678, %v1674
    %v1680 = vpop.permute.xlu0 %1679
    %v1681 = vperm.slane %v169, 4
    %v1682 = vlaneseq
    %v1683 = vshrl.u32 %v1682, 7
    %1685 = vset.pattern.permute.xlu0 %v1683
    %1686 = vperm.xlu0 %1685, %v1681
    %v1687 = vpop.permute.xlu0 %1686
    %v1688 = vperm.slane %v169, 5
    %v1689 = vlaneseq
    %v1690 = vshrl.u32 %v1689, 7
    %1692 = vset.pattern.permute.xlu0 %v1690
    %1693 = vperm.xlu0 %1692, %v1688
    %v1694 = vpop.permute.xlu0 %1693
    %v1695 = vperm.slane %v169, 6
    %v1696 = vlaneseq
    %v1697 = vshrl.u32 %v1696, 7
    %1699 = vset.pattern.permute.xlu0 %v1697
    %1700 = vperm.xlu0 %1699, %v1695
    %v1701 = vpop.permute.xlu0 %1700
    %v1702 = vperm.slane %v169, 7
    %v1703 = vlaneseq
    %v1704 = vshrl.u32 %v1703, 7
    %1706 = vset.pattern.permute.xlu0 %v1704
    %1707 = vperm.xlu0 %1706, %v1702
    %v1708 = vpop.permute.xlu0 %1707
    %v1709 = vlaneseq
    %v1710 = vshrl.u32 %v1709, 7
    %1712 = vset.pattern.permute.xlu0 %v1710
    %1713 = vperm.xlu0 %1712, %v891
    %v1714 = vpop.permute.xlu0 %1713
    %v1715 = vperm.slane %v197, 1
    %v1716 = vlaneseq
    %v1717 = vshrl.u32 %v1716, 7
    %1719 = vset.pattern.permute.xlu0 %v1717
    %1720 = vperm.xlu0 %1719, %v1715
    %v1721 = vpop.permute.xlu0 %1720
    %v1722 = vperm.slane %v197, 2
    %v1723 = vlaneseq
    %v1724 = vshrl.u32 %v1723, 7
    %1726 = vset.pattern.permute.xlu0 %v1724
    %1727 = vperm.xlu0 %1726, %v1722
    %v1728 = vpop.permute.xlu0 %1727
    %v1729 = vperm.slane %v197, 3
    %v1730 = vlaneseq
    %v1731 = vshrl.u32 %v1730, 7
    %1733 = vset.pattern.permute.xlu0 %v1731
    %1734 = vperm.xlu0 %1733, %v1729
    %v1735 = vpop.permute.xlu0 %1734
    %v1736 = vperm.slane %v197, 4
    %v1737 = vlaneseq
    %v1738 = vshrl.u32 %v1737, 7
    %1740 = vset.pattern.permute.xlu0 %v1738
    %1741 = vperm.xlu0 %1740, %v1736
    %v1742 = vpop.permute.xlu0 %1741
    %v1743 = vperm.slane %v197, 5
    %v1744 = vlaneseq
    %v1745 = vshrl.u32 %v1744, 7
    %1747 = vset.pattern.permute.xlu0 %v1745
    %1748 = vperm.xlu0 %1747, %v1743
    %v1749 = vpop.permute.xlu0 %1748
    %v1750 = vperm.slane %v197, 6
    %v1751 = vlaneseq
    %v1752 = vshrl.u32 %v1751, 7
    %1754 = vset.pattern.permute.xlu0 %v1752
    %1755 = vperm.xlu0 %1754, %v1750
    %v1756 = vpop.permute.xlu0 %1755
    %v1757 = vperm.slane %v197, 7
    %v1758 = vlaneseq
    %v1759 = vshrl.u32 %v1758, 7
    %1761 = vset.pattern.permute.xlu0 %v1759
    %1762 = vperm.xlu0 %1761, %v1757
    %v1763 = vpop.permute.xlu0 %1762
    %v1764 = vlaneseq
    %v1765 = vshrl.u32 %v1764, 7
    %1767 = vset.pattern.permute.xlu0 %v1765
    %1768 = vperm.xlu0 %1767, %v899
    %v1769 = vpop.permute.xlu0 %1768
    %v1770 = vperm.slane %v225, 1
    %v1771 = vlaneseq
    %v1772 = vshrl.u32 %v1771, 7
    %1774 = vset.pattern.permute.xlu0 %v1772
    %1775 = vperm.xlu0 %1774, %v1770
    %v1776 = vpop.permute.xlu0 %1775
    %v1777 = vperm.slane %v225, 2
    %v1778 = vlaneseq
    %v1779 = vshrl.u32 %v1778, 7
    %1781 = vset.pattern.permute.xlu0 %v1779
    %1782 = vperm.xlu0 %1781, %v1777
    %v1783 = vpop.permute.xlu0 %1782
    %v1784 = vperm.slane %v225, 3
    %v1785 = vlaneseq
    %v1786 = vshrl.u32 %v1785, 7
    %1788 = vset.pattern.permute.xlu0 %v1786
    %1789 = vperm.xlu0 %1788, %v1784
    %v1790 = vpop.permute.xlu0 %1789
    %v1791 = vperm.slane %v225, 4
    %v1792 = vlaneseq
    %v1793 = vshrl.u32 %v1792, 7
    %1795 = vset.pattern.permute.xlu0 %v1793
    %1796 = vperm.xlu0 %1795, %v1791
    %v1797 = vpop.permute.xlu0 %1796
    %v1798 = vperm.slane %v225, 5
    %v1799 = vlaneseq
    %v1800 = vshrl.u32 %v1799, 7
    %1802 = vset.pattern.permute.xlu0 %v1800
    %1803 = vperm.xlu0 %1802, %v1798
    %v1804 = vpop.permute.xlu0 %1803
    %v1805 = vperm.slane %v225, 6
    %v1806 = vlaneseq
    %v1807 = vshrl.u32 %v1806, 7
    %1809 = vset.pattern.permute.xlu0 %v1807
    %1810 = vperm.xlu0 %1809, %v1805
    %v1811 = vpop.permute.xlu0 %1810
    %v1812 = vperm.slane %v225, 7
    %v1813 = vlaneseq
    %v1814 = vshrl.u32 %v1813, 7
    %1816 = vset.pattern.permute.xlu0 %v1814
    %1817 = vperm.xlu0 %1816, %v1812
    %v1818 = vpop.permute.xlu0 %1817
    %v1819 = vlaneseq
    %v1820 = vshrl.u32 %v1819, 7
    %1822 = vset.pattern.permute.xlu0 %v1820
    %1823 = vperm.xlu0 %1822, %v907
    %v1824 = vpop.permute.xlu0 %1823
    %v1825 = vperm.slane %v253, 1
    %v1826 = vlaneseq
    %v1827 = vshrl.u32 %v1826, 7
    %1829 = vset.pattern.permute.xlu0 %v1827
    %1830 = vperm.xlu0 %1829, %v1825
    %v1831 = vpop.permute.xlu0 %1830
    %v1832 = vperm.slane %v253, 2
    %v1833 = vlaneseq
    %v1834 = vshrl.u32 %v1833, 7
    %1836 = vset.pattern.permute.xlu0 %v1834
    %1837 = vperm.xlu0 %1836, %v1832
    %v1838 = vpop.permute.xlu0 %1837
    %v1839 = vperm.slane %v253, 3
    %v1840 = vlaneseq
    %v1841 = vshrl.u32 %v1840, 7
    %1843 = vset.pattern.permute.xlu0 %v1841
    %1844 = vperm.xlu0 %1843, %v1839
    %v1845 = vpop.permute.xlu0 %1844
    %v1846 = vperm.slane %v253, 4
    %v1847 = vlaneseq
    %v1848 = vshrl.u32 %v1847, 7
    %1850 = vset.pattern.permute.xlu0 %v1848
    %1851 = vperm.xlu0 %1850, %v1846
    %v1852 = vpop.permute.xlu0 %1851
    %v1853 = vperm.slane %v253, 5
    %v1854 = vlaneseq
    %v1855 = vshrl.u32 %v1854, 7
    %1857 = vset.pattern.permute.xlu0 %v1855
    %1858 = vperm.xlu0 %1857, %v1853
    %v1859 = vpop.permute.xlu0 %1858
    %v1860 = vperm.slane %v253, 6
    %v1861 = vlaneseq
    %v1862 = vshrl.u32 %v1861, 7
    %1864 = vset.pattern.permute.xlu0 %v1862
    %1865 = vperm.xlu0 %1864, %v1860
    %v1866 = vpop.permute.xlu0 %1865
    %v1867 = vperm.slane %v253, 7
    %v1868 = vlaneseq
    %v1869 = vshrl.u32 %v1868, 7
    %1871 = vset.pattern.permute.xlu0 %v1869
    %1872 = vperm.xlu0 %1871, %v1867
    %v1873 = vpop.permute.xlu0 %1872
    %v1874 = vlaneseq
    %v1875 = vshrl.u32 %v1874, 7
    %1877 = vset.pattern.permute.xlu0 %v1875
    %1878 = vperm.xlu0 %1877, %v915
    %v1879 = vpop.permute.xlu0 %1878
    %v1880 = vperm.slane %v281, 1
    %v1881 = vlaneseq
    %v1882 = vshrl.u32 %v1881, 7
    %1884 = vset.pattern.permute.xlu0 %v1882
    %1885 = vperm.xlu0 %1884, %v1880
    %v1886 = vpop.permute.xlu0 %1885
    %v1887 = vperm.slane %v281, 2
    %v1888 = vlaneseq
    %v1889 = vshrl.u32 %v1888, 7
    %1891 = vset.pattern.permute.xlu0 %v1889
    %1892 = vperm.xlu0 %1891, %v1887
    %v1893 = vpop.permute.xlu0 %1892
    %v1894 = vperm.slane %v281, 3
    %v1895 = vlaneseq
    %v1896 = vshrl.u32 %v1895, 7
    %1898 = vset.pattern.permute.xlu0 %v1896
    %1899 = vperm.xlu0 %1898, %v1894
    %v1900 = vpop.permute.xlu0 %1899
    %v1901 = vperm.slane %v281, 4
    %v1902 = vlaneseq
    %v1903 = vshrl.u32 %v1902, 7
    %1905 = vset.pattern.permute.xlu0 %v1903
    %1906 = vperm.xlu0 %1905, %v1901
    %v1907 = vpop.permute.xlu0 %1906
    %v1908 = vperm.slane %v281, 5
    %v1909 = vlaneseq
    %v1910 = vshrl.u32 %v1909, 7
    %1912 = vset.pattern.permute.xlu0 %v1910
    %1913 = vperm.xlu0 %1912, %v1908
    %v1914 = vpop.permute.xlu0 %1913
    %v1915 = vperm.slane %v281, 6
    %v1916 = vlaneseq
    %v1917 = vshrl.u32 %v1916, 7
    %1919 = vset.pattern.permute.xlu0 %v1917
    %1920 = vperm.xlu0 %1919, %v1915
    %v1921 = vpop.permute.xlu0 %1920
    %v1922 = vperm.slane %v281, 7
    %v1923 = vlaneseq
    %v1924 = vshrl.u32 %v1923, 7
    %1926 = vset.pattern.permute.xlu0 %v1924
    %1927 = vperm.xlu0 %1926, %v1922
    %v1928 = vpop.permute.xlu0 %1927
    %v1929 = vlaneseq
    %v1930 = vshrl.u32 %v1929, 7
    %1932 = vset.pattern.permute.xlu0 %v1930
    %1933 = vperm.xlu0 %1932, %v923
    %v1934 = vpop.permute.xlu0 %1933
    %v1935 = vperm.slane %v309, 1
    %v1936 = vlaneseq
    %v1937 = vshrl.u32 %v1936, 7
    %1939 = vset.pattern.permute.xlu0 %v1937
    %1940 = vperm.xlu0 %1939, %v1935
    %v1941 = vpop.permute.xlu0 %1940
    %v1942 = vperm.slane %v309, 2
    %v1943 = vlaneseq
    %v1944 = vshrl.u32 %v1943, 7
    %1946 = vset.pattern.permute.xlu0 %v1944
    %1947 = vperm.xlu0 %1946, %v1942
    %v1948 = vpop.permute.xlu0 %1947
    %v1949 = vperm.slane %v309, 3
    %v1950 = vlaneseq
    %v1951 = vshrl.u32 %v1950, 7
    %1953 = vset.pattern.permute.xlu0 %v1951
    %1954 = vperm.xlu0 %1953, %v1949
    %v1955 = vpop.permute.xlu0 %1954
    %v1956 = vperm.slane %v309, 4
    %v1957 = vlaneseq
    %v1958 = vshrl.u32 %v1957, 7
    %1960 = vset.pattern.permute.xlu0 %v1958
    %1961 = vperm.xlu0 %1960, %v1956
    %v1962 = vpop.permute.xlu0 %1961
    %v1963 = vperm.slane %v309, 5
    %v1964 = vlaneseq
    %v1965 = vshrl.u32 %v1964, 7
    %1967 = vset.pattern.permute.xlu0 %v1965
    %1968 = vperm.xlu0 %1967, %v1963
    %v1969 = vpop.permute.xlu0 %1968
    %v1970 = vperm.slane %v309, 6
    %v1971 = vlaneseq
    %v1972 = vshrl.u32 %v1971, 7
    %1974 = vset.pattern.permute.xlu0 %v1972
    %1975 = vperm.xlu0 %1974, %v1970
    %v1976 = vpop.permute.xlu0 %1975
    %v1977 = vperm.slane %v309, 7
    %v1978 = vlaneseq
    %v1979 = vshrl.u32 %v1978, 7
    %1981 = vset.pattern.permute.xlu0 %v1979
    %1982 = vperm.xlu0 %1981, %v1977
    %v1983 = vpop.permute.xlu0 %1982
    %v1984 = vlaneseq
    %v1985 = vshrl.u32 %v1984, 7
    %1987 = vset.pattern.permute.xlu0 %v1985
    %1988 = vperm.xlu0 %1987, %v931
    %v1989 = vpop.permute.xlu0 %1988
    %v1990 = vperm.slane %v337, 1
    %v1991 = vlaneseq
    %v1992 = vshrl.u32 %v1991, 7
    %1994 = vset.pattern.permute.xlu0 %v1992
    %1995 = vperm.xlu0 %1994, %v1990
    %v1996 = vpop.permute.xlu0 %1995
    %v1997 = vperm.slane %v337, 2
    %v1998 = vlaneseq
    %v1999 = vshrl.u32 %v1998, 7
    %2001 = vset.pattern.permute.xlu0 %v1999
    %2002 = vperm.xlu0 %2001, %v1997
    %v2003 = vpop.permute.xlu0 %2002
    %v2004 = vperm.slane %v337, 3
    %v2005 = vlaneseq
    %v2006 = vshrl.u32 %v2005, 7
    %2008 = vset.pattern.permute.xlu0 %v2006
    %2009 = vperm.xlu0 %2008, %v2004
    %v2010 = vpop.permute.xlu0 %2009
    %v2011 = vperm.slane %v337, 4
    %v2012 = vlaneseq
    %v2013 = vshrl.u32 %v2012, 7
    %2015 = vset.pattern.permute.xlu0 %v2013
    %2016 = vperm.xlu0 %2015, %v2011
    %v2017 = vpop.permute.xlu0 %2016
    %v2018 = vperm.slane %v337, 5
    %v2019 = vlaneseq
    %v2020 = vshrl.u32 %v2019, 7
    %2022 = vset.pattern.permute.xlu0 %v2020
    %2023 = vperm.xlu0 %2022, %v2018
    %v2024 = vpop.permute.xlu0 %2023
    %v2025 = vperm.slane %v337, 6
    %v2026 = vlaneseq
    %v2027 = vshrl.u32 %v2026, 7
    %2029 = vset.pattern.permute.xlu0 %v2027
    %2030 = vperm.xlu0 %2029, %v2025
    %v2031 = vpop.permute.xlu0 %2030
    %v2032 = vperm.slane %v337, 7
    %v2033 = vlaneseq
    %v2034 = vshrl.u32 %v2033, 7
    %2036 = vset.pattern.permute.xlu0 %v2034
    %2037 = vperm.xlu0 %2036, %v2032
    %v2038 = vpop.permute.xlu0 %2037
    %v2039 = vlaneseq
    %v2040 = vshrl.u32 %v2039, 7
    %2042 = vset.pattern.permute.xlu0 %v2040
    %2043 = vperm.xlu0 %2042, %v939
    %v2044 = vpop.permute.xlu0 %2043
    %v2045 = vperm.slane %v365, 1
    %v2046 = vlaneseq
    %v2047 = vshrl.u32 %v2046, 7
    %2049 = vset.pattern.permute.xlu0 %v2047
    %2050 = vperm.xlu0 %2049, %v2045
    %v2051 = vpop.permute.xlu0 %2050
    %v2052 = vperm.slane %v365, 2
    %v2053 = vlaneseq
    %v2054 = vshrl.u32 %v2053, 7
    %2056 = vset.pattern.permute.xlu0 %v2054
    %2057 = vperm.xlu0 %2056, %v2052
    %v2058 = vpop.permute.xlu0 %2057
    %v2059 = vperm.slane %v365, 3
    %v2060 = vlaneseq
    %v2061 = vshrl.u32 %v2060, 7
    %2063 = vset.pattern.permute.xlu0 %v2061
    %2064 = vperm.xlu0 %2063, %v2059
    %v2065 = vpop.permute.xlu0 %2064
    %v2066 = vperm.slane %v365, 4
    %v2067 = vlaneseq
    %v2068 = vshrl.u32 %v2067, 7
    %2070 = vset.pattern.permute.xlu0 %v2068
    %2071 = vperm.xlu0 %2070, %v2066
    %v2072 = vpop.permute.xlu0 %2071
    %v2073 = vperm.slane %v365, 5
    %v2074 = vlaneseq
    %v2075 = vshrl.u32 %v2074, 7
    %2077 = vset.pattern.permute.xlu0 %v2075
    %2078 = vperm.xlu0 %2077, %v2073
    %v2079 = vpop.permute.xlu0 %2078
    %v2080 = vperm.slane %v365, 6
    %v2081 = vlaneseq
    %v2082 = vshrl.u32 %v2081, 7
    %2084 = vset.pattern.permute.xlu0 %v2082
    %2085 = vperm.xlu0 %2084, %v2080
    %v2086 = vpop.permute.xlu0 %2085
    %v2087 = vperm.slane %v365, 7
    %v2088 = vlaneseq
    %v2089 = vshrl.u32 %v2088, 7
    %2091 = vset.pattern.permute.xlu0 %v2089
    %2092 = vperm.xlu0 %2091, %v2087
    %v2093 = vpop.permute.xlu0 %2092
    %v2158 = vsel %vm1590, %v1659, -inf
    %v2159 = vsel %vm1591, %v1666, -inf
    %v2160 = vsel %vm1592, %v1673, -inf
    %v2161 = vsel %vm1593, %v1680, -inf
    %v2162 = vsel %vm1594, %v1687, -inf
    %v2163 = vsel %vm1595, %v1694, -inf
    %v2164 = vsel %vm1596, %v1701, -inf
    %v2165 = vsel %vm1597, %v1708, -inf
    %v2166 = vsel %vm1598, %v1714, -inf
    %v2167 = vsel %vm1599, %v1721, -inf
    %v2168 = vsel %vm1600, %v1728, -inf
    %v2169 = vsel %vm1601, %v1735, -inf
    %v2170 = vsel %vm1602, %v1742, -inf
    %v2171 = vsel %vm1603, %v1749, -inf
    %v2172 = vsel %vm1604, %v1756, -inf
    %v2173 = vsel %vm1605, %v1763, -inf
    %v2174 = vsel %vm1606, %v1769, -inf
    %v2175 = vsel %vm1607, %v1776, -inf
    %v2176 = vsel %vm1608, %v1783, -inf
    %v2177 = vsel %vm1609, %v1790, -inf
    %v2178 = vsel %vm1610, %v1797, -inf
    %v2179 = vsel %vm1611, %v1804, -inf
    %v2180 = vsel %vm1612, %v1811, -inf
    %v2181 = vsel %vm1613, %v1818, -inf
    %v2182 = vsel %vm1614, %v1824, -inf
    %v2183 = vsel %vm1615, %v1831, -inf
    %v2184 = vsel %vm1616, %v1838, -inf
    %v2185 = vsel %vm1617, %v1845, -inf
    %v2186 = vsel %vm1618, %v1852, -inf
    %v2187 = vsel %vm1619, %v1859, -inf
    %v2188 = vsel %vm1620, %v1866, -inf
    %v2189 = vsel %vm1621, %v1873, -inf
    %v2190 = vsel %vm1622, %v1879, -inf
    %v2191 = vsel %vm1623, %v1886, -inf
    %v2192 = vsel %vm1624, %v1893, -inf
    %v2193 = vsel %vm1625, %v1900, -inf
    %v2194 = vsel %vm1626, %v1907, -inf
    %v2195 = vsel %vm1627, %v1914, -inf
    %v2196 = vsel %vm1628, %v1921, -inf
    %v2197 = vsel %vm1629, %v1928, -inf
    %v2198 = vsel %vm1630, %v1934, -inf
    %v2199 = vsel %vm1631, %v1941, -inf
    %v2200 = vsel %vm1632, %v1948, -inf
    %v2201 = vsel %vm1633, %v1955, -inf
    %v2202 = vsel %vm1634, %v1962, -inf
    %v2203 = vsel %vm1635, %v1969, -inf
    %v2204 = vsel %vm1636, %v1976, -inf
    %v2205 = vsel %vm1637, %v1983, -inf
    %v2206 = vsel %vm1638, %v1989, -inf
    %v2207 = vsel %vm1639, %v1996, -inf
    %v2208 = vsel %vm1640, %v2003, -inf
    %v2209 = vsel %vm1641, %v2010, -inf
    %v2210 = vsel %vm1642, %v2017, -inf
    %v2211 = vsel %vm1643, %v2024, -inf
    %v2212 = vsel %vm1644, %v2031, -inf
    %v2213 = vsel %vm1645, %v2038, -inf
    %v2214 = vsel %vm1646, %v2044, -inf
    %v2215 = vsel %vm1647, %v2051, -inf
    %v2216 = vsel %vm1648, %v2058, -inf
    %v2217 = vsel %vm1649, %v2065, -inf
    %v2218 = vsel %vm1650, %v2072, -inf
    %v2219 = vsel %vm1651, %v2079, -inf
    %v2220 = vsel %vm1652, %v2086, -inf
    %v2221 = vsel %vm1653, %v2093, -inf
    %2286 = vset.pattern.permute.xlu0 0
    %2287 = vperm.xlu0 %2286, %v2158
    %v2288 = vpop.permute.xlu0 %2287
    %2289 = vset.pattern.permute.xlu0 0
    %2290 = vperm.xlu0 %2289, %v2159
    %v2291 = vpop.permute.xlu0 %2290
    %2292 = vset.pattern.permute.xlu0 0
    %2293 = vperm.xlu0 %2292, %v2160
    %v2294 = vpop.permute.xlu0 %2293
    %2295 = vset.pattern.permute.xlu0 0
    %2296 = vperm.xlu0 %2295, %v2161
    %v2297 = vpop.permute.xlu0 %2296
    %2298 = vset.pattern.permute.xlu0 0
    %2299 = vperm.xlu0 %2298, %v2162
    %v2300 = vpop.permute.xlu0 %2299
    %2301 = vset.pattern.permute.xlu0 0
    %2302 = vperm.xlu0 %2301, %v2163
    %v2303 = vpop.permute.xlu0 %2302
    %2304 = vset.pattern.permute.xlu0 0
    %2305 = vperm.xlu0 %2304, %v2164
    %v2306 = vpop.permute.xlu0 %2305
    %2307 = vset.pattern.permute.xlu0 0
    %2308 = vperm.xlu0 %2307, %v2165
    %v2309 = vpop.permute.xlu0 %2308
    %2310 = vset.pattern.permute.xlu0 0
    %2311 = vperm.xlu0 %2310, %v2166
    %v2312 = vpop.permute.xlu0 %2311
    %2313 = vset.pattern.permute.xlu0 0
    %2314 = vperm.xlu0 %2313, %v2167
    %v2315 = vpop.permute.xlu0 %2314
    %2316 = vset.pattern.permute.xlu0 0
    %2317 = vperm.xlu0 %2316, %v2168
    %v2318 = vpop.permute.xlu0 %2317
    %2319 = vset.pattern.permute.xlu0 0
    %2320 = vperm.xlu0 %2319, %v2169
    %v2321 = vpop.permute.xlu0 %2320
    %2322 = vset.pattern.permute.xlu0 0
    %2323 = vperm.xlu0 %2322, %v2170
    %v2324 = vpop.permute.xlu0 %2323
    %2325 = vset.pattern.permute.xlu0 0
    %2326 = vperm.xlu0 %2325, %v2171
    %v2327 = vpop.permute.xlu0 %2326
    %2328 = vset.pattern.permute.xlu0 0
    %2329 = vperm.xlu0 %2328, %v2172
    %v2330 = vpop.permute.xlu0 %2329
    %2331 = vset.pattern.permute.xlu0 0
    %2332 = vperm.xlu0 %2331, %v2173
    %v2333 = vpop.permute.xlu0 %2332
    %2334 = vset.pattern.permute.xlu0 0
    %2335 = vperm.xlu0 %2334, %v2174
    %v2336 = vpop.permute.xlu0 %2335
    %2337 = vset.pattern.permute.xlu0 0
    %2338 = vperm.xlu0 %2337, %v2175
    %v2339 = vpop.permute.xlu0 %2338
    %2340 = vset.pattern.permute.xlu0 0
    %2341 = vperm.xlu0 %2340, %v2176
    %v2342 = vpop.permute.xlu0 %2341
    %2343 = vset.pattern.permute.xlu0 0
    %2344 = vperm.xlu0 %2343, %v2177
    %v2345 = vpop.permute.xlu0 %2344
    %2346 = vset.pattern.permute.xlu0 0
    %2347 = vperm.xlu0 %2346, %v2178
    %v2348 = vpop.permute.xlu0 %2347
    %2349 = vset.pattern.permute.xlu0 0
    %2350 = vperm.xlu0 %2349, %v2179
    %v2351 = vpop.permute.xlu0 %2350
    %2352 = vset.pattern.permute.xlu0 0
    %2353 = vperm.xlu0 %2352, %v2180
    %v2354 = vpop.permute.xlu0 %2353
    %2355 = vset.pattern.permute.xlu0 0
    %2356 = vperm.xlu0 %2355, %v2181
    %v2357 = vpop.permute.xlu0 %2356
    %2358 = vset.pattern.permute.xlu0 0
    %2359 = vperm.xlu0 %2358, %v2182
    %v2360 = vpop.permute.xlu0 %2359
    %2361 = vset.pattern.permute.xlu0 0
    %2362 = vperm.xlu0 %2361, %v2183
    %v2363 = vpop.permute.xlu0 %2362
    %2364 = vset.pattern.permute.xlu0 0
    %2365 = vperm.xlu0 %2364, %v2184
    %v2366 = vpop.permute.xlu0 %2365
    %2367 = vset.pattern.permute.xlu0 0
    %2368 = vperm.xlu0 %2367, %v2185
    %v2369 = vpop.permute.xlu0 %2368
    %2370 = vset.pattern.permute.xlu0 0
    %2371 = vperm.xlu0 %2370, %v2186
    %v2372 = vpop.permute.xlu0 %2371
    %2373 = vset.pattern.permute.xlu0 0
    %2374 = vperm.xlu0 %2373, %v2187
    %v2375 = vpop.permute.xlu0 %2374
    %2376 = vset.pattern.permute.xlu0 0
    %2377 = vperm.xlu0 %2376, %v2188
    %v2378 = vpop.permute.xlu0 %2377
    %2379 = vset.pattern.permute.xlu0 0
    %2380 = vperm.xlu0 %2379, %v2189
    %v2381 = vpop.permute.xlu0 %2380
    %2382 = vset.pattern.permute.xlu0 0
    %2383 = vperm.xlu0 %2382, %v2190
    %v2384 = vpop.permute.xlu0 %2383
    %2385 = vset.pattern.permute.xlu0 0
    %2386 = vperm.xlu0 %2385, %v2191
    %v2387 = vpop.permute.xlu0 %2386
    %2388 = vset.pattern.permute.xlu0 0
    %2389 = vperm.xlu0 %2388, %v2192
    %v2390 = vpop.permute.xlu0 %2389
    %2391 = vset.pattern.permute.xlu0 0
    %2392 = vperm.xlu0 %2391, %v2193
    %v2393 = vpop.permute.xlu0 %2392
    %2394 = vset.pattern.permute.xlu0 0
    %2395 = vperm.xlu0 %2394, %v2194
    %v2396 = vpop.permute.xlu0 %2395
    %2397 = vset.pattern.permute.xlu0 0
    %2398 = vperm.xlu0 %2397, %v2195
    %v2399 = vpop.permute.xlu0 %2398
    %2400 = vset.pattern.permute.xlu0 0
    %2401 = vperm.xlu0 %2400, %v2196
    %v2402 = vpop.permute.xlu0 %2401
    %2403 = vset.pattern.permute.xlu0 0
    %2404 = vperm.xlu0 %2403, %v2197
    %v2405 = vpop.permute.xlu0 %2404
    %2406 = vset.pattern.permute.xlu0 0
    %2407 = vperm.xlu0 %2406, %v2198
    %v2408 = vpop.permute.xlu0 %2407
    %2409 = vset.pattern.permute.xlu0 0
    %2410 = vperm.xlu0 %2409, %v2199
    %v2411 = vpop.permute.xlu0 %2410
    %2412 = vset.pattern.permute.xlu0 0
    %2413 = vperm.xlu0 %2412, %v2200
    %v2414 = vpop.permute.xlu0 %2413
    %2415 = vset.pattern.permute.xlu0 0
    %2416 = vperm.xlu0 %2415, %v2201
    %v2417 = vpop.permute.xlu0 %2416
    %2418 = vset.pattern.permute.xlu0 0
    %2419 = vperm.xlu0 %2418, %v2202
    %v2420 = vpop.permute.xlu0 %2419
    %2421 = vset.pattern.permute.xlu0 0
    %2422 = vperm.xlu0 %2421, %v2203
    %v2423 = vpop.permute.xlu0 %2422
    %2424 = vset.pattern.permute.xlu0 0
    %2425 = vperm.xlu0 %2424, %v2204
    %v2426 = vpop.permute.xlu0 %2425
    %2427 = vset.pattern.permute.xlu0 0
    %2428 = vperm.xlu0 %2427, %v2205
    %v2429 = vpop.permute.xlu0 %2428
    %2430 = vset.pattern.permute.xlu0 0
    %2431 = vperm.xlu0 %2430, %v2206
    %v2432 = vpop.permute.xlu0 %2431
    %2433 = vset.pattern.permute.xlu0 0
    %2434 = vperm.xlu0 %2433, %v2207
    %v2435 = vpop.permute.xlu0 %2434
    %2436 = vset.pattern.permute.xlu0 0
    %2437 = vperm.xlu0 %2436, %v2208
    %v2438 = vpop.permute.xlu0 %2437
    %2439 = vset.pattern.permute.xlu0 0
    %2440 = vperm.xlu0 %2439, %v2209
    %v2441 = vpop.permute.xlu0 %2440
    %2442 = vset.pattern.permute.xlu0 0
    %2443 = vperm.xlu0 %2442, %v2210
    %v2444 = vpop.permute.xlu0 %2443
    %2445 = vset.pattern.permute.xlu0 0
    %2446 = vperm.xlu0 %2445, %v2211
    %v2447 = vpop.permute.xlu0 %2446
    %2448 = vset.pattern.permute.xlu0 0
    %2449 = vperm.xlu0 %2448, %v2212
    %v2450 = vpop.permute.xlu0 %2449
    %2451 = vset.pattern.permute.xlu0 0
    %2452 = vperm.xlu0 %2451, %v2213
    %v2453 = vpop.permute.xlu0 %2452
    %2454 = vset.pattern.permute.xlu0 0
    %2455 = vperm.xlu0 %2454, %v2214
    %v2456 = vpop.permute.xlu0 %2455
    %2457 = vset.pattern.permute.xlu0 0
    %2458 = vperm.xlu0 %2457, %v2215
    %v2459 = vpop.permute.xlu0 %2458
    %2460 = vset.pattern.permute.xlu0 0
    %2461 = vperm.xlu0 %2460, %v2216
    %v2462 = vpop.permute.xlu0 %2461
    %2463 = vset.pattern.permute.xlu0 0
    %2464 = vperm.xlu0 %2463, %v2217
    %v2465 = vpop.permute.xlu0 %2464
    %2466 = vset.pattern.permute.xlu0 0
    %2467 = vperm.xlu0 %2466, %v2218
    %v2468 = vpop.permute.xlu0 %2467
    %2469 = vset.pattern.permute.xlu0 0
    %2470 = vperm.xlu0 %2469, %v2219
    %v2471 = vpop.permute.xlu0 %2470
    %2472 = vset.pattern.permute.xlu0 0
    %2473 = vperm.xlu0 %2472, %v2220
    %v2474 = vpop.permute.xlu0 %2473
    %2475 = vset.pattern.permute.xlu0 0
    %2476 = vperm.xlu0 %2475, %v2221
    %v2477 = vpop.permute.xlu0 %2476
    %v2478 = vperm.slane %v2288, %v880
    %v2479 = vperm.slane %v2291, %v880
    %v2480 = vperm.slane %v2294, %v880
    %v2481 = vperm.slane %v2297, %v880
    %v2482 = vperm.slane %v2300, %v880
    %v2483 = vperm.slane %v2303, %v880
    %v2484 = vperm.slane %v2306, %v880
    %v2485 = vperm.slane %v2309, %v880
    %v2486 = vperm.slane %v2312, %v880
    %v2487 = vperm.slane %v2315, %v880
    %v2488 = vperm.slane %v2318, %v880
    %v2489 = vperm.slane %v2321, %v880
    %v2490 = vperm.slane %v2324, %v880
    %v2491 = vperm.slane %v2327, %v880
    %v2492 = vperm.slane %v2330, %v880
    %v2493 = vperm.slane %v2333, %v880
    %v2494 = vperm.slane %v2336, %v880
    %v2495 = vperm.slane %v2339, %v880
    %v2496 = vperm.slane %v2342, %v880
    %v2497 = vperm.slane %v2345, %v880
    %v2498 = vperm.slane %v2348, %v880
    %v2499 = vperm.slane %v2351, %v880
    %v2500 = vperm.slane %v2354, %v880
    %v2501 = vperm.slane %v2357, %v880
    %v2502 = vperm.slane %v2360, %v880
    %v2503 = vperm.slane %v2363, %v880
    %v2504 = vperm.slane %v2366, %v880
    %v2505 = vperm.slane %v2369, %v880
    %v2506 = vperm.slane %v2372, %v880
    %v2507 = vperm.slane %v2375, %v880
    %v2508 = vperm.slane %v2378, %v880
    %v2509 = vperm.slane %v2381, %v880
    %v2510 = vperm.slane %v2384, %v880
    %v2511 = vperm.slane %v2387, %v880
    %v2512 = vperm.slane %v2390, %v880
    %v2513 = vperm.slane %v2393, %v880
    %v2514 = vperm.slane %v2396, %v880
    %v2515 = vperm.slane %v2399, %v880
    %v2516 = vperm.slane %v2402, %v880
    %v2517 = vperm.slane %v2405, %v880
    %v2518 = vperm.slane %v2408, %v880
    %v2519 = vperm.slane %v2411, %v880
    %v2520 = vperm.slane %v2414, %v880
    %v2521 = vperm.slane %v2417, %v880
    %v2522 = vperm.slane %v2420, %v880
    %v2523 = vperm.slane %v2423, %v880
    %v2524 = vperm.slane %v2426, %v880
    %v2525 = vperm.slane %v2429, %v880
    %v2526 = vperm.slane %v2432, %v880
    %v2527 = vperm.slane %v2435, %v880
    %v2528 = vperm.slane %v2438, %v880
    %v2529 = vperm.slane %v2441, %v880
    %v2530 = vperm.slane %v2444, %v880
    %v2531 = vperm.slane %v2447, %v880
    %v2532 = vperm.slane %v2450, %v880
    %v2533 = vperm.slane %v2453, %v880
    %v2534 = vperm.slane %v2456, %v880
    %v2535 = vperm.slane %v2459, %v880
    %v2536 = vperm.slane %v2462, %v880
    %v2537 = vperm.slane %v2465, %v880
    %v2538 = vperm.slane %v2468, %v880
    %v2539 = vperm.slane %v2471, %v880
    %v2540 = vperm.slane %v2474, %v880
    %v2541 = vperm.slane %v2477, %v880
    %vm2542 = vcmask 1041409
    %v2543 = vsel %vm2542, %v2479, %v2478
    %vm2544 = vcmask 1042434
    %v2545 = vsel %vm2544, %v2480, %v2543
    %vm2546 = vcmask 1043459
    %v2547 = vsel %vm2546, %v2481, %v2545
    %vm2548 = vcmask 1044484
    %v2549 = vsel %vm2548, %v2482, %v2547
    %vm2550 = vcmask 1045509
    %v2551 = vsel %vm2550, %v2483, %v2549
    %vm2552 = vcmask 1046534
    %v2553 = vsel %vm2552, %v2484, %v2551
    %vm2554 = vcmask 1047559
    %v2555 = vsel %vm2554, %v2485, %v2553
    %v2556 = vsel %vm2542, %v2487, %v2486
    %v2557 = vsel %vm2544, %v2488, %v2556
    %v2558 = vsel %vm2546, %v2489, %v2557
    %v2559 = vsel %vm2548, %v2490, %v2558
    %v2560 = vsel %vm2550, %v2491, %v2559
    %v2561 = vsel %vm2552, %v2492, %v2560
    %v2562 = vsel %vm2554, %v2493, %v2561
    %v2563 = vsel %vm2542, %v2495, %v2494
    %v2564 = vsel %vm2544, %v2496, %v2563
    %v2565 = vsel %vm2546, %v2497, %v2564
    %v2566 = vsel %vm2548, %v2498, %v2565
    %v2567 = vsel %vm2550, %v2499, %v2566
    %v2568 = vsel %vm2552, %v2500, %v2567
    %v2569 = vsel %vm2554, %v2501, %v2568
    %v2570 = vsel %vm2542, %v2503, %v2502
    %v2571 = vsel %vm2544, %v2504, %v2570
    %v2572 = vsel %vm2546, %v2505, %v2571
    %v2573 = vsel %vm2548, %v2506, %v2572
    %v2574 = vsel %vm2550, %v2507, %v2573
    %v2575 = vsel %vm2552, %v2508, %v2574
    %v2576 = vsel %vm2554, %v2509, %v2575
    %v2577 = vsel %vm2542, %v2511, %v2510
    %v2578 = vsel %vm2544, %v2512, %v2577
    %v2579 = vsel %vm2546, %v2513, %v2578
    %v2580 = vsel %vm2548, %v2514, %v2579
    %v2581 = vsel %vm2550, %v2515, %v2580
    %v2582 = vsel %vm2552, %v2516, %v2581
    %v2583 = vsel %vm2554, %v2517, %v2582
    %v2584 = vsel %vm2542, %v2519, %v2518
    %v2585 = vsel %vm2544, %v2520, %v2584
    %v2586 = vsel %vm2546, %v2521, %v2585
    %v2587 = vsel %vm2548, %v2522, %v2586
    %v2588 = vsel %vm2550, %v2523, %v2587
    %v2589 = vsel %vm2552, %v2524, %v2588
    %v2590 = vsel %vm2554, %v2525, %v2589
    %v2591 = vsel %vm2542, %v2527, %v2526
    %v2592 = vsel %vm2544, %v2528, %v2591
    %v2593 = vsel %vm2546, %v2529, %v2592
    %v2594 = vsel %vm2548, %v2530, %v2593
    %v2595 = vsel %vm2550, %v2531, %v2594
    %v2596 = vsel %vm2552, %v2532, %v2595
    %v2597 = vsel %vm2554, %v2533, %v2596
    %v2598 = vsel %vm2542, %v2535, %v2534
    %v2599 = vsel %vm2544, %v2536, %v2598
    %v2600 = vsel %vm2546, %v2537, %v2599
    %v2601 = vsel %vm2548, %v2538, %v2600
    %v2602 = vsel %vm2550, %v2539, %v2601
    %v2603 = vsel %vm2552, %v2540, %v2602
    %v2604 = vsel %vm2554, %v2541, %v2603
    %v2613 = vsel %vm146, %v2555, -inf
    %2614 = vmax.xlane.f32.xlu0 %v2613
    %v2615 = vpop.xlane.xlu0 %2614
    %v2616 = vsel %vm146, %v2562, -inf
    %2617 = vmax.xlane.f32.xlu0 %v2616
    %v2618 = vpop.xlane.xlu0 %2617
    %v2619 = vsel %vm146, %v2569, -inf
    %2620 = vmax.xlane.f32.xlu0 %v2619
    %v2621 = vpop.xlane.xlu0 %2620
    %v2622 = vsel %vm146, %v2576, -inf
    %2623 = vmax.xlane.f32.xlu0 %v2622
    %v2624 = vpop.xlane.xlu0 %2623
    %v2625 = vsel %vm146, %v2583, -inf
    %2626 = vmax.xlane.f32.xlu0 %v2625
    %v2627 = vpop.xlane.xlu0 %2626
    %v2628 = vsel %vm146, %v2590, -inf
    %2629 = vmax.xlane.f32.xlu0 %v2628
    %v2630 = vpop.xlane.xlu0 %2629
    %v2631 = vsel %vm146, %v2597, -inf
    %2632 = vmax.xlane.f32.xlu0 %v2631
    %v2633 = vpop.xlane.xlu0 %2632
    %v2634 = vsel %vm146, %v2604, -inf
    %2635 = vmax.xlane.f32.xlu0 %v2634
    %v2636 = vpop.xlane.xlu0 %2635
    %v2645 = vperm.slane %v2615, 0
    %v2646 = vperm.slane %v2615, 1
    %v2647 = vperm.slane %v2615, 2
    %v2648 = vperm.slane %v2615, 3
    %v2649 = vperm.slane %v2615, 4
    %v2650 = vperm.slane %v2615, 5
    %v2651 = vperm.slane %v2615, 6
    %v2652 = vperm.slane %v2615, 7
    %v2653 = vperm.slane %v2618, 0
    %v2654 = vperm.slane %v2618, 1
    %v2655 = vperm.slane %v2618, 2
    %v2656 = vperm.slane %v2618, 3
    %v2657 = vperm.slane %v2618, 4
    %v2658 = vperm.slane %v2618, 5
    %v2659 = vperm.slane %v2618, 6
    %v2660 = vperm.slane %v2618, 7
    %v2661 = vperm.slane %v2621, 0
    %v2662 = vperm.slane %v2621, 1
    %v2663 = vperm.slane %v2621, 2
    %v2664 = vperm.slane %v2621, 3
    %v2665 = vperm.slane %v2621, 4
    %v2666 = vperm.slane %v2621, 5
    %v2667 = vperm.slane %v2621, 6
    %v2668 = vperm.slane %v2621, 7
    %v2669 = vperm.slane %v2624, 0
    %v2670 = vperm.slane %v2624, 1
    %v2671 = vperm.slane %v2624, 2
    %v2672 = vperm.slane %v2624, 3
    %v2673 = vperm.slane %v2624, 4
    %v2674 = vperm.slane %v2624, 5
    %v2675 = vperm.slane %v2624, 6
    %v2676 = vperm.slane %v2624, 7
    %v2677 = vperm.slane %v2627, 0
    %v2678 = vperm.slane %v2627, 1
    %v2679 = vperm.slane %v2627, 2
    %v2680 = vperm.slane %v2627, 3
    %v2681 = vperm.slane %v2627, 4
    %v2682 = vperm.slane %v2627, 5
    %v2683 = vperm.slane %v2627, 6
    %v2684 = vperm.slane %v2627, 7
    %v2685 = vperm.slane %v2630, 0
    %v2686 = vperm.slane %v2630, 1
    %v2687 = vperm.slane %v2630, 2
    %v2688 = vperm.slane %v2630, 3
    %v2689 = vperm.slane %v2630, 4
    %v2690 = vperm.slane %v2630, 5
    %v2691 = vperm.slane %v2630, 6
    %v2692 = vperm.slane %v2630, 7
    %v2693 = vperm.slane %v2633, 0
    %v2694 = vperm.slane %v2633, 1
    %v2695 = vperm.slane %v2633, 2
    %v2696 = vperm.slane %v2633, 3
    %v2697 = vperm.slane %v2633, 4
    %v2698 = vperm.slane %v2633, 5
    %v2699 = vperm.slane %v2633, 6
    %v2700 = vperm.slane %v2633, 7
    %v2701 = vperm.slane %v2636, 0
    %v2702 = vperm.slane %v2636, 1
    %v2703 = vperm.slane %v2636, 2
    %v2704 = vperm.slane %v2636, 3
    %v2705 = vperm.slane %v2636, 4
    %v2706 = vperm.slane %v2636, 5
    %v2707 = vperm.slane %v2636, 6
    %v2708 = vperm.slane %v2636, 7
    %v2773 = vsub.f32 %v2158, %v2645
    %v2774 = vsub.f32 %v2159, %v2646
    %v2775 = vsub.f32 %v2160, %v2647
    %v2776 = vsub.f32 %v2161, %v2648
    %v2777 = vsub.f32 %v2162, %v2649
    %v2778 = vsub.f32 %v2163, %v2650
    %v2779 = vsub.f32 %v2164, %v2651
    %v2780 = vsub.f32 %v2165, %v2652
    %v2781 = vsub.f32 %v2166, %v2653
    %v2782 = vsub.f32 %v2167, %v2654
    %v2783 = vsub.f32 %v2168, %v2655
    %v2784 = vsub.f32 %v2169, %v2656
    %v2785 = vsub.f32 %v2170, %v2657
    %v2786 = vsub.f32 %v2171, %v2658
    %v2787 = vsub.f32 %v2172, %v2659
    %v2788 = vsub.f32 %v2173, %v2660
    %v2789 = vsub.f32 %v2174, %v2661
    %v2790 = vsub.f32 %v2175, %v2662
    %v2791 = vsub.f32 %v2176, %v2663
    %v2792 = vsub.f32 %v2177, %v2664
    %v2793 = vsub.f32 %v2178, %v2665
    %v2794 = vsub.f32 %v2179, %v2666
    %v2795 = vsub.f32 %v2180, %v2667
    %v2796 = vsub.f32 %v2181, %v2668
    %v2797 = vsub.f32 %v2182, %v2669
    %v2798 = vsub.f32 %v2183, %v2670
    %v2799 = vsub.f32 %v2184, %v2671
    %v2800 = vsub.f32 %v2185, %v2672
    %v2801 = vsub.f32 %v2186, %v2673
    %v2802 = vsub.f32 %v2187, %v2674
    %v2803 = vsub.f32 %v2188, %v2675
    %v2804 = vsub.f32 %v2189, %v2676
    %v2805 = vsub.f32 %v2190, %v2677
    %v2806 = vsub.f32 %v2191, %v2678
    %v2807 = vsub.f32 %v2192, %v2679
    %v2808 = vsub.f32 %v2193, %v2680
    %v2809 = vsub.f32 %v2194, %v2681
    %v2810 = vsub.f32 %v2195, %v2682
    %v2811 = vsub.f32 %v2196, %v2683
    %v2812 = vsub.f32 %v2197, %v2684
    %v2813 = vsub.f32 %v2198, %v2685
    %v2814 = vsub.f32 %v2199, %v2686
    %v2815 = vsub.f32 %v2200, %v2687
    %v2816 = vsub.f32 %v2201, %v2688
    %v2817 = vsub.f32 %v2202, %v2689
    %v2818 = vsub.f32 %v2203, %v2690
    %v2819 = vsub.f32 %v2204, %v2691
    %v2820 = vsub.f32 %v2205, %v2692
    %v2821 = vsub.f32 %v2206, %v2693
    %v2822 = vsub.f32 %v2207, %v2694
    %v2823 = vsub.f32 %v2208, %v2695
    %v2824 = vsub.f32 %v2209, %v2696
    %v2825 = vsub.f32 %v2210, %v2697
    %v2826 = vsub.f32 %v2211, %v2698
    %v2827 = vsub.f32 %v2212, %v2699
    %v2828 = vsub.f32 %v2213, %v2700
    %v2829 = vsub.f32 %v2214, %v2701
    %v2830 = vsub.f32 %v2215, %v2702
    %v2831 = vsub.f32 %v2216, %v2703
    %v2832 = vsub.f32 %v2217, %v2704
    %v2833 = vsub.f32 %v2218, %v2705
    %v2834 = vsub.f32 %v2219, %v2706
    %v2835 = vsub.f32 %v2220, %v2707
    %v2836 = vsub.f32 %v2221, %v2708
    %v2837 = vmul.f32 %v2773, 1.442695
    %v2838 = vpow.pop %v2837
    %v2839 = vmul.f32 %v2774, 1.442695
    %v2840 = vpow.pop %v2839
    %v2841 = vmul.f32 %v2775, 1.442695
    %v2842 = vpow.pop %v2841
    %v2843 = vmul.f32 %v2776, 1.442695
    %v2844 = vpow.pop %v2843
    %v2845 = vmul.f32 %v2777, 1.442695
    %v2846 = vpow.pop %v2845
    %v2847 = vmul.f32 %v2778, 1.442695
    %v2848 = vpow.pop %v2847
    %v2849 = vmul.f32 %v2779, 1.442695
    %v2850 = vpow.pop %v2849
    %v2851 = vmul.f32 %v2780, 1.442695
    %v2852 = vpow.pop %v2851
    %v2853 = vmul.f32 %v2781, 1.442695
    %v2854 = vpow.pop %v2853
    %v2855 = vmul.f32 %v2782, 1.442695
    %v2856 = vpow.pop %v2855
    %v2857 = vmul.f32 %v2783, 1.442695
    %v2858 = vpow.pop %v2857
    %v2859 = vmul.f32 %v2784, 1.442695
    %v2860 = vpow.pop %v2859
    %v2861 = vmul.f32 %v2785, 1.442695
    %v2862 = vpow.pop %v2861
    %v2863 = vmul.f32 %v2786, 1.442695
    %v2864 = vpow.pop %v2863
    %v2865 = vmul.f32 %v2787, 1.442695
    %v2866 = vpow.pop %v2865
    %v2867 = vmul.f32 %v2788, 1.442695
    %v2868 = vpow.pop %v2867
    %v2869 = vmul.f32 %v2789, 1.442695
    %v2870 = vpow.pop %v2869
    %v2871 = vmul.f32 %v2790, 1.442695
    %v2872 = vpow.pop %v2871
    %v2873 = vmul.f32 %v2791, 1.442695
    %v2874 = vpow.pop %v2873
    %v2875 = vmul.f32 %v2792, 1.442695
    %v2876 = vpow.pop %v2875
    %v2877 = vmul.f32 %v2793, 1.442695
    %v2878 = vpow.pop %v2877
    %v2879 = vmul.f32 %v2794, 1.442695
    %v2880 = vpow.pop %v2879
    %v2881 = vmul.f32 %v2795, 1.442695
    %v2882 = vpow.pop %v2881
    %v2883 = vmul.f32 %v2796, 1.442695
    %v2884 = vpow.pop %v2883
    %v2885 = vmul.f32 %v2797, 1.442695
    %v2886 = vpow.pop %v2885
    %v2887 = vmul.f32 %v2798, 1.442695
    %v2888 = vpow.pop %v2887
    %v2889 = vmul.f32 %v2799, 1.442695
    %v2890 = vpow.pop %v2889
    %v2891 = vmul.f32 %v2800, 1.442695
    %v2892 = vpow.pop %v2891
    %v2893 = vmul.f32 %v2801, 1.442695
    %v2894 = vpow.pop %v2893
    %v2895 = vmul.f32 %v2802, 1.442695
    %v2896 = vpow.pop %v2895
    %v2897 = vmul.f32 %v2803, 1.442695
    %v2898 = vpow.pop %v2897
    %v2899 = vmul.f32 %v2804, 1.442695
    %v2900 = vpow.pop %v2899
    %v2901 = vmul.f32 %v2805, 1.442695
    %v2902 = vpow.pop %v2901
    %v2903 = vmul.f32 %v2806, 1.442695
    %v2904 = vpow.pop %v2903
    %v2905 = vmul.f32 %v2807, 1.442695
    %v2906 = vpow.pop %v2905
    %v2907 = vmul.f32 %v2808, 1.442695
    %v2908 = vpow.pop %v2907
    %v2909 = vmul.f32 %v2809, 1.442695
    %v2910 = vpow.pop %v2909
    %v2911 = vmul.f32 %v2810, 1.442695
    %v2912 = vpow.pop %v2911
    %v2913 = vmul.f32 %v2811, 1.442695
    %v2914 = vpow.pop %v2913
    %v2915 = vmul.f32 %v2812, 1.442695
    %v2916 = vpow.pop %v2915
    %v2917 = vmul.f32 %v2813, 1.442695
    %v2918 = vpow.pop %v2917
    %v2919 = vmul.f32 %v2814, 1.442695
    %v2920 = vpow.pop %v2919
    %v2921 = vmul.f32 %v2815, 1.442695
    %v2922 = vpow.pop %v2921
    %v2923 = vmul.f32 %v2816, 1.442695
    %v2924 = vpow.pop %v2923
    %v2925 = vmul.f32 %v2817, 1.442695
    %v2926 = vpow.pop %v2925
    %v2927 = vmul.f32 %v2818, 1.442695
    %v2928 = vpow.pop %v2927
    %v2929 = vmul.f32 %v2819, 1.442695
    %v2930 = vpow.pop %v2929
    %v2931 = vmul.f32 %v2820, 1.442695
    %v2932 = vpow.pop %v2931
    %v2933 = vmul.f32 %v2821, 1.442695
    %v2934 = vpow.pop %v2933
    %v2935 = vmul.f32 %v2822, 1.442695
    %v2936 = vpow.pop %v2935
    %v2937 = vmul.f32 %v2823, 1.442695
    %v2938 = vpow.pop %v2937
    %v2939 = vmul.f32 %v2824, 1.442695
    %v2940 = vpow.pop %v2939
    %v2941 = vmul.f32 %v2825, 1.442695
    %v2942 = vpow.pop %v2941
    %v2943 = vmul.f32 %v2826, 1.442695
    %v2944 = vpow.pop %v2943
    %v2945 = vmul.f32 %v2827, 1.442695
    %v2946 = vpow.pop %v2945
    %v2947 = vmul.f32 %v2828, 1.442695
    %v2948 = vpow.pop %v2947
    %v2949 = vmul.f32 %v2829, 1.442695
    %v2950 = vpow.pop %v2949
    %v2951 = vmul.f32 %v2830, 1.442695
    %v2952 = vpow.pop %v2951
    %v2953 = vmul.f32 %v2831, 1.442695
    %v2954 = vpow.pop %v2953
    %v2955 = vmul.f32 %v2832, 1.442695
    %v2956 = vpow.pop %v2955
    %v2957 = vmul.f32 %v2833, 1.442695
    %v2958 = vpow.pop %v2957
    %v2959 = vmul.f32 %v2834, 1.442695
    %v2960 = vpow.pop %v2959
    %v2961 = vmul.f32 %v2835, 1.442695
    %v2962 = vpow.pop %v2961
    %v2963 = vmul.f32 %v2836, 1.442695
    %v2964 = vpow.pop %v2963
    %v2965 = vsel %vm1590, %v2838, 0.0
    %v2966 = vsel %vm1591, %v2840, 0.0
    %v2967 = vsel %vm1592, %v2842, 0.0
    %v2968 = vsel %vm1593, %v2844, 0.0
    %v2969 = vsel %vm1594, %v2846, 0.0
    %v2970 = vsel %vm1595, %v2848, 0.0
    %v2971 = vsel %vm1596, %v2850, 0.0
    %v2972 = vsel %vm1597, %v2852, 0.0
    %v2973 = vsel %vm1598, %v2854, 0.0
    %v2974 = vsel %vm1599, %v2856, 0.0
    %v2975 = vsel %vm1600, %v2858, 0.0
    %v2976 = vsel %vm1601, %v2860, 0.0
    %v2977 = vsel %vm1602, %v2862, 0.0
    %v2978 = vsel %vm1603, %v2864, 0.0
    %v2979 = vsel %vm1604, %v2866, 0.0
    %v2980 = vsel %vm1605, %v2868, 0.0
    %v2981 = vsel %vm1606, %v2870, 0.0
    %v2982 = vsel %vm1607, %v2872, 0.0
    %v2983 = vsel %vm1608, %v2874, 0.0
    %v2984 = vsel %vm1609, %v2876, 0.0
    %v2985 = vsel %vm1610, %v2878, 0.0
    %v2986 = vsel %vm1611, %v2880, 0.0
    %v2987 = vsel %vm1612, %v2882, 0.0
    %v2988 = vsel %vm1613, %v2884, 0.0
    %v2989 = vsel %vm1614, %v2886, 0.0
    %v2990 = vsel %vm1615, %v2888, 0.0
    %v2991 = vsel %vm1616, %v2890, 0.0
    %v2992 = vsel %vm1617, %v2892, 0.0
    %v2993 = vsel %vm1618, %v2894, 0.0
    %v2994 = vsel %vm1619, %v2896, 0.0
    %v2995 = vsel %vm1620, %v2898, 0.0
    %v2996 = vsel %vm1621, %v2900, 0.0
    %v2997 = vsel %vm1622, %v2902, 0.0
    %v2998 = vsel %vm1623, %v2904, 0.0
    %v2999 = vsel %vm1624, %v2906, 0.0
    %v3000 = vsel %vm1625, %v2908, 0.0
    %v3001 = vsel %vm1626, %v2910, 0.0
    %v3002 = vsel %vm1627, %v2912, 0.0
    %v3003 = vsel %vm1628, %v2914, 0.0
    %v3004 = vsel %vm1629, %v2916, 0.0
    %v3005 = vsel %vm1630, %v2918, 0.0
    %v3006 = vsel %vm1631, %v2920, 0.0
    %v3007 = vsel %vm1632, %v2922, 0.0
    %v3008 = vsel %vm1633, %v2924, 0.0
    %v3009 = vsel %vm1634, %v2926, 0.0
    %v3010 = vsel %vm1635, %v2928, 0.0
    %v3011 = vsel %vm1636, %v2930, 0.0
    %v3012 = vsel %vm1637, %v2932, 0.0
    %v3013 = vsel %vm1638, %v2934, 0.0
    %v3014 = vsel %vm1639, %v2936, 0.0
    %v3015 = vsel %vm1640, %v2938, 0.0
    %v3016 = vsel %vm1641, %v2940, 0.0
    %v3017 = vsel %vm1642, %v2942, 0.0
    %v3018 = vsel %vm1643, %v2944, 0.0
    %v3019 = vsel %vm1644, %v2946, 0.0
    %v3020 = vsel %vm1645, %v2948, 0.0
    %v3021 = vsel %vm1646, %v2950, 0.0
    %v3022 = vsel %vm1647, %v2952, 0.0
    %v3023 = vsel %vm1648, %v2954, 0.0
    %v3024 = vsel %vm1649, %v2956, 0.0
    %v3025 = vsel %vm1650, %v2958, 0.0
    %v3026 = vsel %vm1651, %v2960, 0.0
    %v3027 = vsel %vm1652, %v2962, 0.0
    %v3028 = vsel %vm1653, %v2964, 0.0
    %3093 = vset.pattern.permute.xlu0 0
    %3094 = vperm.xlu0 %3093, %v2965
    %v3095 = vpop.permute.xlu0 %3094
    %3096 = vset.pattern.permute.xlu0 0
    %3097 = vperm.xlu0 %3096, %v2966
    %v3098 = vpop.permute.xlu0 %3097
    %3099 = vset.pattern.permute.xlu0 0
    %3100 = vperm.xlu0 %3099, %v2967
    %v3101 = vpop.permute.xlu0 %3100
    %3102 = vset.pattern.permute.xlu0 0
    %3103 = vperm.xlu0 %3102, %v2968
    %v3104 = vpop.permute.xlu0 %3103
    %3105 = vset.pattern.permute.xlu0 0
    %3106 = vperm.xlu0 %3105, %v2969
    %v3107 = vpop.permute.xlu0 %3106
    %3108 = vset.pattern.permute.xlu0 0
    %3109 = vperm.xlu0 %3108, %v2970
    %v3110 = vpop.permute.xlu0 %3109
    %3111 = vset.pattern.permute.xlu0 0
    %3112 = vperm.xlu0 %3111, %v2971
    %v3113 = vpop.permute.xlu0 %3112
    %3114 = vset.pattern.permute.xlu0 0
    %3115 = vperm.xlu0 %3114, %v2972
    %v3116 = vpop.permute.xlu0 %3115
    %3117 = vset.pattern.permute.xlu0 0
    %3118 = vperm.xlu0 %3117, %v2973
    %v3119 = vpop.permute.xlu0 %3118
    %3120 = vset.pattern.permute.xlu0 0
    %3121 = vperm.xlu0 %3120, %v2974
    %v3122 = vpop.permute.xlu0 %3121
    %3123 = vset.pattern.permute.xlu0 0
    %3124 = vperm.xlu0 %3123, %v2975
    %v3125 = vpop.permute.xlu0 %3124
    %3126 = vset.pattern.permute.xlu0 0
    %3127 = vperm.xlu0 %3126, %v2976
    %v3128 = vpop.permute.xlu0 %3127
    %3129 = vset.pattern.permute.xlu0 0
    %3130 = vperm.xlu0 %3129, %v2977
    %v3131 = vpop.permute.xlu0 %3130
    %3132 = vset.pattern.permute.xlu0 0
    %3133 = vperm.xlu0 %3132, %v2978
    %v3134 = vpop.permute.xlu0 %3133
    %3135 = vset.pattern.permute.xlu0 0
    %3136 = vperm.xlu0 %3135, %v2979
    %v3137 = vpop.permute.xlu0 %3136
    %3138 = vset.pattern.permute.xlu0 0
    %3139 = vperm.xlu0 %3138, %v2980
    %v3140 = vpop.permute.xlu0 %3139
    %3141 = vset.pattern.permute.xlu0 0
    %3142 = vperm.xlu0 %3141, %v2981
    %v3143 = vpop.permute.xlu0 %3142
    %3144 = vset.pattern.permute.xlu0 0
    %3145 = vperm.xlu0 %3144, %v2982
    %v3146 = vpop.permute.xlu0 %3145
    %3147 = vset.pattern.permute.xlu0 0
    %3148 = vperm.xlu0 %3147, %v2983
    %v3149 = vpop.permute.xlu0 %3148
    %3150 = vset.pattern.permute.xlu0 0
    %3151 = vperm.xlu0 %3150, %v2984
    %v3152 = vpop.permute.xlu0 %3151
    %3153 = vset.pattern.permute.xlu0 0
    %3154 = vperm.xlu0 %3153, %v2985
    %v3155 = vpop.permute.xlu0 %3154
    %3156 = vset.pattern.permute.xlu0 0
    %3157 = vperm.xlu0 %3156, %v2986
    %v3158 = vpop.permute.xlu0 %3157
    %3159 = vset.pattern.permute.xlu0 0
    %3160 = vperm.xlu0 %3159, %v2987
    %v3161 = vpop.permute.xlu0 %3160
    %3162 = vset.pattern.permute.xlu0 0
    %3163 = vperm.xlu0 %3162, %v2988
    %v3164 = vpop.permute.xlu0 %3163
    %3165 = vset.pattern.permute.xlu0 0
    %3166 = vperm.xlu0 %3165, %v2989
    %v3167 = vpop.permute.xlu0 %3166
    %3168 = vset.pattern.permute.xlu0 0
    %3169 = vperm.xlu0 %3168, %v2990
    %v3170 = vpop.permute.xlu0 %3169
    %3171 = vset.pattern.permute.xlu0 0
    %3172 = vperm.xlu0 %3171, %v2991
    %v3173 = vpop.permute.xlu0 %3172
    %3174 = vset.pattern.permute.xlu0 0
    %3175 = vperm.xlu0 %3174, %v2992
    %v3176 = vpop.permute.xlu0 %3175
    %3177 = vset.pattern.permute.xlu0 0
    %3178 = vperm.xlu0 %3177, %v2993
    %v3179 = vpop.permute.xlu0 %3178
    %3180 = vset.pattern.permute.xlu0 0
    %3181 = vperm.xlu0 %3180, %v2994
    %v3182 = vpop.permute.xlu0 %3181
    %3183 = vset.pattern.permute.xlu0 0
    %3184 = vperm.xlu0 %3183, %v2995
    %v3185 = vpop.permute.xlu0 %3184
    %3186 = vset.pattern.permute.xlu0 0
    %3187 = vperm.xlu0 %3186, %v2996
    %v3188 = vpop.permute.xlu0 %3187
    %3189 = vset.pattern.permute.xlu0 0
    %3190 = vperm.xlu0 %3189, %v2997
    %v3191 = vpop.permute.xlu0 %3190
    %3192 = vset.pattern.permute.xlu0 0
    %3193 = vperm.xlu0 %3192, %v2998
    %v3194 = vpop.permute.xlu0 %3193
    %3195 = vset.pattern.permute.xlu0 0
    %3196 = vperm.xlu0 %3195, %v2999
    %v3197 = vpop.permute.xlu0 %3196
    %3198 = vset.pattern.permute.xlu0 0
    %3199 = vperm.xlu0 %3198, %v3000
    %v3200 = vpop.permute.xlu0 %3199
    %3201 = vset.pattern.permute.xlu0 0
    %3202 = vperm.xlu0 %3201, %v3001
    %v3203 = vpop.permute.xlu0 %3202
    %3204 = vset.pattern.permute.xlu0 0
    %3205 = vperm.xlu0 %3204, %v3002
    %v3206 = vpop.permute.xlu0 %3205
    %3207 = vset.pattern.permute.xlu0 0
    %3208 = vperm.xlu0 %3207, %v3003
    %v3209 = vpop.permute.xlu0 %3208
    %3210 = vset.pattern.permute.xlu0 0
    %3211 = vperm.xlu0 %3210, %v3004
    %v3212 = vpop.permute.xlu0 %3211
    %3213 = vset.pattern.permute.xlu0 0
    %3214 = vperm.xlu0 %3213, %v3005
    %v3215 = vpop.permute.xlu0 %3214
    %3216 = vset.pattern.permute.xlu0 0
    %3217 = vperm.xlu0 %3216, %v3006
    %v3218 = vpop.permute.xlu0 %3217
    %3219 = vset.pattern.permute.xlu0 0
    %3220 = vperm.xlu0 %3219, %v3007
    %v3221 = vpop.permute.xlu0 %3220
    %3222 = vset.pattern.permute.xlu0 0
    %3223 = vperm.xlu0 %3222, %v3008
    %v3224 = vpop.permute.xlu0 %3223
    %3225 = vset.pattern.permute.xlu0 0
    %3226 = vperm.xlu0 %3225, %v3009
    %v3227 = vpop.permute.xlu0 %3226
    %3228 = vset.pattern.permute.xlu0 0
    %3229 = vperm.xlu0 %3228, %v3010
    %v3230 = vpop.permute.xlu0 %3229
    %3231 = vset.pattern.permute.xlu0 0
    %3232 = vperm.xlu0 %3231, %v3011
    %v3233 = vpop.permute.xlu0 %3232
    %3234 = vset.pattern.permute.xlu0 0
    %3235 = vperm.xlu0 %3234, %v3012
    %v3236 = vpop.permute.xlu0 %3235
    %3237 = vset.pattern.permute.xlu0 0
    %3238 = vperm.xlu0 %3237, %v3013
    %v3239 = vpop.permute.xlu0 %3238
    %3240 = vset.pattern.permute.xlu0 0
    %3241 = vperm.xlu0 %3240, %v3014
    %v3242 = vpop.permute.xlu0 %3241
    %3243 = vset.pattern.permute.xlu0 0
    %3244 = vperm.xlu0 %3243, %v3015
    %v3245 = vpop.permute.xlu0 %3244
    %3246 = vset.pattern.permute.xlu0 0
    %3247 = vperm.xlu0 %3246, %v3016
    %v3248 = vpop.permute.xlu0 %3247
    %3249 = vset.pattern.permute.xlu0 0
    %3250 = vperm.xlu0 %3249, %v3017
    %v3251 = vpop.permute.xlu0 %3250
    %3252 = vset.pattern.permute.xlu0 0
    %3253 = vperm.xlu0 %3252, %v3018
    %v3254 = vpop.permute.xlu0 %3253
    %3255 = vset.pattern.permute.xlu0 0
    %3256 = vperm.xlu0 %3255, %v3019
    %v3257 = vpop.permute.xlu0 %3256
    %3258 = vset.pattern.permute.xlu0 0
    %3259 = vperm.xlu0 %3258, %v3020
    %v3260 = vpop.permute.xlu0 %3259
    %3261 = vset.pattern.permute.xlu0 0
    %3262 = vperm.xlu0 %3261, %v3021
    %v3263 = vpop.permute.xlu0 %3262
    %3264 = vset.pattern.permute.xlu0 0
    %3265 = vperm.xlu0 %3264, %v3022
    %v3266 = vpop.permute.xlu0 %3265
    %3267 = vset.pattern.permute.xlu0 0
    %3268 = vperm.xlu0 %3267, %v3023
    %v3269 = vpop.permute.xlu0 %3268
    %3270 = vset.pattern.permute.xlu0 0
    %3271 = vperm.xlu0 %3270, %v3024
    %v3272 = vpop.permute.xlu0 %3271
    %3273 = vset.pattern.permute.xlu0 0
    %3274 = vperm.xlu0 %3273, %v3025
    %v3275 = vpop.permute.xlu0 %3274
    %3276 = vset.pattern.permute.xlu0 0
    %3277 = vperm.xlu0 %3276, %v3026
    %v3278 = vpop.permute.xlu0 %3277
    %3279 = vset.pattern.permute.xlu0 0
    %3280 = vperm.xlu0 %3279, %v3027
    %v3281 = vpop.permute.xlu0 %3280
    %3282 = vset.pattern.permute.xlu0 0
    %3283 = vperm.xlu0 %3282, %v3028
    %v3284 = vpop.permute.xlu0 %3283
    %v3285 = vperm.slane %v3095, %v880
    %v3286 = vperm.slane %v3098, %v880
    %v3287 = vperm.slane %v3101, %v880
    %v3288 = vperm.slane %v3104, %v880
    %v3289 = vperm.slane %v3107, %v880
    %v3290 = vperm.slane %v3110, %v880
    %v3291 = vperm.slane %v3113, %v880
    %v3292 = vperm.slane %v3116, %v880
    %v3293 = vperm.slane %v3119, %v880
    %v3294 = vperm.slane %v3122, %v880
    %v3295 = vperm.slane %v3125, %v880
    %v3296 = vperm.slane %v3128, %v880
    %v3297 = vperm.slane %v3131, %v880
    %v3298 = vperm.slane %v3134, %v880
    %v3299 = vperm.slane %v3137, %v880
    %v3300 = vperm.slane %v3140, %v880
    %v3301 = vperm.slane %v3143, %v880
    %v3302 = vperm.slane %v3146, %v880
    %v3303 = vperm.slane %v3149, %v880
    %v3304 = vperm.slane %v3152, %v880
    %v3305 = vperm.slane %v3155, %v880
    %v3306 = vperm.slane %v3158, %v880
    %v3307 = vperm.slane %v3161, %v880
    %v3308 = vperm.slane %v3164, %v880
    %v3309 = vperm.slane %v3167, %v880
    %v3310 = vperm.slane %v3170, %v880
    %v3311 = vperm.slane %v3173, %v880
    %v3312 = vperm.slane %v3176, %v880
    %v3313 = vperm.slane %v3179, %v880
    %v3314 = vperm.slane %v3182, %v880
    %v3315 = vperm.slane %v3185, %v880
    %v3316 = vperm.slane %v3188, %v880
    %v3317 = vperm.slane %v3191, %v880
    %v3318 = vperm.slane %v3194, %v880
    %v3319 = vperm.slane %v3197, %v880
    %v3320 = vperm.slane %v3200, %v880
    %v3321 = vperm.slane %v3203, %v880
    %v3322 = vperm.slane %v3206, %v880
    %v3323 = vperm.slane %v3209, %v880
    %v3324 = vperm.slane %v3212, %v880
    %v3325 = vperm.slane %v3215, %v880
    %v3326 = vperm.slane %v3218, %v880
    %v3327 = vperm.slane %v3221, %v880
    %v3328 = vperm.slane %v3224, %v880
    %v3329 = vperm.slane %v3227, %v880
    %v3330 = vperm.slane %v3230, %v880
    %v3331 = vperm.slane %v3233, %v880
    %v3332 = vperm.slane %v3236, %v880
    %v3333 = vperm.slane %v3239, %v880
    %v3334 = vperm.slane %v3242, %v880
    %v3335 = vperm.slane %v3245, %v880
    %v3336 = vperm.slane %v3248, %v880
    %v3337 = vperm.slane %v3251, %v880
    %v3338 = vperm.slane %v3254, %v880
    %v3339 = vperm.slane %v3257, %v880
    %v3340 = vperm.slane %v3260, %v880
    %v3341 = vperm.slane %v3263, %v880
    %v3342 = vperm.slane %v3266, %v880
    %v3343 = vperm.slane %v3269, %v880
    %v3344 = vperm.slane %v3272, %v880
    %v3345 = vperm.slane %v3275, %v880
    %v3346 = vperm.slane %v3278, %v880
    %v3347 = vperm.slane %v3281, %v880
    %v3348 = vperm.slane %v3284, %v880
    %v3349 = vsel %vm2542, %v3286, %v3285
    %v3350 = vsel %vm2544, %v3287, %v3349
    %v3351 = vsel %vm2546, %v3288, %v3350
    %v3352 = vsel %vm2548, %v3289, %v3351
    %v3353 = vsel %vm2550, %v3290, %v3352
    %v3354 = vsel %vm2552, %v3291, %v3353
    %v3355 = vsel %vm2554, %v3292, %v3354
    %v3356 = vsel %vm2542, %v3294, %v3293
    %v3357 = vsel %vm2544, %v3295, %v3356
    %v3358 = vsel %vm2546, %v3296, %v3357
    %v3359 = vsel %vm2548, %v3297, %v3358
    %v3360 = vsel %vm2550, %v3298, %v3359
    %v3361 = vsel %vm2552, %v3299, %v3360
    %v3362 = vsel %vm2554, %v3300, %v3361
    %v3363 = vsel %vm2542, %v3302, %v3301
    %v3364 = vsel %vm2544, %v3303, %v3363
    %v3365 = vsel %vm2546, %v3304, %v3364
    %v3366 = vsel %vm2548, %v3305, %v3365
    %v3367 = vsel %vm2550, %v3306, %v3366
    %v3368 = vsel %vm2552, %v3307, %v3367
    %v3369 = vsel %vm2554, %v3308, %v3368
    %v3370 = vsel %vm2542, %v3310, %v3309
    %v3371 = vsel %vm2544, %v3311, %v3370
    %v3372 = vsel %vm2546, %v3312, %v3371
    %v3373 = vsel %vm2548, %v3313, %v3372
    %v3374 = vsel %vm2550, %v3314, %v3373
    %v3375 = vsel %vm2552, %v3315, %v3374
    %v3376 = vsel %vm2554, %v3316, %v3375
    %v3377 = vsel %vm2542, %v3318, %v3317
    %v3378 = vsel %vm2544, %v3319, %v3377
    %v3379 = vsel %vm2546, %v3320, %v3378
    %v3380 = vsel %vm2548, %v3321, %v3379
    %v3381 = vsel %vm2550, %v3322, %v3380
    %v3382 = vsel %vm2552, %v3323, %v3381
    %v3383 = vsel %vm2554, %v3324, %v3382
    %v3384 = vsel %vm2542, %v3326, %v3325
    %v3385 = vsel %vm2544, %v3327, %v3384
    %v3386 = vsel %vm2546, %v3328, %v3385
    %v3387 = vsel %vm2548, %v3329, %v3386
    %v3388 = vsel %vm2550, %v3330, %v3387
    %v3389 = vsel %vm2552, %v3331, %v3388
    %v3390 = vsel %vm2554, %v3332, %v3389
    %v3391 = vsel %vm2542, %v3334, %v3333
    %v3392 = vsel %vm2544, %v3335, %v3391
    %v3393 = vsel %vm2546, %v3336, %v3392
    %v3394 = vsel %vm2548, %v3337, %v3393
    %v3395 = vsel %vm2550, %v3338, %v3394
    %v3396 = vsel %vm2552, %v3339, %v3395
    %v3397 = vsel %vm2554, %v3340, %v3396
    %v3398 = vsel %vm2542, %v3342, %v3341
    %v3399 = vsel %vm2544, %v3343, %v3398
    %v3400 = vsel %vm2546, %v3344, %v3399
    %v3401 = vsel %vm2548, %v3345, %v3400
    %v3402 = vsel %vm2550, %v3346, %v3401
    %v3403 = vsel %vm2552, %v3347, %v3402
    %v3404 = vsel %vm2554, %v3348, %v3403
    %v3413 = vsel %vm146, %v3355, 0.0
    %3414 = vadd.xlane.f32.xlu0 %v3413
    %v3415 = vpop.xlane.xlu0 %3414
    %v3416 = vsel %vm146, %v3362, 0.0
    %3417 = vadd.xlane.f32.xlu0 %v3416
    %v3418 = vpop.xlane.xlu0 %3417
    %v3419 = vsel %vm146, %v3369, 0.0
    %3420 = vadd.xlane.f32.xlu0 %v3419
    %v3421 = vpop.xlane.xlu0 %3420
    %v3422 = vsel %vm146, %v3376, 0.0
    %3423 = vadd.xlane.f32.xlu0 %v3422
    %v3424 = vpop.xlane.xlu0 %3423
    %v3425 = vsel %vm146, %v3383, 0.0
    %3426 = vadd.xlane.f32.xlu0 %v3425
    %v3427 = vpop.xlane.xlu0 %3426
    %v3428 = vsel %vm146, %v3390, 0.0
    %3429 = vadd.xlane.f32.xlu0 %v3428
    %v3430 = vpop.xlane.xlu0 %3429
    %v3431 = vsel %vm146, %v3397, 0.0
    %3432 = vadd.xlane.f32.xlu0 %v3431
    %v3433 = vpop.xlane.xlu0 %3432
    %v3434 = vsel %vm146, %v3404, 0.0
    %3435 = vadd.xlane.f32.xlu0 %v3434
    %v3436 = vpop.xlane.xlu0 %3435
    %v3437 = vrcp.pop %v3415
    %v3438 = vrcp.pop %v3418
    %v3439 = vrcp.pop %v3421
    %v3440 = vrcp.pop %v3424
    %v3441 = vrcp.pop %v3427
    %v3442 = vrcp.pop %v3430
    %v3443 = vrcp.pop %v3433
    %v3444 = vrcp.pop %v3436
    %v3445 = vmul.f32 %v3415, %v3437
    %v3446 = vmul.f32 %v3418, %v3438
    %v3447 = vmul.f32 %v3421, %v3439
    %v3448 = vmul.f32 %v3424, %v3440
    %v3449 = vmul.f32 %v3427, %v3441
    %v3450 = vmul.f32 %v3430, %v3442
    %v3451 = vmul.f32 %v3433, %v3443
    %v3452 = vmul.f32 %v3436, %v3444
    %v3453 = vsub.f32 2.0, %v3445
    %v3454 = vsub.f32 2.0, %v3446
    %v3455 = vsub.f32 2.0, %v3447
    %v3456 = vsub.f32 2.0, %v3448
    %v3457 = vsub.f32 2.0, %v3449
    %v3458 = vsub.f32 2.0, %v3450
    %v3459 = vsub.f32 2.0, %v3451
    %v3460 = vsub.f32 2.0, %v3452
    %v3461 = vmul.f32 %v3437, %v3453
    %v3462 = vmul.f32 %v3438, %v3454
    %v3463 = vmul.f32 %v3439, %v3455
    %v3464 = vmul.f32 %v3440, %v3456
    %v3465 = vmul.f32 %v3441, %v3457
    %v3466 = vmul.f32 %v3442, %v3458
    %v3467 = vmul.f32 %v3443, %v3459
    %v3468 = vmul.f32 %v3444, %v3460
    %v3477 = vperm.slane %v3461, 0
    %v3478 = vperm.slane %v3461, 1
    %v3479 = vperm.slane %v3461, 2
    %v3480 = vperm.slane %v3461, 3
    %v3481 = vperm.slane %v3461, 4
    %v3482 = vperm.slane %v3461, 5
    %v3483 = vperm.slane %v3461, 6
    %v3484 = vperm.slane %v3461, 7
    %v3485 = vperm.slane %v3462, 0
    %v3486 = vperm.slane %v3462, 1
    %v3487 = vperm.slane %v3462, 2
    %v3488 = vperm.slane %v3462, 3
    %v3489 = vperm.slane %v3462, 4
    %v3490 = vperm.slane %v3462, 5
    %v3491 = vperm.slane %v3462, 6
    %v3492 = vperm.slane %v3462, 7
    %v3493 = vperm.slane %v3463, 0
    %v3494 = vperm.slane %v3463, 1
    %v3495 = vperm.slane %v3463, 2
    %v3496 = vperm.slane %v3463, 3
    %v3497 = vperm.slane %v3463, 4
    %v3498 = vperm.slane %v3463, 5
    %v3499 = vperm.slane %v3463, 6
    %v3500 = vperm.slane %v3463, 7
    %v3501 = vperm.slane %v3464, 0
    %v3502 = vperm.slane %v3464, 1
    %v3503 = vperm.slane %v3464, 2
    %v3504 = vperm.slane %v3464, 3
    %v3505 = vperm.slane %v3464, 4
    %v3506 = vperm.slane %v3464, 5
    %v3507 = vperm.slane %v3464, 6
    %v3508 = vperm.slane %v3464, 7
    %v3509 = vperm.slane %v3465, 0
    %v3510 = vperm.slane %v3465, 1
    %v3511 = vperm.slane %v3465, 2
    %v3512 = vperm.slane %v3465, 3
    %v3513 = vperm.slane %v3465, 4
    %v3514 = vperm.slane %v3465, 5
    %v3515 = vperm.slane %v3465, 6
    %v3516 = vperm.slane %v3465, 7
    %v3517 = vperm.slane %v3466, 0
    %v3518 = vperm.slane %v3466, 1
    %v3519 = vperm.slane %v3466, 2
    %v3520 = vperm.slane %v3466, 3
    %v3521 = vperm.slane %v3466, 4
    %v3522 = vperm.slane %v3466, 5
    %v3523 = vperm.slane %v3466, 6
    %v3524 = vperm.slane %v3466, 7
    %v3525 = vperm.slane %v3467, 0
    %v3526 = vperm.slane %v3467, 1
    %v3527 = vperm.slane %v3467, 2
    %v3528 = vperm.slane %v3467, 3
    %v3529 = vperm.slane %v3467, 4
    %v3530 = vperm.slane %v3467, 5
    %v3531 = vperm.slane %v3467, 6
    %v3532 = vperm.slane %v3467, 7
    %v3533 = vperm.slane %v3468, 0
    %v3534 = vperm.slane %v3468, 1
    %v3535 = vperm.slane %v3468, 2
    %v3536 = vperm.slane %v3468, 3
    %v3537 = vperm.slane %v3468, 4
    %v3538 = vperm.slane %v3468, 5
    %v3539 = vperm.slane %v3468, 6
    %v3540 = vperm.slane %v3468, 7
    %v3605 = vmul.f32 %v2965, %v3477
    %v3606 = vmul.f32 %v2966, %v3478
    %v3607 = vmul.f32 %v2967, %v3479
    %v3608 = vmul.f32 %v2968, %v3480
    %v3609 = vmul.f32 %v2969, %v3481
    %v3610 = vmul.f32 %v2970, %v3482
    %v3611 = vmul.f32 %v2971, %v3483
    %v3612 = vmul.f32 %v2972, %v3484
    %v3613 = vmul.f32 %v2973, %v3485
    %v3614 = vmul.f32 %v2974, %v3486
    %v3615 = vmul.f32 %v2975, %v3487
    %v3616 = vmul.f32 %v2976, %v3488
    %v3617 = vmul.f32 %v2977, %v3489
    %v3618 = vmul.f32 %v2978, %v3490
    %v3619 = vmul.f32 %v2979, %v3491
    %v3620 = vmul.f32 %v2980, %v3492
    %v3621 = vmul.f32 %v2981, %v3493
    %v3622 = vmul.f32 %v2982, %v3494
    %v3623 = vmul.f32 %v2983, %v3495
    %v3624 = vmul.f32 %v2984, %v3496
    %v3625 = vmul.f32 %v2985, %v3497
    %v3626 = vmul.f32 %v2986, %v3498
    %v3627 = vmul.f32 %v2987, %v3499
    %v3628 = vmul.f32 %v2988, %v3500
    %v3629 = vmul.f32 %v2989, %v3501
    %v3630 = vmul.f32 %v2990, %v3502
    %v3631 = vmul.f32 %v2991, %v3503
    %v3632 = vmul.f32 %v2992, %v3504
    %v3633 = vmul.f32 %v2993, %v3505
    %v3634 = vmul.f32 %v2994, %v3506
    %v3635 = vmul.f32 %v2995, %v3507
    %v3636 = vmul.f32 %v2996, %v3508
    %v3637 = vmul.f32 %v2997, %v3509
    %v3638 = vmul.f32 %v2998, %v3510
    %v3639 = vmul.f32 %v2999, %v3511
    %v3640 = vmul.f32 %v3000, %v3512
    %v3641 = vmul.f32 %v3001, %v3513
    %v3642 = vmul.f32 %v3002, %v3514
    %v3643 = vmul.f32 %v3003, %v3515
    %v3644 = vmul.f32 %v3004, %v3516
    %v3645 = vmul.f32 %v3005, %v3517
    %v3646 = vmul.f32 %v3006, %v3518
    %v3647 = vmul.f32 %v3007, %v3519
    %v3648 = vmul.f32 %v3008, %v3520
    %v3649 = vmul.f32 %v3009, %v3521
    %v3650 = vmul.f32 %v3010, %v3522
    %v3651 = vmul.f32 %v3011, %v3523
    %v3652 = vmul.f32 %v3012, %v3524
    %v3653 = vmul.f32 %v3013, %v3525
    %v3654 = vmul.f32 %v3014, %v3526
    %v3655 = vmul.f32 %v3015, %v3527
    %v3656 = vmul.f32 %v3016, %v3528
    %v3657 = vmul.f32 %v3017, %v3529
    %v3658 = vmul.f32 %v3018, %v3530
    %v3659 = vmul.f32 %v3019, %v3531
    %v3660 = vmul.f32 %v3020, %v3532
    %v3661 = vmul.f32 %v3021, %v3533
    %v3662 = vmul.f32 %v3022, %v3534
    %v3663 = vmul.f32 %v3023, %v3535
    %v3664 = vmul.f32 %v3024, %v3536
    %v3665 = vmul.f32 %v3025, %v3537
    %v3666 = vmul.f32 %v3026, %v3538
    %v3667 = vmul.f32 %v3027, %v3539
    %v3668 = vmul.f32 %v3028, %v3540
    %3677 = vset.pattern.permute.xlu0 0
    %3678 = vperm.xlu0 %3677, %v3605
    %v3679 = vpop.permute.xlu0 %3678
    %3680 = vset.pattern.permute.xlu0 0
    %3681 = vperm.xlu0 %3680, %v3606
    %v3682 = vpop.permute.xlu0 %3681
    %3683 = vset.pattern.permute.xlu0 0
    %3684 = vperm.xlu0 %3683, %v3607
    %v3685 = vpop.permute.xlu0 %3684
    %3686 = vset.pattern.permute.xlu0 0
    %3687 = vperm.xlu0 %3686, %v3608
    %v3688 = vpop.permute.xlu0 %3687
    %3689 = vset.pattern.permute.xlu0 0
    %3690 = vperm.xlu0 %3689, %v3609
    %v3691 = vpop.permute.xlu0 %3690
    %3692 = vset.pattern.permute.xlu0 0
    %3693 = vperm.xlu0 %3692, %v3610
    %v3694 = vpop.permute.xlu0 %3693
    %3695 = vset.pattern.permute.xlu0 0
    %3696 = vperm.xlu0 %3695, %v3611
    %v3697 = vpop.permute.xlu0 %3696
    %3698 = vset.pattern.permute.xlu0 0
    %3699 = vperm.xlu0 %3698, %v3612
    %v3700 = vpop.permute.xlu0 %3699
    %v3701 = vperm.slane %v3679, %v880
    %v3702 = vperm.slane %v3682, %v880
    %v3703 = vperm.slane %v3685, %v880
    %v3704 = vperm.slane %v3688, %v880
    %v3705 = vperm.slane %v3691, %v880
    %v3706 = vperm.slane %v3694, %v880
    %v3707 = vperm.slane %v3697, %v880
    %v3708 = vperm.slane %v3700, %v880
    %v3709 = vsel %vm2542, %v3702, %v3701
    %v3710 = vsel %vm2544, %v3703, %v3709
    %v3711 = vsel %vm2546, %v3704, %v3710
    %v3712 = vsel %vm2548, %v3705, %v3711
    %v3713 = vsel %vm2550, %v3706, %v3712
    %v3714 = vsel %vm2552, %v3707, %v3713
    %v3715 = vsel %vm2554, %v3708, %v3714
    %v3716 = vsel %vm146, %v3715, 0
    %3718 = vmatpush.msra.mxu0 0.0
    %3719 = vmatpush.msra.mxu0 0.0
    %3720 = vmatpush.msra.mxu0 0.0
    %3721 = vmatpush.msra.mxu0 0.0
    %3722 = vmatpush.msra.mxu0 0.0
    %3723 = vmatpush.msra.mxu0 0.0
    %3724 = vmatpush.msra.mxu0 0.0
    %3725 = vmatpush.msra.mxu0 0.0
    %3726 = vmatpush.msra.mxu0 0.0
    %3727 = vmatpush.msra.mxu0 0.0
    %3728 = vmatpush.msra.mxu0 0.0
    %3729 = vmatpush.msra.mxu0 0.0
    %3730 = vmatpush.msra.mxu0 0.0
    %3731 = vmatpush.msra.mxu0 0.0
    %3732 = vmatpush.msra.mxu0 0.0
    %3733 = vmatpush.msra.mxu0 %v77
    %3734 = vmatmul.f32.gmra.mxu0 %v3716
    %v3735 = vpop.f32.mrf.mxu0
    %v3736 = vadd.f32 0.0, %v3735
    %3737 = vdwg.mxu0
    %3746 = vset.pattern.permute.xlu0 0
    %3747 = vperm.xlu0 %3746, %v3613
    %v3748 = vpop.permute.xlu0 %3747
    %3749 = vset.pattern.permute.xlu0 0
    %3750 = vperm.xlu0 %3749, %v3614
    %v3751 = vpop.permute.xlu0 %3750
    %3752 = vset.pattern.permute.xlu0 0
    %3753 = vperm.xlu0 %3752, %v3615
    %v3754 = vpop.permute.xlu0 %3753
    %3755 = vset.pattern.permute.xlu0 0
    %3756 = vperm.xlu0 %3755, %v3616
    %v3757 = vpop.permute.xlu0 %3756
    %3758 = vset.pattern.permute.xlu0 0
    %3759 = vperm.xlu0 %3758, %v3617
    %v3760 = vpop.permute.xlu0 %3759
    %3761 = vset.pattern.permute.xlu0 0
    %3762 = vperm.xlu0 %3761, %v3618
    %v3763 = vpop.permute.xlu0 %3762
    %3764 = vset.pattern.permute.xlu0 0
    %3765 = vperm.xlu0 %3764, %v3619
    %v3766 = vpop.permute.xlu0 %3765
    %3767 = vset.pattern.permute.xlu0 0
    %3768 = vperm.xlu0 %3767, %v3620
    %v3769 = vpop.permute.xlu0 %3768
    %v3770 = vperm.slane %v3748, %v880
    %v3771 = vperm.slane %v3751, %v880
    %v3772 = vperm.slane %v3754, %v880
    %v3773 = vperm.slane %v3757, %v880
    %v3774 = vperm.slane %v3760, %v880
    %v3775 = vperm.slane %v3763, %v880
    %v3776 = vperm.slane %v3766, %v880
    %v3777 = vperm.slane %v3769, %v880
    %v3778 = vsel %vm2542, %v3771, %v3770
    %v3779 = vsel %vm2544, %v3772, %v3778
    %v3780 = vsel %vm2546, %v3773, %v3779
    %v3781 = vsel %vm2548, %v3774, %v3780
    %v3782 = vsel %vm2550, %v3775, %v3781
    %v3783 = vsel %vm2552, %v3776, %v3782
    %v3784 = vsel %vm2554, %v3777, %v3783
    %v3785 = vsel %vm146, %v3784, 0
    %3787 = vmatpush.msra.mxu0 0.0
    %3788 = vmatpush.msra.mxu0 0.0
    %3789 = vmatpush.msra.mxu0 0.0
    %3790 = vmatpush.msra.mxu0 0.0
    %3791 = vmatpush.msra.mxu0 0.0
    %3792 = vmatpush.msra.mxu0 0.0
    %3793 = vmatpush.msra.mxu0 0.0
    %3794 = vmatpush.msra.mxu0 0.0
    %3795 = vmatpush.msra.mxu0 0.0
    %3796 = vmatpush.msra.mxu0 0.0
    %3797 = vmatpush.msra.mxu0 0.0
    %3798 = vmatpush.msra.mxu0 0.0
    %3799 = vmatpush.msra.mxu0 0.0
    %3800 = vmatpush.msra.mxu0 0.0
    %3801 = vmatpush.msra.mxu0 0.0
    %3802 = vmatpush.msra.mxu0 %v80
    %3803 = vmatmul.f32.gmra.mxu0 %v3785
    %v3804 = vpop.f32.mrf.mxu0
    %v3805 = vadd.f32 0.0, %v3804
    %3806 = vdwg.mxu0
    %3815 = vset.pattern.permute.xlu0 0
    %3816 = vperm.xlu0 %3815, %v3621
    %v3817 = vpop.permute.xlu0 %3816
    %3818 = vset.pattern.permute.xlu0 0
    %3819 = vperm.xlu0 %3818, %v3622
    %v3820 = vpop.permute.xlu0 %3819
    %3821 = vset.pattern.permute.xlu0 0
    %3822 = vperm.xlu0 %3821, %v3623
    %v3823 = vpop.permute.xlu0 %3822
    %3824 = vset.pattern.permute.xlu0 0
    %3825 = vperm.xlu0 %3824, %v3624
    %v3826 = vpop.permute.xlu0 %3825
    %3827 = vset.pattern.permute.xlu0 0
    %3828 = vperm.xlu0 %3827, %v3625
    %v3829 = vpop.permute.xlu0 %3828
    %3830 = vset.pattern.permute.xlu0 0
    %3831 = vperm.xlu0 %3830, %v3626
    %v3832 = vpop.permute.xlu0 %3831
    %3833 = vset.pattern.permute.xlu0 0
    %3834 = vperm.xlu0 %3833, %v3627
    %v3835 = vpop.permute.xlu0 %3834
    %3836 = vset.pattern.permute.xlu0 0
    %3837 = vperm.xlu0 %3836, %v3628
    %v3838 = vpop.permute.xlu0 %3837
    %v3839 = vperm.slane %v3817, %v880
    %v3840 = vperm.slane %v3820, %v880
    %v3841 = vperm.slane %v3823, %v880
    %v3842 = vperm.slane %v3826, %v880
    %v3843 = vperm.slane %v3829, %v880
    %v3844 = vperm.slane %v3832, %v880
    %v3845 = vperm.slane %v3835, %v880
    %v3846 = vperm.slane %v3838, %v880
    %v3847 = vsel %vm2542, %v3840, %v3839
    %v3848 = vsel %vm2544, %v3841, %v3847
    %v3849 = vsel %vm2546, %v3842, %v3848
    %v3850 = vsel %vm2548, %v3843, %v3849
    %v3851 = vsel %vm2550, %v3844, %v3850
    %v3852 = vsel %vm2552, %v3845, %v3851
    %v3853 = vsel %vm2554, %v3846, %v3852
    %v3854 = vsel %vm146, %v3853, 0
    %3856 = vmatpush.msra.mxu0 0.0
    %3857 = vmatpush.msra.mxu0 0.0
    %3858 = vmatpush.msra.mxu0 0.0
    %3859 = vmatpush.msra.mxu0 0.0
    %3860 = vmatpush.msra.mxu0 0.0
    %3861 = vmatpush.msra.mxu0 0.0
    %3862 = vmatpush.msra.mxu0 0.0
    %3863 = vmatpush.msra.mxu0 0.0
    %3864 = vmatpush.msra.mxu0 0.0
    %3865 = vmatpush.msra.mxu0 0.0
    %3866 = vmatpush.msra.mxu0 0.0
    %3867 = vmatpush.msra.mxu0 0.0
    %3868 = vmatpush.msra.mxu0 0.0
    %3869 = vmatpush.msra.mxu0 0.0
    %3870 = vmatpush.msra.mxu0 0.0
    %3871 = vmatpush.msra.mxu0 %v97
    %3872 = vmatmul.f32.gmra.mxu0 %v3854
    %v3873 = vpop.f32.mrf.mxu0
    %v3874 = vadd.f32 0.0, %v3873
    %3875 = vdwg.mxu0
    %3884 = vset.pattern.permute.xlu0 0
    %3885 = vperm.xlu0 %3884, %v3629
    %v3886 = vpop.permute.xlu0 %3885
    %3887 = vset.pattern.permute.xlu0 0
    %3888 = vperm.xlu0 %3887, %v3630
    %v3889 = vpop.permute.xlu0 %3888
    %3890 = vset.pattern.permute.xlu0 0
    %3891 = vperm.xlu0 %3890, %v3631
    %v3892 = vpop.permute.xlu0 %3891
    %3893 = vset.pattern.permute.xlu0 0
    %3894 = vperm.xlu0 %3893, %v3632
    %v3895 = vpop.permute.xlu0 %3894
    %3896 = vset.pattern.permute.xlu0 0
    %3897 = vperm.xlu0 %3896, %v3633
    %v3898 = vpop.permute.xlu0 %3897
    %3899 = vset.pattern.permute.xlu0 0
    %3900 = vperm.xlu0 %3899, %v3634
    %v3901 = vpop.permute.xlu0 %3900
    %3902 = vset.pattern.permute.xlu0 0
    %3903 = vperm.xlu0 %3902, %v3635
    %v3904 = vpop.permute.xlu0 %3903
    %3905 = vset.pattern.permute.xlu0 0
    %3906 = vperm.xlu0 %3905, %v3636
    %v3907 = vpop.permute.xlu0 %3906
    %v3908 = vperm.slane %v3886, %v880
    %v3909 = vperm.slane %v3889, %v880
    %v3910 = vperm.slane %v3892, %v880
    %v3911 = vperm.slane %v3895, %v880
    %v3912 = vperm.slane %v3898, %v880
    %v3913 = vperm.slane %v3901, %v880
    %v3914 = vperm.slane %v3904, %v880
    %v3915 = vperm.slane %v3907, %v880
    %v3916 = vsel %vm2542, %v3909, %v3908
    %v3917 = vsel %vm2544, %v3910, %v3916
    %v3918 = vsel %vm2546, %v3911, %v3917
    %v3919 = vsel %vm2548, %v3912, %v3918
    %v3920 = vsel %vm2550, %v3913, %v3919
    %v3921 = vsel %vm2552, %v3914, %v3920
    %v3922 = vsel %vm2554, %v3915, %v3921
    %v3923 = vsel %vm146, %v3922, 0
    %3925 = vmatpush.msra.mxu0 0.0
    %3926 = vmatpush.msra.mxu0 0.0
    %3927 = vmatpush.msra.mxu0 0.0
    %3928 = vmatpush.msra.mxu0 0.0
    %3929 = vmatpush.msra.mxu0 0.0
    %3930 = vmatpush.msra.mxu0 0.0
    %3931 = vmatpush.msra.mxu0 0.0
    %3932 = vmatpush.msra.mxu0 0.0
    %3933 = vmatpush.msra.mxu0 0.0
    %3934 = vmatpush.msra.mxu0 0.0
    %3935 = vmatpush.msra.mxu0 0.0
    %3936 = vmatpush.msra.mxu0 0.0
    %3937 = vmatpush.msra.mxu0 0.0
    %3938 = vmatpush.msra.mxu0 0.0
    %3939 = vmatpush.msra.mxu0 0.0
    %3940 = vmatpush.msra.mxu0 %v99
    %3941 = vmatmul.f32.gmra.mxu0 %v3923
    %v3942 = vpop.f32.mrf.mxu0
    %v3943 = vadd.f32 0.0, %v3942
    %3944 = vdwg.mxu0
    %3953 = vset.pattern.permute.xlu0 0
    %3954 = vperm.xlu0 %3953, %v3637
    %v3955 = vpop.permute.xlu0 %3954
    %3956 = vset.pattern.permute.xlu0 0
    %3957 = vperm.xlu0 %3956, %v3638
    %v3958 = vpop.permute.xlu0 %3957
    %3959 = vset.pattern.permute.xlu0 0
    %3960 = vperm.xlu0 %3959, %v3639
    %v3961 = vpop.permute.xlu0 %3960
    %3962 = vset.pattern.permute.xlu0 0
    %3963 = vperm.xlu0 %3962, %v3640
    %v3964 = vpop.permute.xlu0 %3963
    %3965 = vset.pattern.permute.xlu0 0
    %3966 = vperm.xlu0 %3965, %v3641
    %v3967 = vpop.permute.xlu0 %3966
    %3968 = vset.pattern.permute.xlu0 0
    %3969 = vperm.xlu0 %3968, %v3642
    %v3970 = vpop.permute.xlu0 %3969
    %3971 = vset.pattern.permute.xlu0 0
    %3972 = vperm.xlu0 %3971, %v3643
    %v3973 = vpop.permute.xlu0 %3972
    %3974 = vset.pattern.permute.xlu0 0
    %3975 = vperm.xlu0 %3974, %v3644
    %v3976 = vpop.permute.xlu0 %3975
    %v3977 = vperm.slane %v3955, %v880
    %v3978 = vperm.slane %v3958, %v880
    %v3979 = vperm.slane %v3961, %v880
    %v3980 = vperm.slane %v3964, %v880
    %v3981 = vperm.slane %v3967, %v880
    %v3982 = vperm.slane %v3970, %v880
    %v3983 = vperm.slane %v3973, %v880
    %v3984 = vperm.slane %v3976, %v880
    %v3985 = vsel %vm2542, %v3978, %v3977
    %v3986 = vsel %vm2544, %v3979, %v3985
    %v3987 = vsel %vm2546, %v3980, %v3986
    %v3988 = vsel %vm2548, %v3981, %v3987
    %v3989 = vsel %vm2550, %v3982, %v3988
    %v3990 = vsel %vm2552, %v3983, %v3989
    %v3991 = vsel %vm2554, %v3984, %v3990
    %v3992 = vsel %vm146, %v3991, 0
    %3994 = vmatpush.msra.mxu0 0.0
    %3995 = vmatpush.msra.mxu0 0.0
    %3996 = vmatpush.msra.mxu0 0.0
    %3997 = vmatpush.msra.mxu0 0.0
    %3998 = vmatpush.msra.mxu0 0.0
    %3999 = vmatpush.msra.mxu0 0.0
    %4000 = vmatpush.msra.mxu0 0.0
    %4001 = vmatpush.msra.mxu0 0.0
    %4002 = vmatpush.msra.mxu0 0.0
    %4003 = vmatpush.msra.mxu0 0.0
    %4004 = vmatpush.msra.mxu0 0.0
    %4005 = vmatpush.msra.mxu0 0.0
    %4006 = vmatpush.msra.mxu0 0.0
    %4007 = vmatpush.msra.mxu0 0.0
    %4008 = vmatpush.msra.mxu0 0.0
    %4009 = vmatpush.msra.mxu0 %v103
    %4010 = vmatmul.f32.gmra.mxu0 %v3992
    %v4011 = vpop.f32.mrf.mxu0
    %v4012 = vadd.f32 0.0, %v4011
    %4013 = vdwg.mxu0
    %4022 = vset.pattern.permute.xlu0 0
    %4023 = vperm.xlu0 %4022, %v3645
    %v4024 = vpop.permute.xlu0 %4023
    %4025 = vset.pattern.permute.xlu0 0
    %4026 = vperm.xlu0 %4025, %v3646
    %v4027 = vpop.permute.xlu0 %4026
    %4028 = vset.pattern.permute.xlu0 0
    %4029 = vperm.xlu0 %4028, %v3647
    %v4030 = vpop.permute.xlu0 %4029
    %4031 = vset.pattern.permute.xlu0 0
    %4032 = vperm.xlu0 %4031, %v3648
    %v4033 = vpop.permute.xlu0 %4032
    %4034 = vset.pattern.permute.xlu0 0
    %4035 = vperm.xlu0 %4034, %v3649
    %v4036 = vpop.permute.xlu0 %4035
    %4037 = vset.pattern.permute.xlu0 0
    %4038 = vperm.xlu0 %4037, %v3650
    %v4039 = vpop.permute.xlu0 %4038
    %4040 = vset.pattern.permute.xlu0 0
    %4041 = vperm.xlu0 %4040, %v3651
    %v4042 = vpop.permute.xlu0 %4041
    %4043 = vset.pattern.permute.xlu0 0
    %4044 = vperm.xlu0 %4043, %v3652
    %v4045 = vpop.permute.xlu0 %4044
    %v4046 = vperm.slane %v4024, %v880
    %v4047 = vperm.slane %v4027, %v880
    %v4048 = vperm.slane %v4030, %v880
    %v4049 = vperm.slane %v4033, %v880
    %v4050 = vperm.slane %v4036, %v880
    %v4051 = vperm.slane %v4039, %v880
    %v4052 = vperm.slane %v4042, %v880
    %v4053 = vperm.slane %v4045, %v880
    %v4054 = vsel %vm2542, %v4047, %v4046
    %v4055 = vsel %vm2544, %v4048, %v4054
    %v4056 = vsel %vm2546, %v4049, %v4055
    %v4057 = vsel %vm2548, %v4050, %v4056
    %v4058 = vsel %vm2550, %v4051, %v4057
    %v4059 = vsel %vm2552, %v4052, %v4058
    %v4060 = vsel %vm2554, %v4053, %v4059
    %v4061 = vsel %vm146, %v4060, 0
    %4063 = vmatpush.msra.mxu0 0.0
    %4064 = vmatpush.msra.mxu0 0.0
    %4065 = vmatpush.msra.mxu0 0.0
    %4066 = vmatpush.msra.mxu0 0.0
    %4067 = vmatpush.msra.mxu0 0.0
    %4068 = vmatpush.msra.mxu0 0.0
    %4069 = vmatpush.msra.mxu0 0.0
    %4070 = vmatpush.msra.mxu0 0.0
    %4071 = vmatpush.msra.mxu0 0.0
    %4072 = vmatpush.msra.mxu0 0.0
    %4073 = vmatpush.msra.mxu0 0.0
    %4074 = vmatpush.msra.mxu0 0.0
    %4075 = vmatpush.msra.mxu0 0.0
    %4076 = vmatpush.msra.mxu0 0.0
    %4077 = vmatpush.msra.mxu0 0.0
    %4078 = vmatpush.msra.mxu0 %v105
    %4079 = vmatmul.f32.gmra.mxu0 %v4061
    %v4080 = vpop.f32.mrf.mxu0
    %v4081 = vadd.f32 0.0, %v4080
    %4082 = vdwg.mxu0
    %4091 = vset.pattern.permute.xlu0 0
    %4092 = vperm.xlu0 %4091, %v3653
    %v4093 = vpop.permute.xlu0 %4092
    %4094 = vset.pattern.permute.xlu0 0
    %4095 = vperm.xlu0 %4094, %v3654
    %v4096 = vpop.permute.xlu0 %4095
    %4097 = vset.pattern.permute.xlu0 0
    %4098 = vperm.xlu0 %4097, %v3655
    %v4099 = vpop.permute.xlu0 %4098
    %4100 = vset.pattern.permute.xlu0 0
    %4101 = vperm.xlu0 %4100, %v3656
    %v4102 = vpop.permute.xlu0 %4101
    %4103 = vset.pattern.permute.xlu0 0
    %4104 = vperm.xlu0 %4103, %v3657
    %v4105 = vpop.permute.xlu0 %4104
    %4106 = vset.pattern.permute.xlu0 0
    %4107 = vperm.xlu0 %4106, %v3658
    %v4108 = vpop.permute.xlu0 %4107
    %4109 = vset.pattern.permute.xlu0 0
    %4110 = vperm.xlu0 %4109, %v3659
    %v4111 = vpop.permute.xlu0 %4110
    %4112 = vset.pattern.permute.xlu0 0
    %4113 = vperm.xlu0 %4112, %v3660
    %v4114 = vpop.permute.xlu0 %4113
    %v4115 = vperm.slane %v4093, %v880
    %v4116 = vperm.slane %v4096, %v880
    %v4117 = vperm.slane %v4099, %v880
    %v4118 = vperm.slane %v4102, %v880
    %v4119 = vperm.slane %v4105, %v880
    %v4120 = vperm.slane %v4108, %v880
    %v4121 = vperm.slane %v4111, %v880
    %v4122 = vperm.slane %v4114, %v880
    %v4123 = vsel %vm2542, %v4116, %v4115
    %v4124 = vsel %vm2544, %v4117, %v4123
    %v4125 = vsel %vm2546, %v4118, %v4124
    %v4126 = vsel %vm2548, %v4119, %v4125
    %v4127 = vsel %vm2550, %v4120, %v4126
    %v4128 = vsel %vm2552, %v4121, %v4127
    %v4129 = vsel %vm2554, %v4122, %v4128
    %v4130 = vsel %vm146, %v4129, 0
    %4132 = vmatpush.msra.mxu0 0.0
    %4133 = vmatpush.msra.mxu0 0.0
    %4134 = vmatpush.msra.mxu0 0.0
    %4135 = vmatpush.msra.mxu0 0.0
    %4136 = vmatpush.msra.mxu0 0.0
    %4137 = vmatpush.msra.mxu0 0.0
    %4138 = vmatpush.msra.mxu0 0.0
    %4139 = vmatpush.msra.mxu0 0.0
    %4140 = vmatpush.msra.mxu0 0.0
    %4141 = vmatpush.msra.mxu0 0.0
    %4142 = vmatpush.msra.mxu0 0.0
    %4143 = vmatpush.msra.mxu0 0.0
    %4144 = vmatpush.msra.mxu0 0.0
    %4145 = vmatpush.msra.mxu0 0.0
    %4146 = vmatpush.msra.mxu0 0.0
    %4147 = vmatpush.msra.mxu0 %v109
    %4148 = vmatmul.f32.gmra.mxu0 %v4130
    %v4149 = vpop.f32.mrf.mxu0
    %v4150 = vadd.f32 0.0, %v4149
    %4151 = vdwg.mxu0
    %4160 = vset.pattern.permute.xlu0 0
    %4161 = vperm.xlu0 %4160, %v3661
    %v4162 = vpop.permute.xlu0 %4161
    %4163 = vset.pattern.permute.xlu0 0
    %4164 = vperm.xlu0 %4163, %v3662
    %v4165 = vpop.permute.xlu0 %4164
    %4166 = vset.pattern.permute.xlu0 0
    %4167 = vperm.xlu0 %4166, %v3663
    %v4168 = vpop.permute.xlu0 %4167
    %4169 = vset.pattern.permute.xlu0 0
    %4170 = vperm.xlu0 %4169, %v3664
    %v4171 = vpop.permute.xlu0 %4170
    %4172 = vset.pattern.permute.xlu0 0
    %4173 = vperm.xlu0 %4172, %v3665
    %v4174 = vpop.permute.xlu0 %4173
    %4175 = vset.pattern.permute.xlu0 0
    %4176 = vperm.xlu0 %4175, %v3666
    %v4177 = vpop.permute.xlu0 %4176
    %4178 = vset.pattern.permute.xlu0 0
    %4179 = vperm.xlu0 %4178, %v3667
    %v4180 = vpop.permute.xlu0 %4179
    %4181 = vset.pattern.permute.xlu0 0
    %4182 = vperm.xlu0 %4181, %v3668
    %v4183 = vpop.permute.xlu0 %4182
    %v4184 = vperm.slane %v4162, %v880
    %v4185 = vperm.slane %v4165, %v880
    %v4186 = vperm.slane %v4168, %v880
    %v4187 = vperm.slane %v4171, %v880
    %v4188 = vperm.slane %v4174, %v880
    %v4189 = vperm.slane %v4177, %v880
    %v4190 = vperm.slane %v4180, %v880
    %v4191 = vperm.slane %v4183, %v880
    %v4192 = vsel %vm2542, %v4185, %v4184
    %v4193 = vsel %vm2544, %v4186, %v4192
    %v4194 = vsel %vm2546, %v4187, %v4193
    %v4195 = vsel %vm2548, %v4188, %v4194
    %v4196 = vsel %vm2550, %v4189, %v4195
    %v4197 = vsel %vm2552, %v4190, %v4196
    %v4198 = vsel %vm2554, %v4191, %v4197
    %v4199 = vsel %vm146, %v4198, 0
    %4201 = vmatpush.msra.mxu0 0.0
    %4202 = vmatpush.msra.mxu0 0.0
    %4203 = vmatpush.msra.mxu0 0.0
    %4204 = vmatpush.msra.mxu0 0.0
    %4205 = vmatpush.msra.mxu0 0.0
    %4206 = vmatpush.msra.mxu0 0.0
    %4207 = vmatpush.msra.mxu0 0.0
    %4208 = vmatpush.msra.mxu0 0.0
    %4209 = vmatpush.msra.mxu0 0.0
    %4210 = vmatpush.msra.mxu0 0.0
    %4211 = vmatpush.msra.mxu0 0.0
    %4212 = vmatpush.msra.mxu0 0.0
    %4213 = vmatpush.msra.mxu0 0.0
    %4214 = vmatpush.msra.mxu0 0.0
    %4215 = vmatpush.msra.mxu0 0.0
    %4216 = vmatpush.msra.mxu0 %v111
    %4217 = vmatmul.f32.gmra.mxu0 %v4199
    %v4218 = vpop.f32.mrf.mxu0
    %v4219 = vadd.f32 0.0, %v4218
    %4220 = vdwg.mxu0
    %4223 = vrot.lane.b32.xlu0 %v3874, 8
    %v4224 = vpop.permute.xlu0 %4223
    %4225 = vrot.lane.b32.xlu0 %v3943, 8
    %v4226 = vpop.permute.xlu0 %4225
    %4231 = vrot.lane.b32.xlu0 %v4012, 16
    %v4232 = vpop.permute.xlu0 %4231
    %4233 = vrot.lane.b32.xlu0 %v4081, 16
    %v4234 = vpop.permute.xlu0 %4233
    %4239 = vrot.lane.b32.xlu0 %v4150, 24
    %v4240 = vpop.permute.xlu0 %4239
    %4241 = vrot.lane.b32.xlu0 %v4219, 24
    %v4242 = vpop.permute.xlu0 %4241
    %v4245 = vsel %vm146, %v3736, %v4224
    %v4246 = vsel %vm146, %v3805, %v4226
    %vm4247 = vcmask 130048
    %v4248 = vsel %vm4247, %v4245, %v4232
    %v4249 = vsel %vm4247, %v4246, %v4234
    %vm4250 = vcmask 195584
    %v4251 = vsel %vm4250, %v4248, %v4240
    %v4252 = vsel %vm4250, %v4249, %v4242
    %v4253 = vld [vmem:[%s7] sm:$0xff]
    %v4254 = vld [vmem:[%s4] sm:$0xff]
    %v4255 = vld [vmem:[%s4 + $0x8] sm:$0xff]
    %v4256 = vld [vmem:[%s4 + $0x10] sm:$0xff]
    %v4257 = vld [vmem:[%s4 + $0x18] sm:$0xff]
    %v4258 = vperm.slane %v4253, 1
    %v4260 = vsel %vm40, %v4251, 0
    %v4263 = vsel %vm40, %v4252, 0
    %4265 = vmatpush.msra.mxu0 0.0
    %4266 = vmatpush.msra.mxu0 0.0
    %4267 = vmatpush.msra.mxu0 0.0
    %4268 = vmatpush.msra.mxu0 0.0
    %4269 = vmatpush.msra.mxu0 0.0
    %4270 = vmatpush.msra.mxu0 0.0
    %4271 = vmatpush.msra.mxu0 0.0
    %4272 = vmatpush.msra.mxu0 0.0
    %4273 = vmatpush.msra.mxu0 0.0
    %4274 = vmatpush.msra.mxu0 0.0
    %4275 = vmatpush.msra.mxu0 0.0
    %4276 = vmatpush.msra.mxu0 0.0
    %4277 = vmatpush.msra.mxu0 %v4257
    %4278 = vmatpush.msra.mxu0 %v4256
    %4279 = vmatpush.msra.mxu0 %v4255
    %4280 = vmatpush.msra.mxu0 %v4254
    %4281 = vmatmul.f32.gmra.mxu0 %v4260
    %v4282 = vpop.f32.mrf.mxu0
    %v4283 = vadd.f32 %v4258, %v4282
    %4284 = vmatmul.f32.gmra.mxu0 %v4263
    %v4285 = vpop.f32.mrf.mxu0
    %v4286 = vadd.f32 %v4258, %v4285
    %4287 = vdwg.mxu0
    %v4288 = vadd.f32 %v4283, %v34
    %v4289 = vadd.f32 %v4286, %v35
    %v4290 = vsel %vm40, %v4288, 0.0
    %4291 = vadd.xlane.f32.xlu0 %v4290
    %v4292 = vpop.xlane.xlu0 %4291
    %v4293 = vsel %vm40, %v4289, 0.0
    %4294 = vadd.xlane.f32.xlu0 %v4293
    %v4295 = vpop.xlane.xlu0 %4294
    %v4296 = vrcp.pop 32.0
    %v4297 = vmul.f32 32.0, %v4296
    %v4298 = vsub.f32 1.0, %v4297
    %v4299 = vmul.f32 %v4296, %v4298
    %v4300 = vadd.f32 %v4296, %v4299
    %vm4301 = vweird.f32 %v4296
    %v4302 = vsel %vm4301, %v4296, %v4300
    %v4303 = vmul.f32 %v4292, %v4302
    %v4304 = vmul.f32 %v4295, %v4302
    %v4305 = vsub.f32 %v4288, %v4303
    %v4306 = vsub.f32 %v4289, %v4304
    %v4307 = vmul.f32 %v4305, %v4305
    %v4308 = vmul.f32 %v4306, %v4306
    %v4309 = vsel %vm40, %v4307, 0.0
    %4310 = vadd.xlane.f32.xlu0 %v4309
    %v4311 = vpop.xlane.xlu0 %4310
    %v4312 = vsel %vm40, %v4308, 0.0
    %4313 = vadd.xlane.f32.xlu0 %v4312
    %v4314 = vpop.xlane.xlu0 %4313
    %v4315 = vmul.f32 %v4311, %v4302
    %v4316 = vmul.f32 %v4314, %v4302
    %v4317 = vadd.f32 %v4315, 1e-05
    %v4318 = vadd.f32 %v4316, 1e-05
    %v4319 = vrsqrt.pop %v4317
    %v4320 = vmul.f32 %v4319, %v4317
    %v4321 = vmul.f32 %v4320, %v4319
    %v4322 = vmul.f32 0.5, %v4321
    %v4323 = vsub.f32 1.5, %v4322
    %v4324 = vmul.f32 %v4319, %v4323
    %vm4325 = vweird.f32 %v4317
    %vm4326 = vweird.f32 %v4319
    %vm4327 = vmor %vm4325, %vm4326
    %v4328 = vsel %vm4327, %v4319, %v4324
    %v4329 = vrsqrt.pop %v4318
    %v4330 = vmul.f32 %v4329, %v4318
    %v4331 = vmul.f32 %v4330, %v4329
    %v4332 = vmul.f32 0.5, %v4331
    %v4333 = vsub.f32 1.5, %v4332
    %v4334 = vmul.f32 %v4329, %v4333
    %vm4335 = vweird.f32 %v4318
    %vm4336 = vweird.f32 %v4329
    %vm4337 = vmor %vm4335, %vm4336
    %v4338 = vsel %vm4337, %v4329, %v4334
    %v4339 = vmul.f32 %v4305, %v4328
    %v4340 = vmul.f32 %v4306, %v4338
    %v4341 = vperm.slane %v4253, 2
    %v4342 = vmul.f32 %v4339, %v4341
    %v4343 = vmul.f32 %v4340, %v4341
    %v4344 = vperm.slane %v4253, 3
    %v4345 = vadd.f32 %v4342, %v4344
    %v4346 = vadd.f32 %v4343, %v4344
    %v4347 = vld [vmem:[%s5] sm:$0xff]
    %v4348 = vld [vmem:[%s5 + $0x8] sm:$0xff]
    %v4349 = vld [vmem:[%s5 + $0x10] sm:$0xff]
    %v4350 = vld [vmem:[%s5 + $0x18] sm:$0xff]
    %v4351 = vperm.slane %v4253, 0
    %v4353 = vsel %vm40, %v4345, 0
    %v4356 = vsel %vm40, %v4346, 0
    %4358 = vmatpush.msra.mxu0 0.0
    %4359 = vmatpush.msra.mxu0 0.0
    %4360 = vmatpush.msra.mxu0 0.0
    %4361 = vmatpush.msra.mxu0 0.0
    %4362 = vmatpush.msra.mxu0 0.0
    %4363 = vmatpush.msra.mxu0 0.0
    %4364 = vmatpush.msra.mxu0 0.0
    %4365 = vmatpush.msra.mxu0 0.0
    %4366 = vmatpush.msra.mxu0 0.0
    %4367 = vmatpush.msra.mxu0 0.0
    %4368 = vmatpush.msra.mxu0 0.0
    %4369 = vmatpush.msra.mxu0 0.0
    %4370 = vmatpush.msra.mxu0 %v4350
    %4371 = vmatpush.msra.mxu0 %v4349
    %4372 = vmatpush.msra.mxu0 %v4348
    %4373 = vmatpush.msra.mxu0 %v4347
    %4374 = vmatmul.f32.gmra.mxu0 %v4353
    %v4375 = vpop.f32.mrf.mxu0
    %v4376 = vadd.f32 %v4351, %v4375
    %4377 = vmatmul.f32.gmra.mxu0 %v4356
    %v4378 = vpop.f32.mrf.mxu0
    %v4379 = vadd.f32 %v4351, %v4378
    %4380 = vdwg.mxu0
    %v4381 = vmax.f32 %v4376, 0.0
    %v4382 = vmax.f32 %v4379, 0.0
    %v4383 = vld [vmem:[%s6] sm:$0xff]
    %v4384 = vld [vmem:[%s6 + $0x8] sm:$0xff]
    %v4385 = vld [vmem:[%s6 + $0x10] sm:$0xff]
    %v4386 = vld [vmem:[%s6 + $0x18] sm:$0xff]
    %v4387 = vld [vmem:[%s6 + $0x20] sm:$0xff]
    %v4388 = vld [vmem:[%s6 + $0x28] sm:$0xff]
    %v4389 = vld [vmem:[%s6 + $0x30] sm:$0xff]
    %v4390 = vld [vmem:[%s6 + $0x38] sm:$0xff]
    %v4391 = vld [vmem:[%s6 + $0x40] sm:$0xff]
    %v4392 = vld [vmem:[%s6 + $0x48] sm:$0xff]
    %v4393 = vld [vmem:[%s6 + $0x50] sm:$0xff]
    %v4394 = vld [vmem:[%s6 + $0x58] sm:$0xff]
    %v4395 = vld [vmem:[%s6 + $0x60] sm:$0xff]
    %v4396 = vld [vmem:[%s6 + $0x68] sm:$0xff]
    %v4397 = vld [vmem:[%s6 + $0x70] sm:$0xff]
    %v4398 = vld [vmem:[%s6 + $0x78] sm:$0xff]
    %v4399 = vperm.slane %v4253, 4
    %4400 = vmatpush.msra.mxu0 %v4398
    %4401 = vmatpush.msra.mxu0 %v4397
    %4402 = vmatpush.msra.mxu0 %v4396
    %4403 = vmatpush.msra.mxu0 %v4395
    %4404 = vmatpush.msra.mxu0 %v4394
    %4405 = vmatpush.msra.mxu0 %v4393
    %4406 = vmatpush.msra.mxu0 %v4392
    %4407 = vmatpush.msra.mxu0 %v4391
    %4408 = vmatpush.msra.mxu0 %v4390
    %4409 = vmatpush.msra.mxu0 %v4389
    %4410 = vmatpush.msra.mxu0 %v4388
    %4411 = vmatpush.msra.mxu0 %v4387
    %4412 = vmatpush.msra.mxu0 %v4386
    %4413 = vmatpush.msra.mxu0 %v4385
    %4414 = vmatpush.msra.mxu0 %v4384
    %4415 = vmatpush.msra.mxu0 %v4383
    %4416 = vmatmul.f32.gmra.mxu0 %v4381
    %v4417 = vpop.f32.mrf.mxu0
    %v4418 = vadd.f32 %v4399, %v4417
    %4419 = vmatmul.f32.gmra.mxu0 %v4382
    %v4420 = vpop.f32.mrf.mxu0
    %v4421 = vadd.f32 %v4399, %v4420
    %4422 = vdwg.mxu0
    %v4423 = vadd.f32 %v4418, %v4345
    %v4424 = vadd.f32 %v4421, %v4346
    %v4425 = vsel %vm40, %v4423, 0.0
    %4426 = vadd.xlane.f32.xlu0 %v4425
    %v4427 = vpop.xlane.xlu0 %4426
    %v4428 = vsel %vm40, %v4424, 0.0
    %4429 = vadd.xlane.f32.xlu0 %v4428
    %v4430 = vpop.xlane.xlu0 %4429
    %v4431 = vmul.f32 %v4427, %v4302
    %v4432 = vmul.f32 %v4430, %v4302
    %v4433 = vsub.f32 %v4423, %v4431
    %v4434 = vsub.f32 %v4424, %v4432
    %v4435 = vmul.f32 %v4433, %v4433
    %v4436 = vmul.f32 %v4434, %v4434
    %v4437 = vsel %vm40, %v4435, 0.0
    %4438 = vadd.xlane.f32.xlu0 %v4437
    %v4439 = vpop.xlane.xlu0 %4438
    %v4440 = vsel %vm40, %v4436, 0.0
    %4441 = vadd.xlane.f32.xlu0 %v4440
    %v4442 = vpop.xlane.xlu0 %4441
    %v4443 = vmul.f32 %v4439, %v4302
    %v4444 = vmul.f32 %v4442, %v4302
    %v4445 = vadd.f32 %v4443, 1e-05
    %v4446 = vadd.f32 %v4444, 1e-05
    %v4447 = vrsqrt.pop %v4445
    %v4448 = vmul.f32 %v4447, %v4445
    %v4449 = vmul.f32 %v4448, %v4447
    %v4450 = vmul.f32 0.5, %v4449
    %v4451 = vsub.f32 1.5, %v4450
    %v4452 = vmul.f32 %v4447, %v4451
    %vm4453 = vweird.f32 %v4445
    %vm4454 = vweird.f32 %v4447
    %vm4455 = vmor %vm4453, %vm4454
    %v4456 = vsel %vm4455, %v4447, %v4452
    %v4457 = vrsqrt.pop %v4446
    %v4458 = vmul.f32 %v4457, %v4446
    %v4459 = vmul.f32 %v4458, %v4457
    %v4460 = vmul.f32 0.5, %v4459
    %v4461 = vsub.f32 1.5, %v4460
    %v4462 = vmul.f32 %v4457, %v4461
    %vm4463 = vweird.f32 %v4446
    %vm4464 = vweird.f32 %v4457
    %vm4465 = vmor %vm4463, %vm4464
    %v4466 = vsel %vm4465, %v4457, %v4462
    %v4467 = vmul.f32 %v4433, %v4456
    %v4468 = vmul.f32 %v4434, %v4466
    %v4469 = vperm.slane %v4253, 5
    %v4470 = vmul.f32 %v4467, %v4469
    %v4471 = vmul.f32 %v4468, %v4469
    %v4472 = vperm.slane %v4253, 6
    %v4473 = vadd.f32 %v4470, %v4472
    %v4474 = vadd.f32 %v4471, %v4472
    %4475 = vst.msk [vmem:[#allocation2] sm:$0xff] %vm40, %v4473
    %4476 = vst.msk [vmem:[#allocation2 + $0x8] sm:$0xff] %vm40, %v4474
    // Predicated region
    $region34: #{tpu_custom_call.1} parent=1 // pred_check
      _
    $region35: #{tpu_custom_call.1} parent=1 // pred_check_branch
      %4478 = sbr.rel (0) target = $region37
    $region36: #{tpu_custom_call.1} parent=1 // pred_region
      %4480 = vsyncadd [#allocation3], 0
      %s4481 = sshll.u32 [#allocation2], 4
      %s4482 = int_to_ptr.vmem [resolvable:$true] %s4481
      %s4483 = sshll.u32 %s8, 4
      %s4484 = int_to_ptr.hbm [resolvable:$true] %s4483
      %4489 = dma.vmem_to_hbm [thread:$0]  %s4482, 256, %s4484, [#allocation3], 128, 128, 8
    $region37: #{tpu_custom_call.1} parent=1 // pred_fallthru
      _
    // Predicated region
    $region38: #{tpu_custom_call.1} parent=1 // pred_check
      _
    $region39: #{tpu_custom_call.1} parent=1 // pred_check_branch
      %4491 = sbr.rel (0) target = $region41
    $region40: #{tpu_custom_call.1} parent=1 // pred_region
      %4493 = dma.done [#allocation3], 256
    $region41: #{tpu_custom_call.1} parent=1 // pred_fallthru
      _
    %4494 = vsyncpa [#allocation3], 1

</llo_original>
